<compile_context>
chip_gen: v5e
topology: v5e:2x2
jax: 0.10.0
libtpu: 0.0.40
codegen_flags: <defaults>
</compile_context>

<pallas_src>
import jax
import jax.numpy as jnp
from jax import lax
from jax.experimental import pallas as pl
from jax.experimental.pallas import tpu as pltpu


# ----------------------------------------------------------------------------
# Fused kernel: conv_1(3x3, pad 1) + ReLU + conv_2(4x4, valid) + ReLU +
# conv_3(1x1 -> 1 channel).  Grid = (N,): one full image per step.
# ----------------------------------------------------------------------------
def dis_final_block_kernel(x_ref, w1_ref, b1_ref, w2_ref, b2_ref, w3_ref,
                           b3_ref, out_ref, xpad_ref, p1_ref, h1pad_ref,
                           p2_ref):
    # x_ref:     (1, H, W, C)
    # w1_ref:    (9*C, C)        conv_1 im2col weight, rows ordered (ky,kx,cin)
    # b1_ref:    (1, C)
    # w2_ref:    (16*C, C)       conv_2 im2col weight, rows ordered (ky,kx,cin)
    # b2_ref:    (1, C)
    # w3_ref:    (1, C)          conv_3 1x1 weight (single output channel)
    # b3_ref:    (1,)  SMEM      conv_3 bias (scalar)
    # out_ref:   (1, 1, Ho*W)    lane-dense output; wrapper crops columns
    # xpad_ref:  (H+2, W+2, C)   VMEM scratch, 1-px zero halo for conv_1
    # p1_ref:    (H*W, 9*C)      VMEM scratch, conv_1 im2col patches
    # h1pad_ref: (H, W+3, C)     VMEM scratch, h1 with right 3-col zero halo
    # p2_ref:    (Ho*W, 16*C)    VMEM scratch, conv_2 im2col patches
    _, H, W, C = x_ref.shape
    Ho = H - 3
    HW = H * W
    HoW = Ho * W

    # ---------------- conv_1: 3x3, pad=1, + bias + ReLU (one matmul) --------
    # Zero only the 1-pixel halo.  Scratch persists across grid steps and
    # each core of a "parallel" grid owns its own copy, so re-zero every step
    # (4 thin strip stores, not a full-buffer fill).
    xpad_ref[0:1, :, :] = jnp.zeros((1, W + 2, C), jnp.float32)
    xpad_ref[H + 1:H + 2, :, :] = jnp.zeros((1, W + 2, C), jnp.float32)
    xpad_ref[:, 0:1, :] = jnp.zeros((H + 2, 1, C), jnp.float32)
    xpad_ref[:, W + 1:W + 2, :] = jnp.zeros((H + 2, 1, C), jnp.float32)
    xpad_ref[1:H + 1, 1:W + 1, :] = x_ref[0]

    # im2col: tap (ky,kx) occupies lanes [j*C, (j+1)*C), matching w1_ref rows.
    for ky in range(3):
        for kx in range(3):
            j = ky * 3 + kx
            p1_ref[:, j * C:(j + 1) * C] = (
                xpad_ref[ky:ky + H, kx:kx + W, :].reshape(HW, C))
    h1 = jnp.dot(p1_ref[...], w1_ref[...],
                 preferred_element_type=jnp.float32) + b1_ref[...]
    h1 = jnp.maximum(h1, 0.0)                                    # (HW, C)

    # ---------------- conv_2: 4x4, valid, + bias + ReLU (one matmul) --------
    # Only the first Ho = H-3 output rows are valid, so only those are
    # computed (no bottom halo needed).  A 3-column zero halo on the right
    # keeps every tap a clean (Ho, W, C) <-> (Ho*W, C) collapse; the invalid
    # right columns are cropped in the wrapper to keep the output lane-dense.
    h1pad_ref[:, W:W + 3, :] = jnp.zeros((H, 3, C), jnp.float32)
    h1pad_ref[:, 0:W, :] = h1.reshape(H, W, C)
    for ky in range(4):
        for kx in range(4):
            j = ky * 4 + kx
            p2_ref[:, j * C:(j + 1) * C] = (
                h1pad_ref[ky:ky + Ho, kx:kx + W, :].reshape(HoW, C))
    y2 = jnp.dot(p2_ref[...], w2_ref[...],
                 preferred_element_type=jnp.float32) + b2_ref[...]
    y2 = jnp.maximum(y2, 0.0)                                    # (HoW, C)

    # ---------------- conv_3: 1x1, C -> 1 (VPU mul + XLU lane reduce) -------
    y3 = jnp.sum(y2 * w3_ref[...], axis=-1) + b3_ref[0]          # (HoW,)
    out_ref[...] = y3.reshape(1, 1, HoW).astype(out_ref.dtype)


# ----------------------------------------------------------------------------
# Wrapper
# ----------------------------------------------------------------------------
def dis_final_block(x_nhwc, params):
    """x_nhwc: (N, H, W, C) float32.  Returns (N, H-3, W-3, 1) float32."""
    w1, b1, w2, b2, w3, b3 = params  # w1:(3,3,C,C) w2:(4,4,C,C) w3:(1,1,C,1) HWIO
    N, H, W, C = x_nhwc.shape
    Ho, Wo = H - 3, W - 3
    HoW = Ho * W

    # im2col weight layouts: rows ordered (ky, kx, cin) -> matches the kernel.
    w1f = w1.reshape(9 * C, C)
    w2f = w2.reshape(16 * C, C)
    w3f = w3.reshape(1, C)             # single output channel
    b1r = b1.reshape(1, C)
    b2r = b2.reshape(1, C)
    b3r = b3.reshape(1)                # SMEM scalar

    # TODO(synk): for large H/W/C (esp. v7x, 64 MiB VMEM) tile H into row
    # bands with a 2/3-row halo as a second "parallel" grid axis; on 1-TC
    # chips (v5e/v6e) the batch could be collapsed into a single grid step to
    # shave the ~0.35us/step fixed overhead.
    out_flat = pl.pallas_call(
        dis_final_block_kernel,
        out_shape=jax.ShapeDtypeStruct((N, 1, HoW), jnp.float32),
        grid_spec=pltpu.PrefetchScalarGridSpec(
            num_scalar_prefetch=0,
            grid=(N,),
            in_specs=[
                pl.BlockSpec((1, H, W, C), lambda n: (n, 0, 0, 0)),
                pl.BlockSpec((9 * C, C), lambda n: (0, 0)),
                pl.BlockSpec((1, C), lambda n: (0, 0)),
                pl.BlockSpec((16 * C, C), lambda n: (0, 0)),
                pl.BlockSpec((1, C), lambda n: (0, 0)),
                pl.BlockSpec((1, C), lambda n: (0, 0)),
                pl.BlockSpec(memory_space=pltpu.MemorySpace.SMEM),
            ],
            out_specs=pl.BlockSpec((1, 1, HoW), lambda n: (n, 0, 0)),
            scratch_shapes=[
                pltpu.VMEM((H + 2, W + 2, C), jnp.float32),   # conv_1 pad
                pltpu.VMEM((H * W, 9 * C), jnp.float32),      # conv_1 patches
                pltpu.VMEM((H, W + 3, C), jnp.float32),       # h1 + right halo
                pltpu.VMEM((HoW, 16 * C), jnp.float32),       # conv_2 patches
            ],
        ),
        # Default scoped-VMEM limit is ample for this ~100 KiB working set;
        # deliberately no vmem_limit_bytes override (v7x only has 64 MiB).
        compiler_params=pltpu.CompilerParams(
            dimension_semantics=("parallel",),
        ),
    )(x_nhwc, w1f, b1r, w2f, b2r, w3f, b3r)

    # Column crop of the 4x4 valid conv + channel axis (host-side, so the
    # kernel's output store stays lane-dense).
    return out_flat.reshape(N, Ho, W)[:, :, :Wo, None]


# ----------------------------------------------------------------------------
# Parameter setup (deterministic, synthetic) -- spectral norm via power iter.
# ----------------------------------------------------------------------------
def spectral_normalize(w_oihw, key, n_iter=50):
    """Divide weight by its largest singular value (torch spectral_norm view:
    weight reshaped to (out_channels, -1))."""
    out_c = w_oihw.shape[0]
    mat = w_oihw.reshape(out_c, -1)
    u = jax.random.normal(key, (out_c,), jnp.float32)
    u = u / (jnp.linalg.norm(u) + 1e-12)
    v = mat.T @ u
    for _ in range(n_iter):
        v = mat.T @ u
        v = v / (jnp.linalg.norm(v) + 1e-12)
        u = mat @ v
        u = u / (jnp.linalg.norm(u) + 1e-12)
    sigma = u @ (mat @ v)
    return w_oihw / sigma


# ----------------------------------------------------------------------------
# Pure-JAX reference (for verification)
# ----------------------------------------------------------------------------
def reference(x_nhwc, w1, b1, w2, b2, w3, b3):
    dn = ('NHWC', 'HWIO', 'NHWC')
    h = lax.conv_general_dilated(x_nhwc, w1, (1, 1), ((1, 1), (1, 1)),
                                 dimension_numbers=dn,
                                 precision=lax.Precision.HIGHEST) + b1
    h = jnp.maximum(h, 0.0)
    h = lax.conv_general_dilated(h, w2, (1, 1), ((0, 0), (0, 0)),
                                 dimension_numbers=dn,
                                 precision=lax.Precision.HIGHEST) + b2
    h = jnp.maximum(h, 0.0)
    y = lax.conv_general_dilated(h, w3, (1, 1), ((0, 0), (0, 0)),
                                 dimension_numbers=dn,
                                 precision=lax.Precision.HIGHEST) + b3
    return y   # (N, H-3, W-3, 1)


if __name__ == "__main__":
    key = jax.random.PRNGKey(0)
    N, C, H, W = 2, 4, 16, 16
    ks = jax.random.split(key, 12)

    # PyTorch-style OIHW weights, deterministic synthetic init.
    w1_oihw = jax.random.normal(ks[0], (C, C, 3, 3), jnp.float32) * 0.2
    w2_oihw = jax.random.normal(ks[1], (C, C, 4, 4), jnp.float32) * 0.2
    w3_oihw = jax.random.normal(ks[2], (1, C, 1, 1), jnp.float32) * 0.2
    b1 = jax.random.normal(ks[3], (C,), jnp.float32) * 0.1
    b2 = jax.random.normal(ks[4], (C,), jnp.float32) * 0.1
    b3 = jax.random.normal(ks[5], (1,), jnp.float32) * 0.1

    # Spectral normalization (weight preprocessing, as in snconv2d).
    w1_oihw = spectral_normalize(w1_oihw, ks[6])
    w2_oihw = spectral_normalize(w2_oihw, ks[7])
    w3_oihw = spectral_normalize(w3_oihw, ks[8])

    # Convert to kernel layouts (HWIO).
    w1 = jnp.transpose(w1_oihw, (2, 3, 1, 0))       # (3,3,C,C)
    w2 = jnp.transpose(w2_oihw, (2, 3, 1, 0))       # (4,4,C,C)
    w3 = jnp.transpose(w3_oihw, (2, 3, 1, 0))       # (1,1,C,1)

    # Input in the module's NCHW convention, transposed to NHWC for the kernel.
    x_nchw = jax.random.normal(ks[9], (N, C, H, W), jnp.float32)
    x_nhwc = jnp.transpose(x_nchw, (0, 2, 3, 1))

    out_nhwc = dis_final_block(x_nhwc, (w1, b1, w2, b2, w3, b3))
    out_nhwc = jax.block_until_ready(out_nhwc)

    ref = reference(x_nhwc, w1, b1, w2, b2, w3, b3)
    assert out_nhwc.shape == (N, H - 3, W - 3, 1), out_nhwc.shape
    max_err = float(jnp.max(jnp.abs(out_nhwc - ref)))
    assert jnp.allclose(out_nhwc, ref, atol=2e-3, rtol=2e-3), max_err

    # Back to the PyTorch NCHW output convention.
    out_nchw = jnp.transpose(out_nhwc, (0, 3, 1, 2))
    assert out_nchw.shape == (N, 1, H - 3, W - 3)

    print("KERNEL_OK")
</pallas_src>

<mosaic_0001>
module attributes {stable_mosaic.version = 11 : i64} {
  func.func @dis_final_block_kernel(%arg0: i32, %arg1: memref<1x16x16x4xf32, #tpu.memory_space<vmem>>, %arg2: memref<36x4xf32, #tpu.memory_space<vmem>>, %arg3: memref<1x4xf32, #tpu.memory_space<vmem>>, %arg4: memref<64x4xf32, #tpu.memory_space<vmem>>, %arg5: memref<1x4xf32, #tpu.memory_space<vmem>>, %arg6: memref<1x4xf32, #tpu.memory_space<vmem>>, %arg7: memref<1xf32, #tpu.memory_space<smem>>, %arg8: memref<1x1x208xf32, #tpu.memory_space<vmem>>, %arg9: memref<18x18x4xf32, #tpu.memory_space<vmem>>, %arg10: memref<256x36xf32, #tpu.memory_space<vmem>>, %arg11: memref<16x19x4xf32, #tpu.memory_space<vmem>>, %arg12: memref<208x64xf32, #tpu.memory_space<vmem>>) attributes {dimension_semantics = [#tpu.dimension_semantics<parallel>], iteration_bounds = array<i64: 2>, scalar_prefetch = 0 : i64, scratch_operands = 4 : i64, tpu.core_type = #tpu.core_type<tc>, window_params = [{transform_indices = @transform_0, window_bounds = array<i64: 1, 16, 16, 4>}, {pipeline_mode = #tpu.pipeline_mode<synchronous>, transform_indices = @transform_1, window_bounds = array<i64: 36, 4>}, {pipeline_mode = #tpu.pipeline_mode<synchronous>, transform_indices = @transform_2, window_bounds = array<i64: 1, 4>}, {pipeline_mode = #tpu.pipeline_mode<synchronous>, transform_indices = @transform_3, window_bounds = array<i64: 64, 4>}, {pipeline_mode = #tpu.pipeline_mode<synchronous>, transform_indices = @transform_4, window_bounds = array<i64: 1, 4>}, {pipeline_mode = #tpu.pipeline_mode<synchronous>, transform_indices = @transform_5, window_bounds = array<i64: 1, 4>}, {transform_indices = @transform_6, window_bounds = array<i64: 1>}, {transform_indices = @transform_7, window_bounds = array<i64: 1, 1, 208>}]} {
    %cst = arith.constant 0.000000e+00 : f32
    %0 = vector.broadcast %cst : f32 to vector<1x18x4xf32>
    %c0 = arith.constant 0 : index
    %c0_0 = arith.constant 0 : index
    %c0_1 = arith.constant 0 : index
    %1 = vector.load %arg9[%c0, %c0_0, %c0_1] : memref<18x18x4xf32, #tpu.memory_space<vmem>>, vector<1x18x4xf32>
    tpu.vector_store %arg9[%c0, %c0_0, %c0_1], %0 {strides = array<i32>} : memref<18x18x4xf32, #tpu.memory_space<vmem>>, vector<1x18x4xf32>,
    %cst_2 = arith.constant 0.000000e+00 : f32
    %2 = vector.broadcast %cst_2 : f32 to vector<1x18x4xf32>
    %c17 = arith.constant 17 : index
    %c0_3 = arith.constant 0 : index
    %c0_4 = arith.constant 0 : index
    %3 = vector.load %arg9[%c17, %c0_3, %c0_4] : memref<18x18x4xf32, #tpu.memory_space<vmem>>, vector<1x18x4xf32>
    tpu.vector_store %arg9[%c17, %c0_3, %c0_4], %2 {strides = array<i32>} : memref<18x18x4xf32, #tpu.memory_space<vmem>>, vector<1x18x4xf32>,
    %cst_5 = arith.constant 0.000000e+00 : f32
    %4 = vector.broadcast %cst_5 : f32 to vector<18x1x4xf32>
    %c0_6 = arith.constant 0 : index
    %c0_7 = arith.constant 0 : index
    %c0_8 = arith.constant 0 : index
    %5 = vector.load %arg9[%c0_6, %c0_7, %c0_8] : memref<18x18x4xf32, #tpu.memory_space<vmem>>, vector<18x1x4xf32>
    tpu.vector_store %arg9[%c0_6, %c0_7, %c0_8], %4 {strides = array<i32>} : memref<18x18x4xf32, #tpu.memory_space<vmem>>, vector<18x1x4xf32>,
    %cst_9 = arith.constant 0.000000e+00 : f32
    %6 = vector.broadcast %cst_9 : f32 to vector<18x1x4xf32>
    %c0_10 = arith.constant 0 : index
    %c17_11 = arith.constant 17 : index
    %c0_12 = arith.constant 0 : index
    %7 = vector.load %arg9[%c0_10, %c17_11, %c0_12] : memref<18x18x4xf32, #tpu.memory_space<vmem>>, vector<18x1x4xf32>
    tpu.vector_store %arg9[%c0_10, %c17_11, %c0_12], %6 {strides = array<i32>} : memref<18x18x4xf32, #tpu.memory_space<vmem>>, vector<18x1x4xf32>,
    %c0_13 = arith.constant 0 : index
    %c0_14 = arith.constant 0 : index
    %c0_15 = arith.constant 0 : index
    %c0_16 = arith.constant 0 : index
    %8 = vector.load %arg1[%c0_13, %c0_14, %c0_15, %c0_16] : memref<1x16x16x4xf32, #tpu.memory_space<vmem>>, vector<1x16x16x4xf32>
    %9 = vector.shape_cast %8 : vector<1x16x16x4xf32> to vector<16x16x4xf32>
    %c1 = arith.constant 1 : index
    %c1_17 = arith.constant 1 : index
    %c0_18 = arith.constant 0 : index
    %10 = vector.load %arg9[%c1, %c1_17, %c0_18] : memref<18x18x4xf32, #tpu.memory_space<vmem>>, vector<16x16x4xf32>
    tpu.vector_store %arg9[%c1, %c1_17, %c0_18], %9 {strides = array<i32>} : memref<18x18x4xf32, #tpu.memory_space<vmem>>, vector<16x16x4xf32>,
    %c0_19 = arith.constant 0 : index
    %c0_20 = arith.constant 0 : index
    %c0_21 = arith.constant 0 : index
    %11 = vector.load %arg9[%c0_19, %c0_20, %c0_21] : memref<18x18x4xf32, #tpu.memory_space<vmem>>, vector<16x16x4xf32>
    %12 = vector.shape_cast %11 : vector<16x16x4xf32> to vector<256x4xf32>
    %c0_22 = arith.constant 0 : index
    %c0_23 = arith.constant 0 : index
    %13 = vector.load %arg10[%c0_22, %c0_23] : memref<256x36xf32, #tpu.memory_space<vmem>>, vector<256x4xf32>
    tpu.vector_store %arg10[%c0_22, %c0_23], %12 {strides = array<i32>} : memref<256x36xf32, #tpu.memory_space<vmem>>, vector<256x4xf32>,
    %c0_24 = arith.constant 0 : index
    %c1_25 = arith.constant 1 : index
    %c0_26 = arith.constant 0 : index
    %14 = vector.load %arg9[%c0_24, %c1_25, %c0_26] : memref<18x18x4xf32, #tpu.memory_space<vmem>>, vector<16x16x4xf32>
    %15 = vector.shape_cast %14 : vector<16x16x4xf32> to vector<256x4xf32>
    %c0_27 = arith.constant 0 : index
    %c4 = arith.constant 4 : index
    %16 = vector.load %arg10[%c0_27, %c4] : memref<256x36xf32, #tpu.memory_space<vmem>>, vector<256x4xf32>
    tpu.vector_store %arg10[%c0_27, %c4], %15 {strides = array<i32>} : memref<256x36xf32, #tpu.memory_space<vmem>>, vector<256x4xf32>,
    %c0_28 = arith.constant 0 : index
    %c2 = arith.constant 2 : index
    %c0_29 = arith.constant 0 : index
    %17 = vector.load %arg9[%c0_28, %c2, %c0_29] : memref<18x18x4xf32, #tpu.memory_space<vmem>>, vector<16x16x4xf32>
    %18 = vector.shape_cast %17 : vector<16x16x4xf32> to vector<256x4xf32>
    %c0_30 = arith.constant 0 : index
    %c8 = arith.constant 8 : index
    %19 = vector.load %arg10[%c0_30, %c8] : memref<256x36xf32, #tpu.memory_space<vmem>>, vector<256x4xf32>
    tpu.vector_store %arg10[%c0_30, %c8], %18 {strides = array<i32>} : memref<256x36xf32, #tpu.memory_space<vmem>>, vector<256x4xf32>,
    %c1_31 = arith.constant 1 : index
    %c0_32 = arith.constant 0 : index
    %c0_33 = arith.constant 0 : index
    %20 = vector.load %arg9[%c1_31, %c0_32, %c0_33] : memref<18x18x4xf32, #tpu.memory_space<vmem>>, vector<16x16x4xf32>
    %21 = vector.shape_cast %20 : vector<16x16x4xf32> to vector<256x4xf32>
    %c0_34 = arith.constant 0 : index
    %c12 = arith.constant 12 : index
    %22 = vector.load %arg10[%c0_34, %c12] : memref<256x36xf32, #tpu.memory_space<vmem>>, vector<256x4xf32>
    tpu.vector_store %arg10[%c0_34, %c12], %21 {strides = array<i32>} : memref<256x36xf32, #tpu.memory_space<vmem>>, vector<256x4xf32>,
    %c1_35 = arith.constant 1 : index
    %c1_36 = arith.constant 1 : index
    %c0_37 = arith.constant 0 : index
    %23 = vector.load %arg9[%c1_35, %c1_36, %c0_37] : memref<18x18x4xf32, #tpu.memory_space<vmem>>, vector<16x16x4xf32>
    %24 = vector.shape_cast %23 : vector<16x16x4xf32> to vector<256x4xf32>
    %c0_38 = arith.constant 0 : index
    %c16 = arith.constant 16 : index
    %25 = vector.load %arg10[%c0_38, %c16] : memref<256x36xf32, #tpu.memory_space<vmem>>, vector<256x4xf32>
    tpu.vector_store %arg10[%c0_38, %c16], %24 {strides = array<i32>} : memref<256x36xf32, #tpu.memory_space<vmem>>, vector<256x4xf32>,
    %c1_39 = arith.constant 1 : index
    %c2_40 = arith.constant 2 : index
    %c0_41 = arith.constant 0 : index
    %26 = vector.load %arg9[%c1_39, %c2_40, %c0_41] : memref<18x18x4xf32, #tpu.memory_space<vmem>>, vector<16x16x4xf32>
    %27 = vector.shape_cast %26 : vector<16x16x4xf32> to vector<256x4xf32>
    %c0_42 = arith.constant 0 : index
    %c20 = arith.constant 20 : index
    %28 = vector.load %arg10[%c0_42, %c20] : memref<256x36xf32, #tpu.memory_space<vmem>>, vector<256x4xf32>
    tpu.vector_store %arg10[%c0_42, %c20], %27 {strides = array<i32>} : memref<256x36xf32, #tpu.memory_space<vmem>>, vector<256x4xf32>,
    %c2_43 = arith.constant 2 : index
    %c0_44 = arith.constant 0 : index
    %c0_45 = arith.constant 0 : index
    %29 = vector.load %arg9[%c2_43, %c0_44, %c0_45] : memref<18x18x4xf32, #tpu.memory_space<vmem>>, vector<16x16x4xf32>
    %30 = vector.shape_cast %29 : vector<16x16x4xf32> to vector<256x4xf32>
    %c0_46 = arith.constant 0 : index
    %c24 = arith.constant 24 : index
    %31 = vector.load %arg10[%c0_46, %c24] : memref<256x36xf32, #tpu.memory_space<vmem>>, vector<256x4xf32>
    tpu.vector_store %arg10[%c0_46, %c24], %30 {strides = array<i32>} : memref<256x36xf32, #tpu.memory_space<vmem>>, vector<256x4xf32>,
    %c2_47 = arith.constant 2 : index
    %c1_48 = arith.constant 1 : index
    %c0_49 = arith.constant 0 : index
    %32 = vector.load %arg9[%c2_47, %c1_48, %c0_49] : memref<18x18x4xf32, #tpu.memory_space<vmem>>, vector<16x16x4xf32>
    %33 = vector.shape_cast %32 : vector<16x16x4xf32> to vector<256x4xf32>
    %c0_50 = arith.constant 0 : index
    %c28 = arith.constant 28 : index
    %34 = vector.load %arg10[%c0_50, %c28] : memref<256x36xf32, #tpu.memory_space<vmem>>, vector<256x4xf32>
    tpu.vector_store %arg10[%c0_50, %c28], %33 {strides = array<i32>} : memref<256x36xf32, #tpu.memory_space<vmem>>, vector<256x4xf32>,
    %c2_51 = arith.constant 2 : index
    %c2_52 = arith.constant 2 : index
    %c0_53 = arith.constant 0 : index
    %35 = vector.load %arg9[%c2_51, %c2_52, %c0_53] : memref<18x18x4xf32, #tpu.memory_space<vmem>>, vector<16x16x4xf32>
    %36 = vector.shape_cast %35 : vector<16x16x4xf32> to vector<256x4xf32>
    %c0_54 = arith.constant 0 : index
    %c32 = arith.constant 32 : index
    %37 = vector.load %arg10[%c0_54, %c32] : memref<256x36xf32, #tpu.memory_space<vmem>>, vector<256x4xf32>
    tpu.vector_store %arg10[%c0_54, %c32], %36 {strides = array<i32>} : memref<256x36xf32, #tpu.memory_space<vmem>>, vector<256x4xf32>,
    %c0_55 = arith.constant 0 : index
    %c0_56 = arith.constant 0 : index
    %38 = vector.load %arg10[%c0_55, %c0_56] : memref<256x36xf32, #tpu.memory_space<vmem>>, vector<256x36xf32>
    %c0_57 = arith.constant 0 : index
    %c0_58 = arith.constant 0 : index
    %39 = vector.load %arg2[%c0_57, %c0_58] : memref<36x4xf32, #tpu.memory_space<vmem>>, vector<36x4xf32>
    %cst_59 = arith.constant dense<0.000000e+00> : vector<256x4xf32>
    %40 = tpu.matmul %38, %39, %cst_59 {dimension_numbers = #tpu.dot_dimension_numbers<[1], [0], [0], [1], [0, 0, 1, 1], [], []>} : vector<256x36xf32>, vector<36x4xf32>, vector<256x4xf32> -> vector<256x4xf32>
    %c0_60 = arith.constant 0 : index
    %c0_61 = arith.constant 0 : index
    %41 = vector.load %arg3[%c0_60, %c0_61] : memref<1x4xf32, #tpu.memory_space<vmem>>, vector<1x4xf32>
    %42 = vector.broadcast %41 : vector<1x4xf32> to vector<256x4xf32>
    %43 = arith.addf %40, %42 : vector<256x4xf32>
    %cst_62 = arith.constant 0.000000e+00 : f32
    %44 = vector.broadcast %cst_62 : f32 to vector<256x4xf32>
    %45 = arith.maximumf %43, %44 : vector<256x4xf32>
    %cst_63 = arith.constant 0.000000e+00 : f32
    %46 = vector.broadcast %cst_63 : f32 to vector<16x3x4xf32>
    %c0_64 = arith.constant 0 : index
    %c16_65 = arith.constant 16 : index
    %c0_66 = arith.constant 0 : index
    %47 = vector.load %arg11[%c0_64, %c16_65, %c0_66] : memref<16x19x4xf32, #tpu.memory_space<vmem>>, vector<16x3x4xf32>
    tpu.vector_store %arg11[%c0_64, %c16_65, %c0_66], %46 {strides = array<i32>} : memref<16x19x4xf32, #tpu.memory_space<vmem>>, vector<16x3x4xf32>,
    %48 = vector.shape_cast %45 : vector<256x4xf32> to vector<16x16x4xf32>
    %c0_67 = arith.constant 0 : index
    %c0_68 = arith.constant 0 : index
    %c0_69 = arith.constant 0 : index
    %49 = vector.load %arg11[%c0_67, %c0_68, %c0_69] : memref<16x19x4xf32, #tpu.memory_space<vmem>>, vector<16x16x4xf32>
    tpu.vector_store %arg11[%c0_67, %c0_68, %c0_69], %48 {strides = array<i32>} : memref<16x19x4xf32, #tpu.memory_space<vmem>>, vector<16x16x4xf32>,
    %c0_70 = arith.constant 0 : index
    %c0_71 = arith.constant 0 : index
    %c0_72 = arith.constant 0 : index
    %50 = vector.load %arg11[%c0_70, %c0_71, %c0_72] : memref<16x19x4xf32, #tpu.memory_space<vmem>>, vector<13x16x4xf32>
    %51 = vector.shape_cast %50 : vector<13x16x4xf32> to vector<208x4xf32>
    %c0_73 = arith.constant 0 : index
    %c0_74 = arith.constant 0 : index
    %52 = vector.load %arg12[%c0_73, %c0_74] : memref<208x64xf32, #tpu.memory_space<vmem>>, vector<208x4xf32>
    tpu.vector_store %arg12[%c0_73, %c0_74], %51 {strides = array<i32>} : memref<208x64xf32, #tpu.memory_space<vmem>>, vector<208x4xf32>,
    %c0_75 = arith.constant 0 : index
    %c1_76 = arith.constant 1 : index
    %c0_77 = arith.constant 0 : index
    %53 = vector.load %arg11[%c0_75, %c1_76, %c0_77] : memref<16x19x4xf32, #tpu.memory_space<vmem>>, vector<13x16x4xf32>
    %54 = vector.shape_cast %53 : vector<13x16x4xf32> to vector<208x4xf32>
    %c0_78 = arith.constant 0 : index
    %c4_79 = arith.constant 4 : index
    %55 = vector.load %arg12[%c0_78, %c4_79] : memref<208x64xf32, #tpu.memory_space<vmem>>, vector<208x4xf32>
    tpu.vector_store %arg12[%c0_78, %c4_79], %54 {strides = array<i32>} : memref<208x64xf32, #tpu.memory_space<vmem>>, vector<208x4xf32>,
    %c0_80 = arith.constant 0 : index
    %c2_81 = arith.constant 2 : index
    %c0_82 = arith.constant 0 : index
    %56 = vector.load %arg11[%c0_80, %c2_81, %c0_82] : memref<16x19x4xf32, #tpu.memory_space<vmem>>, vector<13x16x4xf32>
    %57 = vector.shape_cast %56 : vector<13x16x4xf32> to vector<208x4xf32>
    %c0_83 = arith.constant 0 : index
    %c8_84 = arith.constant 8 : index
    %58 = vector.load %arg12[%c0_83, %c8_84] : memref<208x64xf32, #tpu.memory_space<vmem>>, vector<208x4xf32>
    tpu.vector_store %arg12[%c0_83, %c8_84], %57 {strides = array<i32>} : memref<208x64xf32, #tpu.memory_space<vmem>>, vector<208x4xf32>,
    %c0_85 = arith.constant 0 : index
    %c3 = arith.constant 3 : index
    %c0_86 = arith.constant 0 : index
    %59 = vector.load %arg11[%c0_85, %c3, %c0_86] : memref<16x19x4xf32, #tpu.memory_space<vmem>>, vector<13x16x4xf32>
    %60 = vector.shape_cast %59 : vector<13x16x4xf32> to vector<208x4xf32>
    %c0_87 = arith.constant 0 : index
    %c12_88 = arith.constant 12 : index
    %61 = vector.load %arg12[%c0_87, %c12_88] : memref<208x64xf32, #tpu.memory_space<vmem>>, vector<208x4xf32>
    tpu.vector_store %arg12[%c0_87, %c12_88], %60 {strides = array<i32>} : memref<208x64xf32, #tpu.memory_space<vmem>>, vector<208x4xf32>,
    %c1_89 = arith.constant 1 : index
    %c0_90 = arith.constant 0 : index
    %c0_91 = arith.constant 0 : index
    %62 = vector.load %arg11[%c1_89, %c0_90, %c0_91] : memref<16x19x4xf32, #tpu.memory_space<vmem>>, vector<13x16x4xf32>
    %63 = vector.shape_cast %62 : vector<13x16x4xf32> to vector<208x4xf32>
    %c0_92 = arith.constant 0 : index
    %c16_93 = arith.constant 16 : index
    %64 = vector.load %arg12[%c0_92, %c16_93] : memref<208x64xf32, #tpu.memory_space<vmem>>, vector<208x4xf32>
    tpu.vector_store %arg12[%c0_92, %c16_93], %63 {strides = array<i32>} : memref<208x64xf32, #tpu.memory_space<vmem>>, vector<208x4xf32>,
    %c1_94 = arith.constant 1 : index
    %c1_95 = arith.constant 1 : index
    %c0_96 = arith.constant 0 : index
    %65 = vector.load %arg11[%c1_94, %c1_95, %c0_96] : memref<16x19x4xf32, #tpu.memory_space<vmem>>, vector<13x16x4xf32>
    %66 = vector.shape_cast %65 : vector<13x16x4xf32> to vector<208x4xf32>
    %c0_97 = arith.constant 0 : index
    %c20_98 = arith.constant 20 : index
    %67 = vector.load %arg12[%c0_97, %c20_98] : memref<208x64xf32, #tpu.memory_space<vmem>>, vector<208x4xf32>
    tpu.vector_store %arg12[%c0_97, %c20_98], %66 {strides = array<i32>} : memref<208x64xf32, #tpu.memory_space<vmem>>, vector<208x4xf32>,
    %c1_99 = arith.constant 1 : index
    %c2_100 = arith.constant 2 : index
    %c0_101 = arith.constant 0 : index
    %68 = vector.load %arg11[%c1_99, %c2_100, %c0_101] : memref<16x19x4xf32, #tpu.memory_space<vmem>>, vector<13x16x4xf32>
    %69 = vector.shape_cast %68 : vector<13x16x4xf32> to vector<208x4xf32>
    %c0_102 = arith.constant 0 : index
    %c24_103 = arith.constant 24 : index
    %70 = vector.load %arg12[%c0_102, %c24_103] : memref<208x64xf32, #tpu.memory_space<vmem>>, vector<208x4xf32>
    tpu.vector_store %arg12[%c0_102, %c24_103], %69 {strides = array<i32>} : memref<208x64xf32, #tpu.memory_space<vmem>>, vector<208x4xf32>,
    %c1_104 = arith.constant 1 : index
    %c3_105 = arith.constant 3 : index
    %c0_106 = arith.constant 0 : index
    %71 = vector.load %arg11[%c1_104, %c3_105, %c0_106] : memref<16x19x4xf32, #tpu.memory_space<vmem>>, vector<13x16x4xf32>
    %72 = vector.shape_cast %71 : vector<13x16x4xf32> to vector<208x4xf32>
    %c0_107 = arith.constant 0 : index
    %c28_108 = arith.constant 28 : index
    %73 = vector.load %arg12[%c0_107, %c28_108] : memref<208x64xf32, #tpu.memory_space<vmem>>, vector<208x4xf32>
    tpu.vector_store %arg12[%c0_107, %c28_108], %72 {strides = array<i32>} : memref<208x64xf32, #tpu.memory_space<vmem>>, vector<208x4xf32>,
    %c2_109 = arith.constant 2 : index
    %c0_110 = arith.constant 0 : index
    %c0_111 = arith.constant 0 : index
    %74 = vector.load %arg11[%c2_109, %c0_110, %c0_111] : memref<16x19x4xf32, #tpu.memory_space<vmem>>, vector<13x16x4xf32>
    %75 = vector.shape_cast %74 : vector<13x16x4xf32> to vector<208x4xf32>
    %c0_112 = arith.constant 0 : index
    %c32_113 = arith.constant 32 : index
    %76 = vector.load %arg12[%c0_112, %c32_113] : memref<208x64xf32, #tpu.memory_space<vmem>>, vector<208x4xf32>
    tpu.vector_store %arg12[%c0_112, %c32_113], %75 {strides = array<i32>} : memref<208x64xf32, #tpu.memory_space<vmem>>, vector<208x4xf32>,
    %c2_114 = arith.constant 2 : index
    %c1_115 = arith.constant 1 : index
    %c0_116 = arith.constant 0 : index
    %77 = vector.load %arg11[%c2_114, %c1_115, %c0_116] : memref<16x19x4xf32, #tpu.memory_space<vmem>>, vector<13x16x4xf32>
    %78 = vector.shape_cast %77 : vector<13x16x4xf32> to vector<208x4xf32>
    %c0_117 = arith.constant 0 : index
    %c36 = arith.constant 36 : index
    %79 = vector.load %arg12[%c0_117, %c36] : memref<208x64xf32, #tpu.memory_space<vmem>>, vector<208x4xf32>
    tpu.vector_store %arg12[%c0_117, %c36], %78 {strides = array<i32>} : memref<208x64xf32, #tpu.memory_space<vmem>>, vector<208x4xf32>,
    %c2_118 = arith.constant 2 : index
    %c2_119 = arith.constant 2 : index
    %c0_120 = arith.constant 0 : index
    %80 = vector.load %arg11[%c2_118, %c2_119, %c0_120] : memref<16x19x4xf32, #tpu.memory_space<vmem>>, vector<13x16x4xf32>
    %81 = vector.shape_cast %80 : vector<13x16x4xf32> to vector<208x4xf32>
    %c0_121 = arith.constant 0 : index
    %c40 = arith.constant 40 : index
    %82 = vector.load %arg12[%c0_121, %c40] : memref<208x64xf32, #tpu.memory_space<vmem>>, vector<208x4xf32>
    tpu.vector_store %arg12[%c0_121, %c40], %81 {strides = array<i32>} : memref<208x64xf32, #tpu.memory_space<vmem>>, vector<208x4xf32>,
    %c2_122 = arith.constant 2 : index
    %c3_123 = arith.constant 3 : index
    %c0_124 = arith.constant 0 : index
    %83 = vector.load %arg11[%c2_122, %c3_123, %c0_124] : memref<16x19x4xf32, #tpu.memory_space<vmem>>, vector<13x16x4xf32>
    %84 = vector.shape_cast %83 : vector<13x16x4xf32> to vector<208x4xf32>
    %c0_125 = arith.constant 0 : index
    %c44 = arith.constant 44 : index
    %85 = vector.load %arg12[%c0_125, %c44] : memref<208x64xf32, #tpu.memory_space<vmem>>, vector<208x4xf32>
    tpu.vector_store %arg12[%c0_125, %c44], %84 {strides = array<i32>} : memref<208x64xf32, #tpu.memory_space<vmem>>, vector<208x4xf32>,
    %c3_126 = arith.constant 3 : index
    %c0_127 = arith.constant 0 : index
    %c0_128 = arith.constant 0 : index
    %86 = vector.load %arg11[%c3_126, %c0_127, %c0_128] : memref<16x19x4xf32, #tpu.memory_space<vmem>>, vector<13x16x4xf32>
    %87 = vector.shape_cast %86 : vector<13x16x4xf32> to vector<208x4xf32>
    %c0_129 = arith.constant 0 : index
    %c48 = arith.constant 48 : index
    %88 = vector.load %arg12[%c0_129, %c48] : memref<208x64xf32, #tpu.memory_space<vmem>>, vector<208x4xf32>
    tpu.vector_store %arg12[%c0_129, %c48], %87 {strides = array<i32>} : memref<208x64xf32, #tpu.memory_space<vmem>>, vector<208x4xf32>,
    %c3_130 = arith.constant 3 : index
    %c1_131 = arith.constant 1 : index
    %c0_132 = arith.constant 0 : index
    %89 = vector.load %arg11[%c3_130, %c1_131, %c0_132] : memref<16x19x4xf32, #tpu.memory_space<vmem>>, vector<13x16x4xf32>
    %90 = vector.shape_cast %89 : vector<13x16x4xf32> to vector<208x4xf32>
    %c0_133 = arith.constant 0 : index
    %c52 = arith.constant 52 : index
    %91 = vector.load %arg12[%c0_133, %c52] : memref<208x64xf32, #tpu.memory_space<vmem>>, vector<208x4xf32>
    tpu.vector_store %arg12[%c0_133, %c52], %90 {strides = array<i32>} : memref<208x64xf32, #tpu.memory_space<vmem>>, vector<208x4xf32>,
    %c3_134 = arith.constant 3 : index
    %c2_135 = arith.constant 2 : index
    %c0_136 = arith.constant 0 : index
    %92 = vector.load %arg11[%c3_134, %c2_135, %c0_136] : memref<16x19x4xf32, #tpu.memory_space<vmem>>, vector<13x16x4xf32>
    %93 = vector.shape_cast %92 : vector<13x16x4xf32> to vector<208x4xf32>
    %c0_137 = arith.constant 0 : index
    %c56 = arith.constant 56 : index
    %94 = vector.load %arg12[%c0_137, %c56] : memref<208x64xf32, #tpu.memory_space<vmem>>, vector<208x4xf32>
    tpu.vector_store %arg12[%c0_137, %c56], %93 {strides = array<i32>} : memref<208x64xf32, #tpu.memory_space<vmem>>, vector<208x4xf32>,
    %c3_138 = arith.constant 3 : index
    %c3_139 = arith.constant 3 : index
    %c0_140 = arith.constant 0 : index
    %95 = vector.load %arg11[%c3_138, %c3_139, %c0_140] : memref<16x19x4xf32, #tpu.memory_space<vmem>>, vector<13x16x4xf32>
    %96 = vector.shape_cast %95 : vector<13x16x4xf32> to vector<208x4xf32>
    %c0_141 = arith.constant 0 : index
    %c60 = arith.constant 60 : index
    %97 = vector.load %arg12[%c0_141, %c60] : memref<208x64xf32, #tpu.memory_space<vmem>>, vector<208x4xf32>
    tpu.vector_store %arg12[%c0_141, %c60], %96 {strides = array<i32>} : memref<208x64xf32, #tpu.memory_space<vmem>>, vector<208x4xf32>,
    %c0_142 = arith.constant 0 : index
    %c0_143 = arith.constant 0 : index
    %98 = vector.load %arg12[%c0_142, %c0_143] : memref<208x64xf32, #tpu.memory_space<vmem>>, vector<208x64xf32>
    %c0_144 = arith.constant 0 : index
    %c0_145 = arith.constant 0 : index
    %99 = vector.load %arg4[%c0_144, %c0_145] : memref<64x4xf32, #tpu.memory_space<vmem>>, vector<64x4xf32>
    %cst_146 = arith.constant dense<0.000000e+00> : vector<208x4xf32>
    %100 = tpu.matmul %98, %99, %cst_146 {dimension_numbers = #tpu.dot_dimension_numbers<[1], [0], [0], [1], [0, 0, 1, 1], [], []>} : vector<208x64xf32>, vector<64x4xf32>, vector<208x4xf32> -> vector<208x4xf32>
    %c0_147 = arith.constant 0 : index
    %c0_148 = arith.constant 0 : index
    %101 = vector.load %arg5[%c0_147, %c0_148] : memref<1x4xf32, #tpu.memory_space<vmem>>, vector<1x4xf32>
    %102 = vector.broadcast %101 : vector<1x4xf32> to vector<208x4xf32>
    %103 = arith.addf %100, %102 : vector<208x4xf32>
    %cst_149 = arith.constant 0.000000e+00 : f32
    %104 = vector.broadcast %cst_149 : f32 to vector<208x4xf32>
    %105 = arith.maximumf %103, %104 : vector<208x4xf32>
    %c0_150 = arith.constant 0 : index
    %c0_151 = arith.constant 0 : index
    %106 = vector.load %arg6[%c0_150, %c0_151] : memref<1x4xf32, #tpu.memory_space<vmem>>, vector<1x4xf32>
    %107 = vector.broadcast %106 : vector<1x4xf32> to vector<208x4xf32>
    %108 = arith.mulf %105, %107 : vector<208x4xf32>
    %cst_152 = arith.constant dense<0.000000e+00> : vector<208xf32>
    %109 = vector.multi_reduction <add>, %108, %cst_152 [1] : vector<208x4xf32> to vector<208xf32>
    %c0_153 = arith.constant 0 : index
    %110 = memref.load %arg7[%c0_153] : memref<1xf32, #tpu.memory_space<smem>>
    %111 = vector.broadcast %110 : f32 to vector<208xf32>
    %112 = arith.addf %109, %111 : vector<208xf32>
    %113 = vector.shape_cast %112 : vector<208xf32> to vector<1x1x208xf32>
    %c0_154 = arith.constant 0 : index
    %c0_155 = arith.constant 0 : index
    %c0_156 = arith.constant 0 : index
    %114 = vector.load %arg8[%c0_154, %c0_155, %c0_156] : memref<1x1x208xf32, #tpu.memory_space<vmem>>, vector<1x1x208xf32>
    tpu.vector_store %arg8[%c0_154, %c0_155, %c0_156], %113 {strides = array<i32>} : memref<1x1x208xf32, #tpu.memory_space<vmem>>, vector<1x1x208xf32>,
    return
  }
  func.func @transform_0(%arg0: i32) -> (i32, i32, i32, i32) {
    %c0_i32 = arith.constant 0 : i32
    %c0_i32_0 = arith.constant 0 : i32
    %c0_i32_1 = arith.constant 0 : i32
    %c0_i32_2 = arith.constant 0 : i32
    return %arg0, %c0_i32, %c0_i32_0, %c0_i32_1 : i32, i32, i32, i32
  }
  func.func @transform_1(%arg0: i32) -> (i32, i32) {
    %c0_i32 = arith.constant 0 : i32
    %c0_i32_0 = arith.constant 0 : i32
    %c0_i32_1 = arith.constant 0 : i32
    return %c0_i32, %c0_i32_0 : i32, i32
  }
  func.func @transform_2(%arg0: i32) -> (i32, i32) {
    %c0_i32 = arith.constant 0 : i32
    %c0_i32_0 = arith.constant 0 : i32
    %c0_i32_1 = arith.constant 0 : i32
    return %c0_i32, %c0_i32_0 : i32, i32
  }
  func.func @transform_3(%arg0: i32) -> (i32, i32) {
    %c0_i32 = arith.constant 0 : i32
    %c0_i32_0 = arith.constant 0 : i32
    %c0_i32_1 = arith.constant 0 : i32
    return %c0_i32, %c0_i32_0 : i32, i32
  }
  func.func @transform_4(%arg0: i32) -> (i32, i32) {
    %c0_i32 = arith.constant 0 : i32
    %c0_i32_0 = arith.constant 0 : i32
    %c0_i32_1 = arith.constant 0 : i32
    return %c0_i32, %c0_i32_0 : i32, i32
  }
  func.func @transform_5(%arg0: i32) -> (i32, i32) {
    %c0_i32 = arith.constant 0 : i32
    %c0_i32_0 = arith.constant 0 : i32
    %c0_i32_1 = arith.constant 0 : i32
    return %c0_i32, %c0_i32_0 : i32, i32
  }
  func.func @transform_6(%arg0: i32) -> i32 {
    %c0_i32 = arith.constant 0 : i32
    %c0_i32_0 = arith.constant 0 : i32
    return %c0_i32 : i32
  }
  func.func @transform_7(%arg0: i32) -> (i32, i32, i32) {
    %c0_i32 = arith.constant 0 : i32
    %c0_i32_0 = arith.constant 0 : i32
    %c0_i32_1 = arith.constant 0 : i32
    return %arg0, %c0_i32, %c0_i32_0 : i32, i32, i32
  }
}

</mosaic_0001>

<llo_original>
// kernel: tpu_custom_call.1
$region0: #{tpu_custom_call.1}
  #allocation0 [shape = 'u32[]', space=smem, size = 0x4, offset = 0x4, fixed_abs, tag = 'smem constant byte address 0x4 - core index']
  #allocation1 [shape = 'u32[72,128]{1,0:T(1,128)}', space=vmem, size = 0x9000, scoped, tag = 'internal scratch']
  #allocation2 [shape = 'f32[18,18,4]{2,1,0:T(8,128)}', space=vmem, size = 0x36000, scoped, tag = 'scratch operand']
  #allocation3 [shape = 'f32[256,36]{1,0:T(8,128)}', space=vmem, size = 0x20000, scoped, tag = 'scratch operand']
  #allocation4 [shape = 'f32[16,19,4]{2,1,0:T(8,128)}', space=vmem, size = 0x30000, scoped, tag = 'scratch operand']
  #allocation5 [shape = 'f32[208,64]{1,0:T(8,128)}', space=vmem, size = 0x1a000, scoped, tag = 'scratch operand']
  #allocation6 [shape = 'f32[1]{0:T(128)S(6)}', space=smem, size = 0x200, scoped, tag = 'scoped memory for tpu_custom_call.1']
  %s0 = inlined_call_operand.vmem [shape: f32[2,16,16,4], index: 0, kind: input, shape index: {}]
  %s1 = inlined_call_operand.vmem [shape: f32[36,4], index: 1, kind: input, shape index: {}]
  %s2 = inlined_call_operand.vmem [shape: f32[1,4], index: 2, kind: input, shape index: {}]
  %s3 = inlined_call_operand.vmem [shape: f32[64,4], index: 3, kind: input, shape index: {}]
  %s4 = inlined_call_operand.vmem [shape: f32[1,4], index: 4, kind: input, shape index: {}]
  %s5 = inlined_call_operand.vmem [shape: f32[1,4], index: 5, kind: input, shape index: {}]
  %s6 = inlined_call_operand.<no memory space> [shape: f32[1], index: 6, kind: input, shape index: {}]
  %s7 = inlined_call_operand.hbm [shape: f32[2,1,208], index: 7, kind: output, shape index: {}]
  %s8 = sld [smem:[#allocation0]]
  $region61: #{tpu_custom_call.1} parent=0
    _
  %s10 = ssub.s32 1, %s8
  %s11 = scalar_select 0, %s10, %s8
  %12 = sst [smem:[#allocation6]] %s6
  $region1: #{tpu_custom_call.1} parent=0
    #allocation7 [shape = 'u8[2048]{0}', space=vmem, size = 0x800, scoped, tag = 'output window, operand 0']
    #allocation8 [shape = 's32[2]{0}', space=sflag, size = 0x8, scoped, tag = 'scoped memory for tpu_custom_call.1']
    %13 = vsyncpa [#allocation8], 0
    %s14 = scalar_lea.sflag [#allocation8], 1
    %15 = vsyncpa %s14, 0
    loop: start=0, step=1, limit=4
    $region2: #{tpu_custom_call.1} parent=1 // loop_pre_header
      _
    $region3: #{tpu_custom_call.1} parent=1 // loop_header
      %s17 = sphi 0, %s21
      %p18 = scmp.ge.s32.totalorder %s17, 4
      %s27 = sphi 0, %s29
      %s30 = sphi 0, %s27
      %s31 = sphi 0, %s30
      %s47 = sphi 0, %s31
      %s51 = sphi 0, %s51
      %s53 = sphi 0, %s51
      %s54 = sphi 0, %s53
      %s68 = sphi 0, %s54
      %s72 = sphi 0, %s72
      %s74 = sphi 0, %s72
      %s75 = sphi 0, %s74
      %s89 = sphi 0, %s75
      %s93 = sphi 0, %s93
      %s95 = sphi 0, %s93
      %s96 = sphi 0, %s95
      %s110 = sphi 0, %s96
      %s114 = sphi 0, %s114
      %s116 = sphi 0, %s114
      %s117 = sphi 0, %s116
      %s131 = sphi 0, %s117
      %s135 = sphi 0, %s135
      %s137 = sphi 0, %s135
      %s138 = sphi 0, %s137
      %s152 = sphi 0, %s138
      %s156 = sphi 0, %s156
      %s158 = sphi 0, %s156
      %s159 = sphi 0, %s158
      %s173 = sphi 0, %s159
      %s179 = sphi 0, %s181
      %s182 = sphi 0, %s179
      %s183 = sphi 0, %s182
      %s199 = sphi 0, %s183
    $region4: #{tpu_custom_call.1} parent=1 // loop_header_branch
      %20 = sbr.rel (%p18) target = $region8
    $region5: #{tpu_custom_call.1} parent=1 // loop_body
      %s22 = ssub.s32 %s17, 1
      %s23 = ssub.s32 %s17, 2
      %s24 = sadd.s32 %s17, 1
      %s25 = ssub.s32 %s17, %s24
      %p26 = scmp.eq.s32.totalorder %s25, 0
      %s28 = sadd.s32 %s27, 1
      %s29 = scalar_select %p26, %s27, %s28
      %p32 = pneg %p26
      %p33 = scmp.eq.s32.totalorder %s17, 1
      %p34 = por %p32, %p33
      %p35 = scmp.ne.s32.totalorder %s27, %s30
      %p36 = scmp.eq.s32.totalorder %s17, 0
      %p37 = por %p35, %p36
      %p38 = scmp.ne.s32.totalorder %s27, %s30
      %p39 = scmp.eq.s32.totalorder %s22, 1
      %p40 = por %p38, %p39
      %p41 = scmp.ne.s32.totalorder %s30, %s31
      %p42 = scmp.eq.s32.totalorder %s22, 0
      %p43 = por %p41, %p42
      %p44 = scmp.ne.s32.totalorder %s30, %s31
      %p45 = scmp.eq.s32.totalorder %s23, 1
      %p46 = por %p44, %p45
      %p48 = scmp.ne.s32.totalorder %s31, %s47
      %p49 = scmp.eq.s32.totalorder %s23, 0
      %p50 = por %p48, %p49
      %s52 = sadd.s32 %s51, 1
      %p55 = scmp.eq.s32.totalorder %s17, 1
      %p56 = scmp.ne.s32.totalorder %s51, %s53
      %p57 = scmp.eq.s32.totalorder %s17, 0
      %p58 = por %p56, %p57
      %p59 = scmp.ne.s32.totalorder %s51, %s53
      %p60 = scmp.eq.s32.totalorder %s22, 1
      %p61 = por %p59, %p60
      %p62 = scmp.ne.s32.totalorder %s53, %s54
      %p63 = scmp.eq.s32.totalorder %s22, 0
      %p64 = por %p62, %p63
      %p65 = scmp.ne.s32.totalorder %s53, %s54
      %p66 = scmp.eq.s32.totalorder %s23, 1
      %p67 = por %p65, %p66
      %p69 = scmp.ne.s32.totalorder %s54, %s68
      %p70 = scmp.eq.s32.totalorder %s23, 0
      %p71 = por %p69, %p70
      %s73 = sadd.s32 %s72, 1
      %p76 = scmp.eq.s32.totalorder %s17, 1
      %p77 = scmp.ne.s32.totalorder %s72, %s74
      %p78 = scmp.eq.s32.totalorder %s17, 0
      %p79 = por %p77, %p78
      %p80 = scmp.ne.s32.totalorder %s72, %s74
      %p81 = scmp.eq.s32.totalorder %s22, 1
      %p82 = por %p80, %p81
      %p83 = scmp.ne.s32.totalorder %s74, %s75
      %p84 = scmp.eq.s32.totalorder %s22, 0
      %p85 = por %p83, %p84
      %p86 = scmp.ne.s32.totalorder %s74, %s75
      %p87 = scmp.eq.s32.totalorder %s23, 1
      %p88 = por %p86, %p87
      %p90 = scmp.ne.s32.totalorder %s75, %s89
      %p91 = scmp.eq.s32.totalorder %s23, 0
      %p92 = por %p90, %p91
      %s94 = sadd.s32 %s93, 1
      %p97 = scmp.eq.s32.totalorder %s17, 1
      %p98 = scmp.ne.s32.totalorder %s93, %s95
      %p99 = scmp.eq.s32.totalorder %s17, 0
      %p100 = por %p98, %p99
      %p101 = scmp.ne.s32.totalorder %s93, %s95
      %p102 = scmp.eq.s32.totalorder %s22, 1
      %p103 = por %p101, %p102
      %p104 = scmp.ne.s32.totalorder %s95, %s96
      %p105 = scmp.eq.s32.totalorder %s22, 0
      %p106 = por %p104, %p105
      %p107 = scmp.ne.s32.totalorder %s95, %s96
      %p108 = scmp.eq.s32.totalorder %s23, 1
      %p109 = por %p107, %p108
      %p111 = scmp.ne.s32.totalorder %s96, %s110
      %p112 = scmp.eq.s32.totalorder %s23, 0
      %p113 = por %p111, %p112
      %s115 = sadd.s32 %s114, 1
      %p118 = scmp.eq.s32.totalorder %s17, 1
      %p119 = scmp.ne.s32.totalorder %s114, %s116
      %p120 = scmp.eq.s32.totalorder %s17, 0
      %p121 = por %p119, %p120
      %p122 = scmp.ne.s32.totalorder %s114, %s116
      %p123 = scmp.eq.s32.totalorder %s22, 1
      %p124 = por %p122, %p123
      %p125 = scmp.ne.s32.totalorder %s116, %s117
      %p126 = scmp.eq.s32.totalorder %s22, 0
      %p127 = por %p125, %p126
      %p128 = scmp.ne.s32.totalorder %s116, %s117
      %p129 = scmp.eq.s32.totalorder %s23, 1
      %p130 = por %p128, %p129
      %p132 = scmp.ne.s32.totalorder %s117, %s131
      %p133 = scmp.eq.s32.totalorder %s23, 0
      %p134 = por %p132, %p133
      %s136 = sadd.s32 %s135, 1
      %p139 = scmp.eq.s32.totalorder %s17, 1
      %p140 = scmp.ne.s32.totalorder %s135, %s137
      %p141 = scmp.eq.s32.totalorder %s17, 0
      %p142 = por %p140, %p141
      %p143 = scmp.ne.s32.totalorder %s135, %s137
      %p144 = scmp.eq.s32.totalorder %s22, 1
      %p145 = por %p143, %p144
      %p146 = scmp.ne.s32.totalorder %s137, %s138
      %p147 = scmp.eq.s32.totalorder %s22, 0
      %p148 = por %p146, %p147
      %p149 = scmp.ne.s32.totalorder %s137, %s138
      %p150 = scmp.eq.s32.totalorder %s23, 1
      %p151 = por %p149, %p150
      %p153 = scmp.ne.s32.totalorder %s138, %s152
      %p154 = scmp.eq.s32.totalorder %s23, 0
      %p155 = por %p153, %p154
      %s157 = sadd.s32 %s156, 1
      %p160 = scmp.eq.s32.totalorder %s17, 1
      %p161 = scmp.ne.s32.totalorder %s156, %s158
      %p162 = scmp.eq.s32.totalorder %s17, 0
      %p163 = por %p161, %p162
      %p164 = scmp.ne.s32.totalorder %s156, %s158
      %p165 = scmp.eq.s32.totalorder %s22, 1
      %p166 = por %p164, %p165
      %p167 = scmp.ne.s32.totalorder %s158, %s159
      %p168 = scmp.eq.s32.totalorder %s22, 0
      %p169 = por %p167, %p168
      %p170 = scmp.ne.s32.totalorder %s158, %s159
      %p171 = scmp.eq.s32.totalorder %s23, 1
      %p172 = por %p170, %p171
      %p174 = scmp.ne.s32.totalorder %s159, %s173
      %p175 = scmp.eq.s32.totalorder %s23, 0
      %p176 = por %p174, %p175
      %s177 = ssub.s32 %s17, %s24
      %p178 = scmp.eq.s32.totalorder %s177, 0
      %s180 = sadd.s32 %s179, 1
      %s181 = scalar_select %p178, %s179, %s180
      %p184 = pneg %p178
      %p185 = scmp.eq.s32.totalorder %s17, 1
      %p186 = por %p184, %p185
      %p187 = scmp.ne.s32.totalorder %s179, %s182
      %p188 = scmp.eq.s32.totalorder %s17, 0
      %p189 = por %p187, %p188
      %p190 = scmp.ne.s32.totalorder %s179, %s182
      %p191 = scmp.eq.s32.totalorder %s22, 1
      %p192 = por %p190, %p191
      %p193 = scmp.ne.s32.totalorder %s182, %s183
      %p194 = scmp.eq.s32.totalorder %s22, 0
      %p195 = por %p193, %p194
      %p196 = scmp.ne.s32.totalorder %s182, %s183
      %p197 = scmp.eq.s32.totalorder %s23, 1
      %p198 = por %p196, %p197
      %p200 = scmp.ne.s32.totalorder %s183, %s199
      %p201 = scmp.eq.s32.totalorder %s23, 0
      %p202 = por %p200, %p201
      %p203 = scmp.le.s32.totalorder 1, %s17
      %p204 = scmp.lt.s32.totalorder %s17, 3
      %p205 = pnand %p203, %p204
      %p206 = pneg %p205
      // Predicated region
      $region9: #{tpu_custom_call.1} parent=5 // pred_check
        _
      $region10: #{tpu_custom_call.1} parent=5 // pred_check_branch
        %208 = sbr.rel (%p205) target = $region12
      $region11: #{tpu_custom_call.1} parent=5 // pred_region
        %s209 = ssub.s32 %s17, 1
        // Predicated region
        $region13: #{tpu_custom_call.1} parent=11 // pred_check
          %p210 = pneg %p64
        $region14: #{tpu_custom_call.1} parent=11 // pred_check_branch
          %212 = sbr.rel (%p210) target = $region16
        $region15: #{tpu_custom_call.1} parent=11 // pred_region
          _
        $region16: #{tpu_custom_call.1} parent=11 // pred_fallthru
          _
        // Predicated region
        $region17: #{tpu_custom_call.1} parent=11 // pred_check
          %p213 = pneg %p85
        $region18: #{tpu_custom_call.1} parent=11 // pred_check_branch
          %215 = sbr.rel (%p213) target = $region20
        $region19: #{tpu_custom_call.1} parent=11 // pred_region
          _
        $region20: #{tpu_custom_call.1} parent=11 // pred_fallthru
          _
        // Predicated region
        $region21: #{tpu_custom_call.1} parent=11 // pred_check
          %p216 = pneg %p106
        $region22: #{tpu_custom_call.1} parent=11 // pred_check_branch
          %218 = sbr.rel (%p216) target = $region24
        $region23: #{tpu_custom_call.1} parent=11 // pred_region
          _
        $region24: #{tpu_custom_call.1} parent=11 // pred_fallthru
          _
        // Predicated region
        $region25: #{tpu_custom_call.1} parent=11 // pred_check
          %p219 = pneg %p127
        $region26: #{tpu_custom_call.1} parent=11 // pred_check_branch
          %221 = sbr.rel (%p219) target = $region28
        $region27: #{tpu_custom_call.1} parent=11 // pred_region
          _
        $region28: #{tpu_custom_call.1} parent=11 // pred_fallthru
          _
        // Predicated region
        $region29: #{tpu_custom_call.1} parent=11 // pred_check
          %p222 = pneg %p148
        $region30: #{tpu_custom_call.1} parent=11 // pred_check_branch
          %224 = sbr.rel (%p222) target = $region32
        $region31: #{tpu_custom_call.1} parent=11 // pred_region
          _
        $region32: #{tpu_custom_call.1} parent=11 // pred_fallthru
          _
        // Predicated region
        $region33: #{tpu_custom_call.1} parent=11 // pred_check
          %p225 = pneg %p169
        $region34: #{tpu_custom_call.1} parent=11 // pred_check_branch
          %227 = sbr.rel (%p225) target = $region36
        $region35: #{tpu_custom_call.1} parent=11 // pred_region
          _
        $region36: #{tpu_custom_call.1} parent=11 // pred_fallthru
          _
      $region12: #{tpu_custom_call.1} parent=5 // pred_fallthru
        _
      %p228 = scmp.lt.s32.totalorder %s17, 2
      // Predicated region
      $region37: #{tpu_custom_call.1} parent=5 // pred_check
        %p229 = pneg %p228
      $region38: #{tpu_custom_call.1} parent=5 // pred_check_branch
        %231 = sbr.rel (%p229) target = $region40
      $region39: #{tpu_custom_call.1} parent=5 // pred_region
        // Predicated region
        $region41: #{tpu_custom_call.1} parent=39 // pred_check
          %p232 = pneg %p37
        $region42: #{tpu_custom_call.1} parent=39 // pred_check_branch
          %234 = sbr.rel (%p232) target = $region44
        $region43: #{tpu_custom_call.1} parent=39 // pred_region
          %p235 = scmp.lt.s32.totalorder %s17, 1
          %s236 = scalar_select %p235, %s17, 1
          %s237 = smul.addr %s236, 32
          %s238 = smul.addr %s237, 8
          %s239 = scalar_lea.vmem %s0, %s238
        $region44: #{tpu_custom_call.1} parent=39 // pred_fallthru
          _
      $region40: #{tpu_custom_call.1} parent=5 // pred_fallthru
        _
      %p240 = scmp.le.s32.totalorder 1, %s17
      %p241 = scmp.lt.s32.totalorder %s17, 3
      %p242 = pnand %p240, %p241
      %p243 = pneg %p242
      // Predicated region
      $region45: #{tpu_custom_call.1} parent=5 // pred_check
        _
      $region46: #{tpu_custom_call.1} parent=5 // pred_check_branch
        %245 = sbr.rel (%p242) target = $region48
      $region47: #{tpu_custom_call.1} parent=5 // pred_region
        %s246 = ssub.s32 %s17, 1
        %p247 = scmp.lt.s32.totalorder %s22, 1
        %s248 = scalar_select %p247, %s22, 1
        %s249 = smul.addr %s248, 32
        %s250 = smul.addr %s249, 8
        %s251 = scalar_lea.vmem %s0, %s250
        %p252 = pneg %p43
        %p253 = pneg %p40
        %p254 = pneg %p64
        %p255 = pneg %p61
        %p256 = pneg %p85
        %p257 = pneg %p82
        %p258 = pneg %p106
        %p259 = pneg %p103
        %p260 = pneg %p127
        %p261 = pneg %p124
        %p262 = pneg %p148
        %p263 = pneg %p145
        %p264 = pneg %p169
        %p265 = pneg %p166
        %p266 = pneg %p195
        %p267 = pneg %p192
        %s268 = sand.u32 %s182, 1
        %s269 = scalar_lea.sflag [#allocation8], %s268
        %s270 = sand.u32 %s182, 1
        %s271 = smul.addr %s270, 2
        %s272 = scalar_lea.vmem [#allocation7], %s271
        %p273 = scmp.lt.s32.totalorder %s22, 1
        %s274 = scalar_select %p273, %s22, 1
        %s275 = smul.addr %s274, 32
        %s276 = smul.addr %s275, 8
        %s277 = scalar_lea.vmem %s0, %s276
        %vm278 = vcmask 31744
        %279 = vst.msk [vmem:[#allocation2] sm:$0xff] %vm278, 0.0
        %280 = vst.msk [vmem:[#allocation2 + $0x8] sm:$0xff] %vm278, 0.0
        %vm281 = vcmask 25600
        %282 = vst.msk [vmem:[#allocation2 + $0x10] sm:$0x3] %vm281, 0.0
        %s283 = scalar_lea.vmem [#allocation2], 408
        %284 = vst.msk [vmem:[%s283] sm:$0xff] %vm278, 0.0
        %285 = vst.msk [vmem:[%s283 + $0x8] sm:$0xff] %vm278, 0.0
        %286 = vst.msk [vmem:[%s283 + $0x10] sm:$0x3] %vm281, 0.0
        %vm287 = vcmask 24576
        %288 = vst.msk [vmem:[#allocation2] sm:$0x1] %vm287, 0.0
        %289 = vst.msk [vmem:[#allocation2 + $0x18] sm:$0x1] %vm287, 0.0
        %290 = vst.msk [vmem:[#allocation2 + $0x30] sm:$0x1] %vm287, 0.0
        %291 = vst.msk [vmem:[#allocation2 + $0x48] sm:$0x1] %vm287, 0.0
        %292 = vst.msk [vmem:[#allocation2 + $0x60] sm:$0x1] %vm287, 0.0
        %293 = vst.msk [vmem:[#allocation2 + $0x78] sm:$0x1] %vm287, 0.0
        %294 = vst.msk [vmem:[#allocation2 + $0x90] sm:$0x1] %vm287, 0.0
        %295 = vst.msk [vmem:[#allocation2 + $0xa8] sm:$0x1] %vm287, 0.0
        %296 = vst.msk [vmem:[#allocation2 + $0xc0] sm:$0x1] %vm287, 0.0
        %297 = vst.msk [vmem:[#allocation2 + $0xd8] sm:$0x1] %vm287, 0.0
        %298 = vst.msk [vmem:[#allocation2 + $0xf0] sm:$0x1] %vm287, 0.0
        %299 = vst.msk [vmem:[#allocation2 + $0x108] sm:$0x1] %vm287, 0.0
        %300 = vst.msk [vmem:[#allocation2 + $0x120] sm:$0x1] %vm287, 0.0
        %301 = vst.msk [vmem:[#allocation2 + $0x138] sm:$0x1] %vm287, 0.0
        %302 = vst.msk [vmem:[#allocation2 + $0x150] sm:$0x1] %vm287, 0.0
        %303 = vst.msk [vmem:[#allocation2 + $0x168] sm:$0x1] %vm287, 0.0
        %304 = vst.msk [vmem:[#allocation2 + $0x180] sm:$0x1] %vm287, 0.0
        %305 = vst.msk [vmem:[#allocation2 + $0x198] sm:$0x1] %vm287, 0.0
        %306 = vst.msk [vmem:[#allocation2 + $0x11] sm:$0x1] %vm287, 0.0
        %307 = vst.msk [vmem:[#allocation2 + $0x29] sm:$0x1] %vm287, 0.0
        %308 = vst.msk [vmem:[#allocation2 + $0x41] sm:$0x1] %vm287, 0.0
        %309 = vst.msk [vmem:[#allocation2 + $0x59] sm:$0x1] %vm287, 0.0
        %310 = vst.msk [vmem:[#allocation2 + $0x71] sm:$0x1] %vm287, 0.0
        %311 = vst.msk [vmem:[#allocation2 + $0x89] sm:$0x1] %vm287, 0.0
        %312 = vst.msk [vmem:[#allocation2 + $0xa1] sm:$0x1] %vm287, 0.0
        %313 = vst.msk [vmem:[#allocation2 + $0xb9] sm:$0x1] %vm287, 0.0
        %314 = vst.msk [vmem:[#allocation2 + $0xd1] sm:$0x1] %vm287, 0.0
        %315 = vst.msk [vmem:[#allocation2 + $0xe9] sm:$0x1] %vm287, 0.0
        %316 = vst.msk [vmem:[#allocation2 + $0x101] sm:$0x1] %vm287, 0.0
        %317 = vst.msk [vmem:[#allocation2 + $0x119] sm:$0x1] %vm287, 0.0
        %318 = vst.msk [vmem:[#allocation2 + $0x131] sm:$0x1] %vm287, 0.0
        %319 = vst.msk [vmem:[#allocation2 + $0x149] sm:$0x1] %vm287, 0.0
        %320 = vst.msk [vmem:[#allocation2 + $0x161] sm:$0x1] %vm287, 0.0
        %321 = vst.msk [vmem:[#allocation2 + $0x179] sm:$0x1] %vm287, 0.0
        %322 = vst.msk [vmem:[#allocation2 + $0x191] sm:$0x1] %vm287, 0.0
        %323 = vst.msk [vmem:[#allocation2 + $0x1a9] sm:$0x1] %vm287, 0.0
        %v324 = vld [vmem:[%s277] sm:$0xff]
        %v325 = vld [vmem:[%s277 + $0x8] sm:$0xff]
        %v326 = vld [vmem:[%s277 + $0x10] sm:$0xff]
        %v327 = vld [vmem:[%s277 + $0x18] sm:$0xff]
        %v328 = vld [vmem:[%s277 + $0x20] sm:$0xff]
        %v329 = vld [vmem:[%s277 + $0x28] sm:$0xff]
        %v330 = vld [vmem:[%s277 + $0x30] sm:$0xff]
        %v331 = vld [vmem:[%s277 + $0x38] sm:$0xff]
        %v332 = vld [vmem:[%s277 + $0x40] sm:$0xff]
        %v333 = vld [vmem:[%s277 + $0x48] sm:$0xff]
        %v334 = vld [vmem:[%s277 + $0x50] sm:$0xff]
        %v335 = vld [vmem:[%s277 + $0x58] sm:$0xff]
        %v336 = vld [vmem:[%s277 + $0x60] sm:$0xff]
        %v337 = vld [vmem:[%s277 + $0x68] sm:$0xff]
        %v338 = vld [vmem:[%s277 + $0x70] sm:$0xff]
        %v339 = vld [vmem:[%s277 + $0x78] sm:$0xff]
        %v340 = vld [vmem:[%s277 + $0x80] sm:$0xff]
        %v341 = vld [vmem:[%s277 + $0x88] sm:$0xff]
        %v342 = vld [vmem:[%s277 + $0x90] sm:$0xff]
        %v343 = vld [vmem:[%s277 + $0x98] sm:$0xff]
        %v344 = vld [vmem:[%s277 + $0xa0] sm:$0xff]
        %v345 = vld [vmem:[%s277 + $0xa8] sm:$0xff]
        %v346 = vld [vmem:[%s277 + $0xb0] sm:$0xff]
        %v347 = vld [vmem:[%s277 + $0xb8] sm:$0xff]
        %v348 = vld [vmem:[%s277 + $0xc0] sm:$0xff]
        %v349 = vld [vmem:[%s277 + $0xc8] sm:$0xff]
        %v350 = vld [vmem:[%s277 + $0xd0] sm:$0xff]
        %v351 = vld [vmem:[%s277 + $0xd8] sm:$0xff]
        %v352 = vld [vmem:[%s277 + $0xe0] sm:$0xff]
        %v353 = vld [vmem:[%s277 + $0xe8] sm:$0xff]
        %v354 = vld [vmem:[%s277 + $0xf0] sm:$0xff]
        %v355 = vld [vmem:[%s277 + $0xf8] sm:$0xff]
        %s356 = scalar_lea.vmem [#allocation2], 24
        %357 = vst.msk [vmem:[%s356 + $0x1] sm:$0xff] %vm278, %v324
        %358 = vst.msk [vmem:[%s356 + $0x9] sm:$0xff] %vm278, %v325
        %359 = vst.msk [vmem:[%s356 + $0x19] sm:$0xff] %vm278, %v326
        %360 = vst.msk [vmem:[%s356 + $0x21] sm:$0xff] %vm278, %v327
        %361 = vst.msk [vmem:[%s356 + $0x31] sm:$0xff] %vm278, %v328
        %362 = vst.msk [vmem:[%s356 + $0x39] sm:$0xff] %vm278, %v329
        %363 = vst.msk [vmem:[%s356 + $0x49] sm:$0xff] %vm278, %v330
        %364 = vst.msk [vmem:[%s356 + $0x51] sm:$0xff] %vm278, %v331
        %365 = vst.msk [vmem:[%s356 + $0x61] sm:$0xff] %vm278, %v332
        %366 = vst.msk [vmem:[%s356 + $0x69] sm:$0xff] %vm278, %v333
        %367 = vst.msk [vmem:[%s356 + $0x79] sm:$0xff] %vm278, %v334
        %368 = vst.msk [vmem:[%s356 + $0x81] sm:$0xff] %vm278, %v335
        %369 = vst.msk [vmem:[%s356 + $0x91] sm:$0xff] %vm278, %v336
        %370 = vst.msk [vmem:[%s356 + $0x99] sm:$0xff] %vm278, %v337
        %371 = vst.msk [vmem:[%s356 + $0xa9] sm:$0xff] %vm278, %v338
        %372 = vst.msk [vmem:[%s356 + $0xb1] sm:$0xff] %vm278, %v339
        %373 = vst.msk [vmem:[%s356 + $0xc1] sm:$0xff] %vm278, %v340
        %374 = vst.msk [vmem:[%s356 + $0xc9] sm:$0xff] %vm278, %v341
        %375 = vst.msk [vmem:[%s356 + $0xd9] sm:$0xff] %vm278, %v342
        %376 = vst.msk [vmem:[%s356 + $0xe1] sm:$0xff] %vm278, %v343
        %377 = vst.msk [vmem:[%s356 + $0xf1] sm:$0xff] %vm278, %v344
        %378 = vst.msk [vmem:[%s356 + $0xf9] sm:$0xff] %vm278, %v345
        %379 = vst.msk [vmem:[%s356 + $0x109] sm:$0xff] %vm278, %v346
        %380 = vst.msk [vmem:[%s356 + $0x111] sm:$0xff] %vm278, %v347
        %381 = vst.msk [vmem:[%s356 + $0x121] sm:$0xff] %vm278, %v348
        %382 = vst.msk [vmem:[%s356 + $0x129] sm:$0xff] %vm278, %v349
        %383 = vst.msk [vmem:[%s356 + $0x139] sm:$0xff] %vm278, %v350
        %384 = vst.msk [vmem:[%s356 + $0x141] sm:$0xff] %vm278, %v351
        %385 = vst.msk [vmem:[%s356 + $0x151] sm:$0xff] %vm278, %v352
        %386 = vst.msk [vmem:[%s356 + $0x159] sm:$0xff] %vm278, %v353
        %387 = vst.msk [vmem:[%s356 + $0x169] sm:$0xff] %vm278, %v354
        %388 = vst.msk [vmem:[%s356 + $0x171] sm:$0xff] %vm278, %v355
        %v389 = vld [vmem:[#allocation2] sm:$0xff]
        %v390 = vld [vmem:[#allocation2 + $0x8] sm:$0xff]
        %v391 = vld [vmem:[#allocation2 + $0x18] sm:$0xff]
        %v392 = vld [vmem:[#allocation2 + $0x20] sm:$0xff]
        %v393 = vld [vmem:[#allocation2 + $0x30] sm:$0xff]
        %v394 = vld [vmem:[#allocation2 + $0x38] sm:$0xff]
        %v395 = vld [vmem:[#allocation2 + $0x48] sm:$0xff]
        %v396 = vld [vmem:[#allocation2 + $0x50] sm:$0xff]
        %v397 = vld [vmem:[#allocation2 + $0x60] sm:$0xff]
        %v398 = vld [vmem:[#allocation2 + $0x68] sm:$0xff]
        %v399 = vld [vmem:[#allocation2 + $0x78] sm:$0xff]
        %v400 = vld [vmem:[#allocation2 + $0x80] sm:$0xff]
        %v401 = vld [vmem:[#allocation2 + $0x90] sm:$0xff]
        %v402 = vld [vmem:[#allocation2 + $0x98] sm:$0xff]
        %v403 = vld [vmem:[#allocation2 + $0xa8] sm:$0xff]
        %v404 = vld [vmem:[#allocation2 + $0xb0] sm:$0xff]
        %v405 = vld [vmem:[#allocation2 + $0xc0] sm:$0xff]
        %v406 = vld [vmem:[#allocation2 + $0xc8] sm:$0xff]
        %v407 = vld [vmem:[#allocation2 + $0xd8] sm:$0xff]
        %v408 = vld [vmem:[#allocation2 + $0xe0] sm:$0xff]
        %v409 = vld [vmem:[#allocation2 + $0xf0] sm:$0xff]
        %v410 = vld [vmem:[#allocation2 + $0xf8] sm:$0xff]
        %v411 = vld [vmem:[#allocation2 + $0x108] sm:$0xff]
        %v412 = vld [vmem:[#allocation2 + $0x110] sm:$0xff]
        %v413 = vld [vmem:[#allocation2 + $0x120] sm:$0xff]
        %v414 = vld [vmem:[#allocation2 + $0x128] sm:$0xff]
        %v415 = vld [vmem:[#allocation2 + $0x138] sm:$0xff]
        %v416 = vld [vmem:[#allocation2 + $0x140] sm:$0xff]
        %v417 = vld [vmem:[#allocation2 + $0x150] sm:$0xff]
        %v418 = vld [vmem:[#allocation2 + $0x158] sm:$0xff]
        %v419 = vld [vmem:[#allocation2 + $0x168] sm:$0xff]
        %v420 = vld [vmem:[#allocation2 + $0x170] sm:$0xff]
        %421 = vst.msk [vmem:[#allocation3] sm:$0xff] %vm278, %v389
        %422 = vst.msk [vmem:[#allocation3 + $0x8] sm:$0xff] %vm278, %v390
        %423 = vst.msk [vmem:[#allocation3 + $0x10] sm:$0xff] %vm278, %v391
        %424 = vst.msk [vmem:[#allocation3 + $0x18] sm:$0xff] %vm278, %v392
        %425 = vst.msk [vmem:[#allocation3 + $0x20] sm:$0xff] %vm278, %v393
        %426 = vst.msk [vmem:[#allocation3 + $0x28] sm:$0xff] %vm278, %v394
        %427 = vst.msk [vmem:[#allocation3 + $0x30] sm:$0xff] %vm278, %v395
        %428 = vst.msk [vmem:[#allocation3 + $0x38] sm:$0xff] %vm278, %v396
        %429 = vst.msk [vmem:[#allocation3 + $0x40] sm:$0xff] %vm278, %v397
        %430 = vst.msk [vmem:[#allocation3 + $0x48] sm:$0xff] %vm278, %v398
        %431 = vst.msk [vmem:[#allocation3 + $0x50] sm:$0xff] %vm278, %v399
        %432 = vst.msk [vmem:[#allocation3 + $0x58] sm:$0xff] %vm278, %v400
        %433 = vst.msk [vmem:[#allocation3 + $0x60] sm:$0xff] %vm278, %v401
        %434 = vst.msk [vmem:[#allocation3 + $0x68] sm:$0xff] %vm278, %v402
        %435 = vst.msk [vmem:[#allocation3 + $0x70] sm:$0xff] %vm278, %v403
        %436 = vst.msk [vmem:[#allocation3 + $0x78] sm:$0xff] %vm278, %v404
        %437 = vst.msk [vmem:[#allocation3 + $0x80] sm:$0xff] %vm278, %v405
        %438 = vst.msk [vmem:[#allocation3 + $0x88] sm:$0xff] %vm278, %v406
        %439 = vst.msk [vmem:[#allocation3 + $0x90] sm:$0xff] %vm278, %v407
        %440 = vst.msk [vmem:[#allocation3 + $0x98] sm:$0xff] %vm278, %v408
        %441 = vst.msk [vmem:[#allocation3 + $0xa0] sm:$0xff] %vm278, %v409
        %442 = vst.msk [vmem:[#allocation3 + $0xa8] sm:$0xff] %vm278, %v410
        %443 = vst.msk [vmem:[#allocation3 + $0xb0] sm:$0xff] %vm278, %v411
        %444 = vst.msk [vmem:[#allocation3 + $0xb8] sm:$0xff] %vm278, %v412
        %445 = vst.msk [vmem:[#allocation3 + $0xc0] sm:$0xff] %vm278, %v413
        %446 = vst.msk [vmem:[#allocation3 + $0xc8] sm:$0xff] %vm278, %v414
        %447 = vst.msk [vmem:[#allocation3 + $0xd0] sm:$0xff] %vm278, %v415
        %448 = vst.msk [vmem:[#allocation3 + $0xd8] sm:$0xff] %vm278, %v416
        %449 = vst.msk [vmem:[#allocation3 + $0xe0] sm:$0xff] %vm278, %v417
        %450 = vst.msk [vmem:[#allocation3 + $0xe8] sm:$0xff] %vm278, %v418
        %451 = vst.msk [vmem:[#allocation3 + $0xf0] sm:$0xff] %vm278, %v419
        %452 = vst.msk [vmem:[#allocation3 + $0xf8] sm:$0xff] %vm278, %v420
        %v453 = vld [vmem:[#allocation2 + $0x1] sm:$0xff]
        %v454 = vld [vmem:[#allocation2 + $0x9] sm:$0xff]
        %v455 = vld [vmem:[#allocation2 + $0x19] sm:$0xff]
        %v456 = vld [vmem:[#allocation2 + $0x21] sm:$0xff]
        %v457 = vld [vmem:[#allocation2 + $0x31] sm:$0xff]
        %v458 = vld [vmem:[#allocation2 + $0x39] sm:$0xff]
        %v459 = vld [vmem:[#allocation2 + $0x49] sm:$0xff]
        %v460 = vld [vmem:[#allocation2 + $0x51] sm:$0xff]
        %v461 = vld [vmem:[#allocation2 + $0x61] sm:$0xff]
        %v462 = vld [vmem:[#allocation2 + $0x69] sm:$0xff]
        %v463 = vld [vmem:[#allocation2 + $0x79] sm:$0xff]
        %v464 = vld [vmem:[#allocation2 + $0x81] sm:$0xff]
        %v465 = vld [vmem:[#allocation2 + $0x91] sm:$0xff]
        %v466 = vld [vmem:[#allocation2 + $0x99] sm:$0xff]
        %v467 = vld [vmem:[#allocation2 + $0xa9] sm:$0xff]
        %v468 = vld [vmem:[#allocation2 + $0xb1] sm:$0xff]
        %v469 = vld [vmem:[#allocation2 + $0xc1] sm:$0xff]
        %v470 = vld [vmem:[#allocation2 + $0xc9] sm:$0xff]
        %v471 = vld [vmem:[#allocation2 + $0xd9] sm:$0xff]
        %v472 = vld [vmem:[#allocation2 + $0xe1] sm:$0xff]
        %v473 = vld [vmem:[#allocation2 + $0xf1] sm:$0xff]
        %v474 = vld [vmem:[#allocation2 + $0xf9] sm:$0xff]
        %v475 = vld [vmem:[#allocation2 + $0x109] sm:$0xff]
        %v476 = vld [vmem:[#allocation2 + $0x111] sm:$0xff]
        %v477 = vld [vmem:[#allocation2 + $0x121] sm:$0xff]
        %v478 = vld [vmem:[#allocation2 + $0x129] sm:$0xff]
        %v479 = vld [vmem:[#allocation2 + $0x139] sm:$0xff]
        %v480 = vld [vmem:[#allocation2 + $0x141] sm:$0xff]
        %v481 = vld [vmem:[#allocation2 + $0x151] sm:$0xff]
        %v482 = vld [vmem:[#allocation2 + $0x159] sm:$0xff]
        %v483 = vld [vmem:[#allocation2 + $0x169] sm:$0xff]
        %v484 = vld [vmem:[#allocation2 + $0x171] sm:$0xff]
        %517 = vrot.lane.b32.xlu0 %v453, 4
        %v518 = vpop.permute.xlu0 %517
        %519 = vrot.lane.b32.xlu0 %v454, 4
        %v520 = vpop.permute.xlu0 %519
        %521 = vrot.lane.b32.xlu0 %v455, 4
        %v522 = vpop.permute.xlu0 %521
        %523 = vrot.lane.b32.xlu0 %v456, 4
        %v524 = vpop.permute.xlu0 %523
        %525 = vrot.lane.b32.xlu0 %v457, 4
        %v526 = vpop.permute.xlu0 %525
        %527 = vrot.lane.b32.xlu0 %v458, 4
        %v528 = vpop.permute.xlu0 %527
        %529 = vrot.lane.b32.xlu0 %v459, 4
        %v530 = vpop.permute.xlu0 %529
        %531 = vrot.lane.b32.xlu0 %v460, 4
        %v532 = vpop.permute.xlu0 %531
        %533 = vrot.lane.b32.xlu0 %v461, 4
        %v534 = vpop.permute.xlu0 %533
        %535 = vrot.lane.b32.xlu0 %v462, 4
        %v536 = vpop.permute.xlu0 %535
        %537 = vrot.lane.b32.xlu0 %v463, 4
        %v538 = vpop.permute.xlu0 %537
        %539 = vrot.lane.b32.xlu0 %v464, 4
        %v540 = vpop.permute.xlu0 %539
        %541 = vrot.lane.b32.xlu0 %v465, 4
        %v542 = vpop.permute.xlu0 %541
        %543 = vrot.lane.b32.xlu0 %v466, 4
        %v544 = vpop.permute.xlu0 %543
        %545 = vrot.lane.b32.xlu0 %v467, 4
        %v546 = vpop.permute.xlu0 %545
        %547 = vrot.lane.b32.xlu0 %v468, 4
        %v548 = vpop.permute.xlu0 %547
        %549 = vrot.lane.b32.xlu0 %v469, 4
        %v550 = vpop.permute.xlu0 %549
        %551 = vrot.lane.b32.xlu0 %v470, 4
        %v552 = vpop.permute.xlu0 %551
        %553 = vrot.lane.b32.xlu0 %v471, 4
        %v554 = vpop.permute.xlu0 %553
        %555 = vrot.lane.b32.xlu0 %v472, 4
        %v556 = vpop.permute.xlu0 %555
        %557 = vrot.lane.b32.xlu0 %v473, 4
        %v558 = vpop.permute.xlu0 %557
        %559 = vrot.lane.b32.xlu0 %v474, 4
        %v560 = vpop.permute.xlu0 %559
        %561 = vrot.lane.b32.xlu0 %v475, 4
        %v562 = vpop.permute.xlu0 %561
        %563 = vrot.lane.b32.xlu0 %v476, 4
        %v564 = vpop.permute.xlu0 %563
        %565 = vrot.lane.b32.xlu0 %v477, 4
        %v566 = vpop.permute.xlu0 %565
        %567 = vrot.lane.b32.xlu0 %v478, 4
        %v568 = vpop.permute.xlu0 %567
        %569 = vrot.lane.b32.xlu0 %v479, 4
        %v570 = vpop.permute.xlu0 %569
        %571 = vrot.lane.b32.xlu0 %v480, 4
        %v572 = vpop.permute.xlu0 %571
        %573 = vrot.lane.b32.xlu0 %v481, 4
        %v574 = vpop.permute.xlu0 %573
        %575 = vrot.lane.b32.xlu0 %v482, 4
        %v576 = vpop.permute.xlu0 %575
        %577 = vrot.lane.b32.xlu0 %v483, 4
        %v578 = vpop.permute.xlu0 %577
        %579 = vrot.lane.b32.xlu0 %v484, 4
        %v580 = vpop.permute.xlu0 %579
        %vm613 = vcmask 64544
        %614 = vst.msk [vmem:[#allocation3] sm:$0xff] %vm613, %v518
        %615 = vst.msk [vmem:[#allocation3 + $0x8] sm:$0xff] %vm613, %v520
        %616 = vst.msk [vmem:[#allocation3 + $0x10] sm:$0xff] %vm613, %v522
        %617 = vst.msk [vmem:[#allocation3 + $0x18] sm:$0xff] %vm613, %v524
        %618 = vst.msk [vmem:[#allocation3 + $0x20] sm:$0xff] %vm613, %v526
        %619 = vst.msk [vmem:[#allocation3 + $0x28] sm:$0xff] %vm613, %v528
        %620 = vst.msk [vmem:[#allocation3 + $0x30] sm:$0xff] %vm613, %v530
        %621 = vst.msk [vmem:[#allocation3 + $0x38] sm:$0xff] %vm613, %v532
        %622 = vst.msk [vmem:[#allocation3 + $0x40] sm:$0xff] %vm613, %v534
        %623 = vst.msk [vmem:[#allocation3 + $0x48] sm:$0xff] %vm613, %v536
        %624 = vst.msk [vmem:[#allocation3 + $0x50] sm:$0xff] %vm613, %v538
        %625 = vst.msk [vmem:[#allocation3 + $0x58] sm:$0xff] %vm613, %v540
        %626 = vst.msk [vmem:[#allocation3 + $0x60] sm:$0xff] %vm613, %v542
        %627 = vst.msk [vmem:[#allocation3 + $0x68] sm:$0xff] %vm613, %v544
        %628 = vst.msk [vmem:[#allocation3 + $0x70] sm:$0xff] %vm613, %v546
        %629 = vst.msk [vmem:[#allocation3 + $0x78] sm:$0xff] %vm613, %v548
        %630 = vst.msk [vmem:[#allocation3 + $0x80] sm:$0xff] %vm613, %v550
        %631 = vst.msk [vmem:[#allocation3 + $0x88] sm:$0xff] %vm613, %v552
        %632 = vst.msk [vmem:[#allocation3 + $0x90] sm:$0xff] %vm613, %v554
        %633 = vst.msk [vmem:[#allocation3 + $0x98] sm:$0xff] %vm613, %v556
        %634 = vst.msk [vmem:[#allocation3 + $0xa0] sm:$0xff] %vm613, %v558
        %635 = vst.msk [vmem:[#allocation3 + $0xa8] sm:$0xff] %vm613, %v560
        %636 = vst.msk [vmem:[#allocation3 + $0xb0] sm:$0xff] %vm613, %v562
        %637 = vst.msk [vmem:[#allocation3 + $0xb8] sm:$0xff] %vm613, %v564
        %638 = vst.msk [vmem:[#allocation3 + $0xc0] sm:$0xff] %vm613, %v566
        %639 = vst.msk [vmem:[#allocation3 + $0xc8] sm:$0xff] %vm613, %v568
        %640 = vst.msk [vmem:[#allocation3 + $0xd0] sm:$0xff] %vm613, %v570
        %641 = vst.msk [vmem:[#allocation3 + $0xd8] sm:$0xff] %vm613, %v572
        %642 = vst.msk [vmem:[#allocation3 + $0xe0] sm:$0xff] %vm613, %v574
        %643 = vst.msk [vmem:[#allocation3 + $0xe8] sm:$0xff] %vm613, %v576
        %644 = vst.msk [vmem:[#allocation3 + $0xf0] sm:$0xff] %vm613, %v578
        %645 = vst.msk [vmem:[#allocation3 + $0xf8] sm:$0xff] %vm613, %v580
        %v646 = vld [vmem:[#allocation2 + $0x2] sm:$0xff]
        %v647 = vld [vmem:[#allocation2 + $0xa] sm:$0xff]
        %v648 = vld [vmem:[#allocation2 + $0x1a] sm:$0xff]
        %v649 = vld [vmem:[#allocation2 + $0x22] sm:$0xff]
        %v650 = vld [vmem:[#allocation2 + $0x32] sm:$0xff]
        %v651 = vld [vmem:[#allocation2 + $0x3a] sm:$0xff]
        %v652 = vld [vmem:[#allocation2 + $0x4a] sm:$0xff]
        %v653 = vld [vmem:[#allocation2 + $0x52] sm:$0xff]
        %v654 = vld [vmem:[#allocation2 + $0x62] sm:$0xff]
        %v655 = vld [vmem:[#allocation2 + $0x6a] sm:$0xff]
        %v656 = vld [vmem:[#allocation2 + $0x7a] sm:$0xff]
        %v657 = vld [vmem:[#allocation2 + $0x82] sm:$0xff]
        %v658 = vld [vmem:[#allocation2 + $0x92] sm:$0xff]
        %v659 = vld [vmem:[#allocation2 + $0x9a] sm:$0xff]
        %v660 = vld [vmem:[#allocation2 + $0xaa] sm:$0xff]
        %v661 = vld [vmem:[#allocation2 + $0xb2] sm:$0xff]
        %v662 = vld [vmem:[#allocation2 + $0xc2] sm:$0xff]
        %v663 = vld [vmem:[#allocation2 + $0xca] sm:$0xff]
        %v664 = vld [vmem:[#allocation2 + $0xda] sm:$0xff]
        %v665 = vld [vmem:[#allocation2 + $0xe2] sm:$0xff]
        %v666 = vld [vmem:[#allocation2 + $0xf2] sm:$0xff]
        %v667 = vld [vmem:[#allocation2 + $0xfa] sm:$0xff]
        %v668 = vld [vmem:[#allocation2 + $0x10a] sm:$0xff]
        %v669 = vld [vmem:[#allocation2 + $0x112] sm:$0xff]
        %v670 = vld [vmem:[#allocation2 + $0x122] sm:$0xff]
        %v671 = vld [vmem:[#allocation2 + $0x12a] sm:$0xff]
        %v672 = vld [vmem:[#allocation2 + $0x13a] sm:$0xff]
        %v673 = vld [vmem:[#allocation2 + $0x142] sm:$0xff]
        %v674 = vld [vmem:[#allocation2 + $0x152] sm:$0xff]
        %v675 = vld [vmem:[#allocation2 + $0x15a] sm:$0xff]
        %v676 = vld [vmem:[#allocation2 + $0x16a] sm:$0xff]
        %v677 = vld [vmem:[#allocation2 + $0x172] sm:$0xff]
        %710 = vrot.lane.b32.xlu0 %v646, 8
        %v711 = vpop.permute.xlu0 %710
        %712 = vrot.lane.b32.xlu0 %v647, 8
        %v713 = vpop.permute.xlu0 %712
        %714 = vrot.lane.b32.xlu0 %v648, 8
        %v715 = vpop.permute.xlu0 %714
        %716 = vrot.lane.b32.xlu0 %v649, 8
        %v717 = vpop.permute.xlu0 %716
        %718 = vrot.lane.b32.xlu0 %v650, 8
        %v719 = vpop.permute.xlu0 %718
        %720 = vrot.lane.b32.xlu0 %v651, 8
        %v721 = vpop.permute.xlu0 %720
        %722 = vrot.lane.b32.xlu0 %v652, 8
        %v723 = vpop.permute.xlu0 %722
        %724 = vrot.lane.b32.xlu0 %v653, 8
        %v725 = vpop.permute.xlu0 %724
        %726 = vrot.lane.b32.xlu0 %v654, 8
        %v727 = vpop.permute.xlu0 %726
        %728 = vrot.lane.b32.xlu0 %v655, 8
        %v729 = vpop.permute.xlu0 %728
        %730 = vrot.lane.b32.xlu0 %v656, 8
        %v731 = vpop.permute.xlu0 %730
        %732 = vrot.lane.b32.xlu0 %v657, 8
        %v733 = vpop.permute.xlu0 %732
        %734 = vrot.lane.b32.xlu0 %v658, 8
        %v735 = vpop.permute.xlu0 %734
        %736 = vrot.lane.b32.xlu0 %v659, 8
        %v737 = vpop.permute.xlu0 %736
        %738 = vrot.lane.b32.xlu0 %v660, 8
        %v739 = vpop.permute.xlu0 %738
        %740 = vrot.lane.b32.xlu0 %v661, 8
        %v741 = vpop.permute.xlu0 %740
        %742 = vrot.lane.b32.xlu0 %v662, 8
        %v743 = vpop.permute.xlu0 %742
        %744 = vrot.lane.b32.xlu0 %v663, 8
        %v745 = vpop.permute.xlu0 %744
        %746 = vrot.lane.b32.xlu0 %v664, 8
        %v747 = vpop.permute.xlu0 %746
        %748 = vrot.lane.b32.xlu0 %v665, 8
        %v749 = vpop.permute.xlu0 %748
        %750 = vrot.lane.b32.xlu0 %v666, 8
        %v751 = vpop.permute.xlu0 %750
        %752 = vrot.lane.b32.xlu0 %v667, 8
        %v753 = vpop.permute.xlu0 %752
        %754 = vrot.lane.b32.xlu0 %v668, 8
        %v755 = vpop.permute.xlu0 %754
        %756 = vrot.lane.b32.xlu0 %v669, 8
        %v757 = vpop.permute.xlu0 %756
        %758 = vrot.lane.b32.xlu0 %v670, 8
        %v759 = vpop.permute.xlu0 %758
        %760 = vrot.lane.b32.xlu0 %v671, 8
        %v761 = vpop.permute.xlu0 %760
        %762 = vrot.lane.b32.xlu0 %v672, 8
        %v763 = vpop.permute.xlu0 %762
        %764 = vrot.lane.b32.xlu0 %v673, 8
        %v765 = vpop.permute.xlu0 %764
        %766 = vrot.lane.b32.xlu0 %v674, 8
        %v767 = vpop.permute.xlu0 %766
        %768 = vrot.lane.b32.xlu0 %v675, 8
        %v769 = vpop.permute.xlu0 %768
        %770 = vrot.lane.b32.xlu0 %v676, 8
        %v771 = vpop.permute.xlu0 %770
        %772 = vrot.lane.b32.xlu0 %v677, 8
        %v773 = vpop.permute.xlu0 %772
        %vm806 = vcmask 97344
        %807 = vst.msk [vmem:[#allocation3] sm:$0xff] %vm806, %v711
        %808 = vst.msk [vmem:[#allocation3 + $0x8] sm:$0xff] %vm806, %v713
        %809 = vst.msk [vmem:[#allocation3 + $0x10] sm:$0xff] %vm806, %v715
        %810 = vst.msk [vmem:[#allocation3 + $0x18] sm:$0xff] %vm806, %v717
        %811 = vst.msk [vmem:[#allocation3 + $0x20] sm:$0xff] %vm806, %v719
        %812 = vst.msk [vmem:[#allocation3 + $0x28] sm:$0xff] %vm806, %v721
        %813 = vst.msk [vmem:[#allocation3 + $0x30] sm:$0xff] %vm806, %v723
        %814 = vst.msk [vmem:[#allocation3 + $0x38] sm:$0xff] %vm806, %v725
        %815 = vst.msk [vmem:[#allocation3 + $0x40] sm:$0xff] %vm806, %v727
        %816 = vst.msk [vmem:[#allocation3 + $0x48] sm:$0xff] %vm806, %v729
        %817 = vst.msk [vmem:[#allocation3 + $0x50] sm:$0xff] %vm806, %v731
        %818 = vst.msk [vmem:[#allocation3 + $0x58] sm:$0xff] %vm806, %v733
        %819 = vst.msk [vmem:[#allocation3 + $0x60] sm:$0xff] %vm806, %v735
        %820 = vst.msk [vmem:[#allocation3 + $0x68] sm:$0xff] %vm806, %v737
        %821 = vst.msk [vmem:[#allocation3 + $0x70] sm:$0xff] %vm806, %v739
        %822 = vst.msk [vmem:[#allocation3 + $0x78] sm:$0xff] %vm806, %v741
        %823 = vst.msk [vmem:[#allocation3 + $0x80] sm:$0xff] %vm806, %v743
        %824 = vst.msk [vmem:[#allocation3 + $0x88] sm:$0xff] %vm806, %v745
        %825 = vst.msk [vmem:[#allocation3 + $0x90] sm:$0xff] %vm806, %v747
        %826 = vst.msk [vmem:[#allocation3 + $0x98] sm:$0xff] %vm806, %v749
        %827 = vst.msk [vmem:[#allocation3 + $0xa0] sm:$0xff] %vm806, %v751
        %828 = vst.msk [vmem:[#allocation3 + $0xa8] sm:$0xff] %vm806, %v753
        %829 = vst.msk [vmem:[#allocation3 + $0xb0] sm:$0xff] %vm806, %v755
        %830 = vst.msk [vmem:[#allocation3 + $0xb8] sm:$0xff] %vm806, %v757
        %831 = vst.msk [vmem:[#allocation3 + $0xc0] sm:$0xff] %vm806, %v759
        %832 = vst.msk [vmem:[#allocation3 + $0xc8] sm:$0xff] %vm806, %v761
        %833 = vst.msk [vmem:[#allocation3 + $0xd0] sm:$0xff] %vm806, %v763
        %834 = vst.msk [vmem:[#allocation3 + $0xd8] sm:$0xff] %vm806, %v765
        %835 = vst.msk [vmem:[#allocation3 + $0xe0] sm:$0xff] %vm806, %v767
        %836 = vst.msk [vmem:[#allocation3 + $0xe8] sm:$0xff] %vm806, %v769
        %837 = vst.msk [vmem:[#allocation3 + $0xf0] sm:$0xff] %vm806, %v771
        %838 = vst.msk [vmem:[#allocation3 + $0xf8] sm:$0xff] %vm806, %v773
        %v839 = vld [vmem:[%s356] sm:$0xff]
        %v840 = vld [vmem:[%s356 + $0x8] sm:$0xff]
        %v841 = vld [vmem:[%s356 + $0x18] sm:$0xff]
        %v842 = vld [vmem:[%s356 + $0x20] sm:$0xff]
        %v843 = vld [vmem:[%s356 + $0x30] sm:$0xff]
        %v844 = vld [vmem:[%s356 + $0x38] sm:$0xff]
        %v845 = vld [vmem:[%s356 + $0x48] sm:$0xff]
        %v846 = vld [vmem:[%s356 + $0x50] sm:$0xff]
        %v847 = vld [vmem:[%s356 + $0x60] sm:$0xff]
        %v848 = vld [vmem:[%s356 + $0x68] sm:$0xff]
        %v849 = vld [vmem:[%s356 + $0x78] sm:$0xff]
        %v850 = vld [vmem:[%s356 + $0x80] sm:$0xff]
        %v851 = vld [vmem:[%s356 + $0x90] sm:$0xff]
        %v852 = vld [vmem:[%s356 + $0x98] sm:$0xff]
        %v853 = vld [vmem:[%s356 + $0xa8] sm:$0xff]
        %v854 = vld [vmem:[%s356 + $0xb0] sm:$0xff]
        %v855 = vld [vmem:[%s356 + $0xc0] sm:$0xff]
        %v856 = vld [vmem:[%s356 + $0xc8] sm:$0xff]
        %v857 = vld [vmem:[%s356 + $0xd8] sm:$0xff]
        %v858 = vld [vmem:[%s356 + $0xe0] sm:$0xff]
        %v859 = vld [vmem:[%s356 + $0xf0] sm:$0xff]
        %v860 = vld [vmem:[%s356 + $0xf8] sm:$0xff]
        %v861 = vld [vmem:[%s356 + $0x108] sm:$0xff]
        %v862 = vld [vmem:[%s356 + $0x110] sm:$0xff]
        %v863 = vld [vmem:[%s356 + $0x120] sm:$0xff]
        %v864 = vld [vmem:[%s356 + $0x128] sm:$0xff]
        %v865 = vld [vmem:[%s356 + $0x138] sm:$0xff]
        %v866 = vld [vmem:[%s356 + $0x140] sm:$0xff]
        %v867 = vld [vmem:[%s356 + $0x150] sm:$0xff]
        %v868 = vld [vmem:[%s356 + $0x158] sm:$0xff]
        %v869 = vld [vmem:[%s356 + $0x168] sm:$0xff]
        %v870 = vld [vmem:[%s356 + $0x170] sm:$0xff]
        %903 = vrot.lane.b32.xlu0 %v839, 12
        %v904 = vpop.permute.xlu0 %903
        %905 = vrot.lane.b32.xlu0 %v840, 12
        %v906 = vpop.permute.xlu0 %905
        %907 = vrot.lane.b32.xlu0 %v841, 12
        %v908 = vpop.permute.xlu0 %907
        %909 = vrot.lane.b32.xlu0 %v842, 12
        %v910 = vpop.permute.xlu0 %909
        %911 = vrot.lane.b32.xlu0 %v843, 12
        %v912 = vpop.permute.xlu0 %911
        %913 = vrot.lane.b32.xlu0 %v844, 12
        %v914 = vpop.permute.xlu0 %913
        %915 = vrot.lane.b32.xlu0 %v845, 12
        %v916 = vpop.permute.xlu0 %915
        %917 = vrot.lane.b32.xlu0 %v846, 12
        %v918 = vpop.permute.xlu0 %917
        %919 = vrot.lane.b32.xlu0 %v847, 12
        %v920 = vpop.permute.xlu0 %919
        %921 = vrot.lane.b32.xlu0 %v848, 12
        %v922 = vpop.permute.xlu0 %921
        %923 = vrot.lane.b32.xlu0 %v849, 12
        %v924 = vpop.permute.xlu0 %923
        %925 = vrot.lane.b32.xlu0 %v850, 12
        %v926 = vpop.permute.xlu0 %925
        %927 = vrot.lane.b32.xlu0 %v851, 12
        %v928 = vpop.permute.xlu0 %927
        %929 = vrot.lane.b32.xlu0 %v852, 12
        %v930 = vpop.permute.xlu0 %929
        %931 = vrot.lane.b32.xlu0 %v853, 12
        %v932 = vpop.permute.xlu0 %931
        %933 = vrot.lane.b32.xlu0 %v854, 12
        %v934 = vpop.permute.xlu0 %933
        %935 = vrot.lane.b32.xlu0 %v855, 12
        %v936 = vpop.permute.xlu0 %935
        %937 = vrot.lane.b32.xlu0 %v856, 12
        %v938 = vpop.permute.xlu0 %937
        %939 = vrot.lane.b32.xlu0 %v857, 12
        %v940 = vpop.permute.xlu0 %939
        %941 = vrot.lane.b32.xlu0 %v858, 12
        %v942 = vpop.permute.xlu0 %941
        %943 = vrot.lane.b32.xlu0 %v859, 12
        %v944 = vpop.permute.xlu0 %943
        %945 = vrot.lane.b32.xlu0 %v860, 12
        %v946 = vpop.permute.xlu0 %945
        %947 = vrot.lane.b32.xlu0 %v861, 12
        %v948 = vpop.permute.xlu0 %947
        %949 = vrot.lane.b32.xlu0 %v862, 12
        %v950 = vpop.permute.xlu0 %949
        %951 = vrot.lane.b32.xlu0 %v863, 12
        %v952 = vpop.permute.xlu0 %951
        %953 = vrot.lane.b32.xlu0 %v864, 12
        %v954 = vpop.permute.xlu0 %953
        %955 = vrot.lane.b32.xlu0 %v865, 12
        %v956 = vpop.permute.xlu0 %955
        %957 = vrot.lane.b32.xlu0 %v866, 12
        %v958 = vpop.permute.xlu0 %957
        %959 = vrot.lane.b32.xlu0 %v867, 12
        %v960 = vpop.permute.xlu0 %959
        %961 = vrot.lane.b32.xlu0 %v868, 12
        %v962 = vpop.permute.xlu0 %961
        %963 = vrot.lane.b32.xlu0 %v869, 12
        %v964 = vpop.permute.xlu0 %963
        %965 = vrot.lane.b32.xlu0 %v870, 12
        %v966 = vpop.permute.xlu0 %965
        %vm999 = vcmask 130144
        %1000 = vst.msk [vmem:[#allocation3] sm:$0xff] %vm999, %v904
        %1001 = vst.msk [vmem:[#allocation3 + $0x8] sm:$0xff] %vm999, %v906
        %1002 = vst.msk [vmem:[#allocation3 + $0x10] sm:$0xff] %vm999, %v908
        %1003 = vst.msk [vmem:[#allocation3 + $0x18] sm:$0xff] %vm999, %v910
        %1004 = vst.msk [vmem:[#allocation3 + $0x20] sm:$0xff] %vm999, %v912
        %1005 = vst.msk [vmem:[#allocation3 + $0x28] sm:$0xff] %vm999, %v914
        %1006 = vst.msk [vmem:[#allocation3 + $0x30] sm:$0xff] %vm999, %v916
        %1007 = vst.msk [vmem:[#allocation3 + $0x38] sm:$0xff] %vm999, %v918
        %1008 = vst.msk [vmem:[#allocation3 + $0x40] sm:$0xff] %vm999, %v920
        %1009 = vst.msk [vmem:[#allocation3 + $0x48] sm:$0xff] %vm999, %v922
        %1010 = vst.msk [vmem:[#allocation3 + $0x50] sm:$0xff] %vm999, %v924
        %1011 = vst.msk [vmem:[#allocation3 + $0x58] sm:$0xff] %vm999, %v926
        %1012 = vst.msk [vmem:[#allocation3 + $0x60] sm:$0xff] %vm999, %v928
        %1013 = vst.msk [vmem:[#allocation3 + $0x68] sm:$0xff] %vm999, %v930
        %1014 = vst.msk [vmem:[#allocation3 + $0x70] sm:$0xff] %vm999, %v932
        %1015 = vst.msk [vmem:[#allocation3 + $0x78] sm:$0xff] %vm999, %v934
        %1016 = vst.msk [vmem:[#allocation3 + $0x80] sm:$0xff] %vm999, %v936
        %1017 = vst.msk [vmem:[#allocation3 + $0x88] sm:$0xff] %vm999, %v938
        %1018 = vst.msk [vmem:[#allocation3 + $0x90] sm:$0xff] %vm999, %v940
        %1019 = vst.msk [vmem:[#allocation3 + $0x98] sm:$0xff] %vm999, %v942
        %1020 = vst.msk [vmem:[#allocation3 + $0xa0] sm:$0xff] %vm999, %v944
        %1021 = vst.msk [vmem:[#allocation3 + $0xa8] sm:$0xff] %vm999, %v946
        %1022 = vst.msk [vmem:[#allocation3 + $0xb0] sm:$0xff] %vm999, %v948
        %1023 = vst.msk [vmem:[#allocation3 + $0xb8] sm:$0xff] %vm999, %v950
        %1024 = vst.msk [vmem:[#allocation3 + $0xc0] sm:$0xff] %vm999, %v952
        %1025 = vst.msk [vmem:[#allocation3 + $0xc8] sm:$0xff] %vm999, %v954
        %1026 = vst.msk [vmem:[#allocation3 + $0xd0] sm:$0xff] %vm999, %v956
        %1027 = vst.msk [vmem:[#allocation3 + $0xd8] sm:$0xff] %vm999, %v958
        %1028 = vst.msk [vmem:[#allocation3 + $0xe0] sm:$0xff] %vm999, %v960
        %1029 = vst.msk [vmem:[#allocation3 + $0xe8] sm:$0xff] %vm999, %v962
        %1030 = vst.msk [vmem:[#allocation3 + $0xf0] sm:$0xff] %vm999, %v964
        %1031 = vst.msk [vmem:[#allocation3 + $0xf8] sm:$0xff] %vm999, %v966
        %v1032 = vld [vmem:[%s356 + $0x1] sm:$0xff]
        %v1033 = vld [vmem:[%s356 + $0x9] sm:$0xff]
        %v1034 = vld [vmem:[%s356 + $0x19] sm:$0xff]
        %v1035 = vld [vmem:[%s356 + $0x21] sm:$0xff]
        %v1036 = vld [vmem:[%s356 + $0x31] sm:$0xff]
        %v1037 = vld [vmem:[%s356 + $0x39] sm:$0xff]
        %v1038 = vld [vmem:[%s356 + $0x49] sm:$0xff]
        %v1039 = vld [vmem:[%s356 + $0x51] sm:$0xff]
        %v1040 = vld [vmem:[%s356 + $0x61] sm:$0xff]
        %v1041 = vld [vmem:[%s356 + $0x69] sm:$0xff]
        %v1042 = vld [vmem:[%s356 + $0x79] sm:$0xff]
        %v1043 = vld [vmem:[%s356 + $0x81] sm:$0xff]
        %v1044 = vld [vmem:[%s356 + $0x91] sm:$0xff]
        %v1045 = vld [vmem:[%s356 + $0x99] sm:$0xff]
        %v1046 = vld [vmem:[%s356 + $0xa9] sm:$0xff]
        %v1047 = vld [vmem:[%s356 + $0xb1] sm:$0xff]
        %v1048 = vld [vmem:[%s356 + $0xc1] sm:$0xff]
        %v1049 = vld [vmem:[%s356 + $0xc9] sm:$0xff]
        %v1050 = vld [vmem:[%s356 + $0xd9] sm:$0xff]
        %v1051 = vld [vmem:[%s356 + $0xe1] sm:$0xff]
        %v1052 = vld [vmem:[%s356 + $0xf1] sm:$0xff]
        %v1053 = vld [vmem:[%s356 + $0xf9] sm:$0xff]
        %v1054 = vld [vmem:[%s356 + $0x109] sm:$0xff]
        %v1055 = vld [vmem:[%s356 + $0x111] sm:$0xff]
        %v1056 = vld [vmem:[%s356 + $0x121] sm:$0xff]
        %v1057 = vld [vmem:[%s356 + $0x129] sm:$0xff]
        %v1058 = vld [vmem:[%s356 + $0x139] sm:$0xff]
        %v1059 = vld [vmem:[%s356 + $0x141] sm:$0xff]
        %v1060 = vld [vmem:[%s356 + $0x151] sm:$0xff]
        %v1061 = vld [vmem:[%s356 + $0x159] sm:$0xff]
        %v1062 = vld [vmem:[%s356 + $0x169] sm:$0xff]
        %v1063 = vld [vmem:[%s356 + $0x171] sm:$0xff]
        %1096 = vrot.lane.b32.xlu0 %v1032, 16
        %v1097 = vpop.permute.xlu0 %1096
        %1098 = vrot.lane.b32.xlu0 %v1033, 16
        %v1099 = vpop.permute.xlu0 %1098
        %1100 = vrot.lane.b32.xlu0 %v1034, 16
        %v1101 = vpop.permute.xlu0 %1100
        %1102 = vrot.lane.b32.xlu0 %v1035, 16
        %v1103 = vpop.permute.xlu0 %1102
        %1104 = vrot.lane.b32.xlu0 %v1036, 16
        %v1105 = vpop.permute.xlu0 %1104
        %1106 = vrot.lane.b32.xlu0 %v1037, 16
        %v1107 = vpop.permute.xlu0 %1106
        %1108 = vrot.lane.b32.xlu0 %v1038, 16
        %v1109 = vpop.permute.xlu0 %1108
        %1110 = vrot.lane.b32.xlu0 %v1039, 16
        %v1111 = vpop.permute.xlu0 %1110
        %1112 = vrot.lane.b32.xlu0 %v1040, 16
        %v1113 = vpop.permute.xlu0 %1112
        %1114 = vrot.lane.b32.xlu0 %v1041, 16
        %v1115 = vpop.permute.xlu0 %1114
        %1116 = vrot.lane.b32.xlu0 %v1042, 16
        %v1117 = vpop.permute.xlu0 %1116
        %1118 = vrot.lane.b32.xlu0 %v1043, 16
        %v1119 = vpop.permute.xlu0 %1118
        %1120 = vrot.lane.b32.xlu0 %v1044, 16
        %v1121 = vpop.permute.xlu0 %1120
        %1122 = vrot.lane.b32.xlu0 %v1045, 16
        %v1123 = vpop.permute.xlu0 %1122
        %1124 = vrot.lane.b32.xlu0 %v1046, 16
        %v1125 = vpop.permute.xlu0 %1124
        %1126 = vrot.lane.b32.xlu0 %v1047, 16
        %v1127 = vpop.permute.xlu0 %1126
        %1128 = vrot.lane.b32.xlu0 %v1048, 16
        %v1129 = vpop.permute.xlu0 %1128
        %1130 = vrot.lane.b32.xlu0 %v1049, 16
        %v1131 = vpop.permute.xlu0 %1130
        %1132 = vrot.lane.b32.xlu0 %v1050, 16
        %v1133 = vpop.permute.xlu0 %1132
        %1134 = vrot.lane.b32.xlu0 %v1051, 16
        %v1135 = vpop.permute.xlu0 %1134
        %1136 = vrot.lane.b32.xlu0 %v1052, 16
        %v1137 = vpop.permute.xlu0 %1136
        %1138 = vrot.lane.b32.xlu0 %v1053, 16
        %v1139 = vpop.permute.xlu0 %1138
        %1140 = vrot.lane.b32.xlu0 %v1054, 16
        %v1141 = vpop.permute.xlu0 %1140
        %1142 = vrot.lane.b32.xlu0 %v1055, 16
        %v1143 = vpop.permute.xlu0 %1142
        %1144 = vrot.lane.b32.xlu0 %v1056, 16
        %v1145 = vpop.permute.xlu0 %1144
        %1146 = vrot.lane.b32.xlu0 %v1057, 16
        %v1147 = vpop.permute.xlu0 %1146
        %1148 = vrot.lane.b32.xlu0 %v1058, 16
        %v1149 = vpop.permute.xlu0 %1148
        %1150 = vrot.lane.b32.xlu0 %v1059, 16
        %v1151 = vpop.permute.xlu0 %1150
        %1152 = vrot.lane.b32.xlu0 %v1060, 16
        %v1153 = vpop.permute.xlu0 %1152
        %1154 = vrot.lane.b32.xlu0 %v1061, 16
        %v1155 = vpop.permute.xlu0 %1154
        %1156 = vrot.lane.b32.xlu0 %v1062, 16
        %v1157 = vpop.permute.xlu0 %1156
        %1158 = vrot.lane.b32.xlu0 %v1063, 16
        %v1159 = vpop.permute.xlu0 %1158
        %vm1192 = vcmask 162944
        %1193 = vst.msk [vmem:[#allocation3] sm:$0xff] %vm1192, %v1097
        %1194 = vst.msk [vmem:[#allocation3 + $0x8] sm:$0xff] %vm1192, %v1099
        %1195 = vst.msk [vmem:[#allocation3 + $0x10] sm:$0xff] %vm1192, %v1101
        %1196 = vst.msk [vmem:[#allocation3 + $0x18] sm:$0xff] %vm1192, %v1103
        %1197 = vst.msk [vmem:[#allocation3 + $0x20] sm:$0xff] %vm1192, %v1105
        %1198 = vst.msk [vmem:[#allocation3 + $0x28] sm:$0xff] %vm1192, %v1107
        %1199 = vst.msk [vmem:[#allocation3 + $0x30] sm:$0xff] %vm1192, %v1109
        %1200 = vst.msk [vmem:[#allocation3 + $0x38] sm:$0xff] %vm1192, %v1111
        %1201 = vst.msk [vmem:[#allocation3 + $0x40] sm:$0xff] %vm1192, %v1113
        %1202 = vst.msk [vmem:[#allocation3 + $0x48] sm:$0xff] %vm1192, %v1115
        %1203 = vst.msk [vmem:[#allocation3 + $0x50] sm:$0xff] %vm1192, %v1117
        %1204 = vst.msk [vmem:[#allocation3 + $0x58] sm:$0xff] %vm1192, %v1119
        %1205 = vst.msk [vmem:[#allocation3 + $0x60] sm:$0xff] %vm1192, %v1121
        %1206 = vst.msk [vmem:[#allocation3 + $0x68] sm:$0xff] %vm1192, %v1123
        %1207 = vst.msk [vmem:[#allocation3 + $0x70] sm:$0xff] %vm1192, %v1125
        %1208 = vst.msk [vmem:[#allocation3 + $0x78] sm:$0xff] %vm1192, %v1127
        %1209 = vst.msk [vmem:[#allocation3 + $0x80] sm:$0xff] %vm1192, %v1129
        %1210 = vst.msk [vmem:[#allocation3 + $0x88] sm:$0xff] %vm1192, %v1131
        %1211 = vst.msk [vmem:[#allocation3 + $0x90] sm:$0xff] %vm1192, %v1133
        %1212 = vst.msk [vmem:[#allocation3 + $0x98] sm:$0xff] %vm1192, %v1135
        %1213 = vst.msk [vmem:[#allocation3 + $0xa0] sm:$0xff] %vm1192, %v1137
        %1214 = vst.msk [vmem:[#allocation3 + $0xa8] sm:$0xff] %vm1192, %v1139
        %1215 = vst.msk [vmem:[#allocation3 + $0xb0] sm:$0xff] %vm1192, %v1141
        %1216 = vst.msk [vmem:[#allocation3 + $0xb8] sm:$0xff] %vm1192, %v1143
        %1217 = vst.msk [vmem:[#allocation3 + $0xc0] sm:$0xff] %vm1192, %v1145
        %1218 = vst.msk [vmem:[#allocation3 + $0xc8] sm:$0xff] %vm1192, %v1147
        %1219 = vst.msk [vmem:[#allocation3 + $0xd0] sm:$0xff] %vm1192, %v1149
        %1220 = vst.msk [vmem:[#allocation3 + $0xd8] sm:$0xff] %vm1192, %v1151
        %1221 = vst.msk [vmem:[#allocation3 + $0xe0] sm:$0xff] %vm1192, %v1153
        %1222 = vst.msk [vmem:[#allocation3 + $0xe8] sm:$0xff] %vm1192, %v1155
        %1223 = vst.msk [vmem:[#allocation3 + $0xf0] sm:$0xff] %vm1192, %v1157
        %1224 = vst.msk [vmem:[#allocation3 + $0xf8] sm:$0xff] %vm1192, %v1159
        %v1225 = vld [vmem:[%s356 + $0x2] sm:$0xff]
        %v1226 = vld [vmem:[%s356 + $0xa] sm:$0xff]
        %v1227 = vld [vmem:[%s356 + $0x1a] sm:$0xff]
        %v1228 = vld [vmem:[%s356 + $0x22] sm:$0xff]
        %v1229 = vld [vmem:[%s356 + $0x32] sm:$0xff]
        %v1230 = vld [vmem:[%s356 + $0x3a] sm:$0xff]
        %v1231 = vld [vmem:[%s356 + $0x4a] sm:$0xff]
        %v1232 = vld [vmem:[%s356 + $0x52] sm:$0xff]
        %v1233 = vld [vmem:[%s356 + $0x62] sm:$0xff]
        %v1234 = vld [vmem:[%s356 + $0x6a] sm:$0xff]
        %v1235 = vld [vmem:[%s356 + $0x7a] sm:$0xff]
        %v1236 = vld [vmem:[%s356 + $0x82] sm:$0xff]
        %v1237 = vld [vmem:[%s356 + $0x92] sm:$0xff]
        %v1238 = vld [vmem:[%s356 + $0x9a] sm:$0xff]
        %v1239 = vld [vmem:[%s356 + $0xaa] sm:$0xff]
        %v1240 = vld [vmem:[%s356 + $0xb2] sm:$0xff]
        %v1241 = vld [vmem:[%s356 + $0xc2] sm:$0xff]
        %v1242 = vld [vmem:[%s356 + $0xca] sm:$0xff]
        %v1243 = vld [vmem:[%s356 + $0xda] sm:$0xff]
        %v1244 = vld [vmem:[%s356 + $0xe2] sm:$0xff]
        %v1245 = vld [vmem:[%s356 + $0xf2] sm:$0xff]
        %v1246 = vld [vmem:[%s356 + $0xfa] sm:$0xff]
        %v1247 = vld [vmem:[%s356 + $0x10a] sm:$0xff]
        %v1248 = vld [vmem:[%s356 + $0x112] sm:$0xff]
        %v1249 = vld [vmem:[%s356 + $0x122] sm:$0xff]
        %v1250 = vld [vmem:[%s356 + $0x12a] sm:$0xff]
        %v1251 = vld [vmem:[%s356 + $0x13a] sm:$0xff]
        %v1252 = vld [vmem:[%s356 + $0x142] sm:$0xff]
        %v1253 = vld [vmem:[%s356 + $0x152] sm:$0xff]
        %v1254 = vld [vmem:[%s356 + $0x15a] sm:$0xff]
        %v1255 = vld [vmem:[%s356 + $0x16a] sm:$0xff]
        %v1256 = vld [vmem:[%s356 + $0x172] sm:$0xff]
        %1289 = vrot.lane.b32.xlu0 %v1225, 20
        %v1290 = vpop.permute.xlu0 %1289
        %1291 = vrot.lane.b32.xlu0 %v1226, 20
        %v1292 = vpop.permute.xlu0 %1291
        %1293 = vrot.lane.b32.xlu0 %v1227, 20
        %v1294 = vpop.permute.xlu0 %1293
        %1295 = vrot.lane.b32.xlu0 %v1228, 20
        %v1296 = vpop.permute.xlu0 %1295
        %1297 = vrot.lane.b32.xlu0 %v1229, 20
        %v1298 = vpop.permute.xlu0 %1297
        %1299 = vrot.lane.b32.xlu0 %v1230, 20
        %v1300 = vpop.permute.xlu0 %1299
        %1301 = vrot.lane.b32.xlu0 %v1231, 20
        %v1302 = vpop.permute.xlu0 %1301
        %1303 = vrot.lane.b32.xlu0 %v1232, 20
        %v1304 = vpop.permute.xlu0 %1303
        %1305 = vrot.lane.b32.xlu0 %v1233, 20
        %v1306 = vpop.permute.xlu0 %1305
        %1307 = vrot.lane.b32.xlu0 %v1234, 20
        %v1308 = vpop.permute.xlu0 %1307
        %1309 = vrot.lane.b32.xlu0 %v1235, 20
        %v1310 = vpop.permute.xlu0 %1309
        %1311 = vrot.lane.b32.xlu0 %v1236, 20
        %v1312 = vpop.permute.xlu0 %1311
        %1313 = vrot.lane.b32.xlu0 %v1237, 20
        %v1314 = vpop.permute.xlu0 %1313
        %1315 = vrot.lane.b32.xlu0 %v1238, 20
        %v1316 = vpop.permute.xlu0 %1315
        %1317 = vrot.lane.b32.xlu0 %v1239, 20
        %v1318 = vpop.permute.xlu0 %1317
        %1319 = vrot.lane.b32.xlu0 %v1240, 20
        %v1320 = vpop.permute.xlu0 %1319
        %1321 = vrot.lane.b32.xlu0 %v1241, 20
        %v1322 = vpop.permute.xlu0 %1321
        %1323 = vrot.lane.b32.xlu0 %v1242, 20
        %v1324 = vpop.permute.xlu0 %1323
        %1325 = vrot.lane.b32.xlu0 %v1243, 20
        %v1326 = vpop.permute.xlu0 %1325
        %1327 = vrot.lane.b32.xlu0 %v1244, 20
        %v1328 = vpop.permute.xlu0 %1327
        %1329 = vrot.lane.b32.xlu0 %v1245, 20
        %v1330 = vpop.permute.xlu0 %1329
        %1331 = vrot.lane.b32.xlu0 %v1246, 20
        %v1332 = vpop.permute.xlu0 %1331
        %1333 = vrot.lane.b32.xlu0 %v1247, 20
        %v1334 = vpop.permute.xlu0 %1333
        %1335 = vrot.lane.b32.xlu0 %v1248, 20
        %v1336 = vpop.permute.xlu0 %1335
        %1337 = vrot.lane.b32.xlu0 %v1249, 20
        %v1338 = vpop.permute.xlu0 %1337
        %1339 = vrot.lane.b32.xlu0 %v1250, 20
        %v1340 = vpop.permute.xlu0 %1339
        %1341 = vrot.lane.b32.xlu0 %v1251, 20
        %v1342 = vpop.permute.xlu0 %1341
        %1343 = vrot.lane.b32.xlu0 %v1252, 20
        %v1344 = vpop.permute.xlu0 %1343
        %1345 = vrot.lane.b32.xlu0 %v1253, 20
        %v1346 = vpop.permute.xlu0 %1345
        %1347 = vrot.lane.b32.xlu0 %v1254, 20
        %v1348 = vpop.permute.xlu0 %1347
        %1349 = vrot.lane.b32.xlu0 %v1255, 20
        %v1350 = vpop.permute.xlu0 %1349
        %1351 = vrot.lane.b32.xlu0 %v1256, 20
        %v1352 = vpop.permute.xlu0 %1351
        %vm1385 = vcmask 195744
        %1386 = vst.msk [vmem:[#allocation3] sm:$0xff] %vm1385, %v1290
        %1387 = vst.msk [vmem:[#allocation3 + $0x8] sm:$0xff] %vm1385, %v1292
        %1388 = vst.msk [vmem:[#allocation3 + $0x10] sm:$0xff] %vm1385, %v1294
        %1389 = vst.msk [vmem:[#allocation3 + $0x18] sm:$0xff] %vm1385, %v1296
        %1390 = vst.msk [vmem:[#allocation3 + $0x20] sm:$0xff] %vm1385, %v1298
        %1391 = vst.msk [vmem:[#allocation3 + $0x28] sm:$0xff] %vm1385, %v1300
        %1392 = vst.msk [vmem:[#allocation3 + $0x30] sm:$0xff] %vm1385, %v1302
        %1393 = vst.msk [vmem:[#allocation3 + $0x38] sm:$0xff] %vm1385, %v1304
        %1394 = vst.msk [vmem:[#allocation3 + $0x40] sm:$0xff] %vm1385, %v1306
        %1395 = vst.msk [vmem:[#allocation3 + $0x48] sm:$0xff] %vm1385, %v1308
        %1396 = vst.msk [vmem:[#allocation3 + $0x50] sm:$0xff] %vm1385, %v1310
        %1397 = vst.msk [vmem:[#allocation3 + $0x58] sm:$0xff] %vm1385, %v1312
        %1398 = vst.msk [vmem:[#allocation3 + $0x60] sm:$0xff] %vm1385, %v1314
        %1399 = vst.msk [vmem:[#allocation3 + $0x68] sm:$0xff] %vm1385, %v1316
        %1400 = vst.msk [vmem:[#allocation3 + $0x70] sm:$0xff] %vm1385, %v1318
        %1401 = vst.msk [vmem:[#allocation3 + $0x78] sm:$0xff] %vm1385, %v1320
        %1402 = vst.msk [vmem:[#allocation3 + $0x80] sm:$0xff] %vm1385, %v1322
        %1403 = vst.msk [vmem:[#allocation3 + $0x88] sm:$0xff] %vm1385, %v1324
        %1404 = vst.msk [vmem:[#allocation3 + $0x90] sm:$0xff] %vm1385, %v1326
        %1405 = vst.msk [vmem:[#allocation3 + $0x98] sm:$0xff] %vm1385, %v1328
        %1406 = vst.msk [vmem:[#allocation3 + $0xa0] sm:$0xff] %vm1385, %v1330
        %1407 = vst.msk [vmem:[#allocation3 + $0xa8] sm:$0xff] %vm1385, %v1332
        %1408 = vst.msk [vmem:[#allocation3 + $0xb0] sm:$0xff] %vm1385, %v1334
        %1409 = vst.msk [vmem:[#allocation3 + $0xb8] sm:$0xff] %vm1385, %v1336
        %1410 = vst.msk [vmem:[#allocation3 + $0xc0] sm:$0xff] %vm1385, %v1338
        %1411 = vst.msk [vmem:[#allocation3 + $0xc8] sm:$0xff] %vm1385, %v1340
        %1412 = vst.msk [vmem:[#allocation3 + $0xd0] sm:$0xff] %vm1385, %v1342
        %1413 = vst.msk [vmem:[#allocation3 + $0xd8] sm:$0xff] %vm1385, %v1344
        %1414 = vst.msk [vmem:[#allocation3 + $0xe0] sm:$0xff] %vm1385, %v1346
        %1415 = vst.msk [vmem:[#allocation3 + $0xe8] sm:$0xff] %vm1385, %v1348
        %1416 = vst.msk [vmem:[#allocation3 + $0xf0] sm:$0xff] %vm1385, %v1350
        %1417 = vst.msk [vmem:[#allocation3 + $0xf8] sm:$0xff] %vm1385, %v1352
        %s1418 = scalar_lea.vmem [#allocation2], 48
        %v1419 = vld [vmem:[%s1418] sm:$0xff]
        %v1420 = vld [vmem:[%s1418 + $0x8] sm:$0xff]
        %v1421 = vld [vmem:[%s1418 + $0x18] sm:$0xff]
        %v1422 = vld [vmem:[%s1418 + $0x20] sm:$0xff]
        %v1423 = vld [vmem:[%s1418 + $0x30] sm:$0xff]
        %v1424 = vld [vmem:[%s1418 + $0x38] sm:$0xff]
        %v1425 = vld [vmem:[%s1418 + $0x48] sm:$0xff]
        %v1426 = vld [vmem:[%s1418 + $0x50] sm:$0xff]
        %v1427 = vld [vmem:[%s1418 + $0x60] sm:$0xff]
        %v1428 = vld [vmem:[%s1418 + $0x68] sm:$0xff]
        %v1429 = vld [vmem:[%s1418 + $0x78] sm:$0xff]
        %v1430 = vld [vmem:[%s1418 + $0x80] sm:$0xff]
        %v1431 = vld [vmem:[%s1418 + $0x90] sm:$0xff]
        %v1432 = vld [vmem:[%s1418 + $0x98] sm:$0xff]
        %v1433 = vld [vmem:[%s1418 + $0xa8] sm:$0xff]
        %v1434 = vld [vmem:[%s1418 + $0xb0] sm:$0xff]
        %v1435 = vld [vmem:[%s1418 + $0xc0] sm:$0xff]
        %v1436 = vld [vmem:[%s1418 + $0xc8] sm:$0xff]
        %v1437 = vld [vmem:[%s1418 + $0xd8] sm:$0xff]
        %v1438 = vld [vmem:[%s1418 + $0xe0] sm:$0xff]
        %v1439 = vld [vmem:[%s1418 + $0xf0] sm:$0xff]
        %v1440 = vld [vmem:[%s1418 + $0xf8] sm:$0xff]
        %v1441 = vld [vmem:[%s1418 + $0x108] sm:$0xff]
        %v1442 = vld [vmem:[%s1418 + $0x110] sm:$0xff]
        %v1443 = vld [vmem:[%s1418 + $0x120] sm:$0xff]
        %v1444 = vld [vmem:[%s1418 + $0x128] sm:$0xff]
        %v1445 = vld [vmem:[%s1418 + $0x138] sm:$0xff]
        %v1446 = vld [vmem:[%s1418 + $0x140] sm:$0xff]
        %v1447 = vld [vmem:[%s1418 + $0x150] sm:$0xff]
        %v1448 = vld [vmem:[%s1418 + $0x158] sm:$0xff]
        %v1449 = vld [vmem:[%s1418 + $0x168] sm:$0xff]
        %v1450 = vld [vmem:[%s1418 + $0x170] sm:$0xff]
        %1483 = vrot.lane.b32.xlu0 %v1419, 24
        %v1484 = vpop.permute.xlu0 %1483
        %1485 = vrot.lane.b32.xlu0 %v1420, 24
        %v1486 = vpop.permute.xlu0 %1485
        %1487 = vrot.lane.b32.xlu0 %v1421, 24
        %v1488 = vpop.permute.xlu0 %1487
        %1489 = vrot.lane.b32.xlu0 %v1422, 24
        %v1490 = vpop.permute.xlu0 %1489
        %1491 = vrot.lane.b32.xlu0 %v1423, 24
        %v1492 = vpop.permute.xlu0 %1491
        %1493 = vrot.lane.b32.xlu0 %v1424, 24
        %v1494 = vpop.permute.xlu0 %1493
        %1495 = vrot.lane.b32.xlu0 %v1425, 24
        %v1496 = vpop.permute.xlu0 %1495
        %1497 = vrot.lane.b32.xlu0 %v1426, 24
        %v1498 = vpop.permute.xlu0 %1497
        %1499 = vrot.lane.b32.xlu0 %v1427, 24
        %v1500 = vpop.permute.xlu0 %1499
        %1501 = vrot.lane.b32.xlu0 %v1428, 24
        %v1502 = vpop.permute.xlu0 %1501
        %1503 = vrot.lane.b32.xlu0 %v1429, 24
        %v1504 = vpop.permute.xlu0 %1503
        %1505 = vrot.lane.b32.xlu0 %v1430, 24
        %v1506 = vpop.permute.xlu0 %1505
        %1507 = vrot.lane.b32.xlu0 %v1431, 24
        %v1508 = vpop.permute.xlu0 %1507
        %1509 = vrot.lane.b32.xlu0 %v1432, 24
        %v1510 = vpop.permute.xlu0 %1509
        %1511 = vrot.lane.b32.xlu0 %v1433, 24
        %v1512 = vpop.permute.xlu0 %1511
        %1513 = vrot.lane.b32.xlu0 %v1434, 24
        %v1514 = vpop.permute.xlu0 %1513
        %1515 = vrot.lane.b32.xlu0 %v1435, 24
        %v1516 = vpop.permute.xlu0 %1515
        %1517 = vrot.lane.b32.xlu0 %v1436, 24
        %v1518 = vpop.permute.xlu0 %1517
        %1519 = vrot.lane.b32.xlu0 %v1437, 24
        %v1520 = vpop.permute.xlu0 %1519
        %1521 = vrot.lane.b32.xlu0 %v1438, 24
        %v1522 = vpop.permute.xlu0 %1521
        %1523 = vrot.lane.b32.xlu0 %v1439, 24
        %v1524 = vpop.permute.xlu0 %1523
        %1525 = vrot.lane.b32.xlu0 %v1440, 24
        %v1526 = vpop.permute.xlu0 %1525
        %1527 = vrot.lane.b32.xlu0 %v1441, 24
        %v1528 = vpop.permute.xlu0 %1527
        %1529 = vrot.lane.b32.xlu0 %v1442, 24
        %v1530 = vpop.permute.xlu0 %1529
        %1531 = vrot.lane.b32.xlu0 %v1443, 24
        %v1532 = vpop.permute.xlu0 %1531
        %1533 = vrot.lane.b32.xlu0 %v1444, 24
        %v1534 = vpop.permute.xlu0 %1533
        %1535 = vrot.lane.b32.xlu0 %v1445, 24
        %v1536 = vpop.permute.xlu0 %1535
        %1537 = vrot.lane.b32.xlu0 %v1446, 24
        %v1538 = vpop.permute.xlu0 %1537
        %1539 = vrot.lane.b32.xlu0 %v1447, 24
        %v1540 = vpop.permute.xlu0 %1539
        %1541 = vrot.lane.b32.xlu0 %v1448, 24
        %v1542 = vpop.permute.xlu0 %1541
        %1543 = vrot.lane.b32.xlu0 %v1449, 24
        %v1544 = vpop.permute.xlu0 %1543
        %1545 = vrot.lane.b32.xlu0 %v1450, 24
        %v1546 = vpop.permute.xlu0 %1545
        %vm1579 = vcmask 228544
        %1580 = vst.msk [vmem:[#allocation3] sm:$0xff] %vm1579, %v1484
        %1581 = vst.msk [vmem:[#allocation3 + $0x8] sm:$0xff] %vm1579, %v1486
        %1582 = vst.msk [vmem:[#allocation3 + $0x10] sm:$0xff] %vm1579, %v1488
        %1583 = vst.msk [vmem:[#allocation3 + $0x18] sm:$0xff] %vm1579, %v1490
        %1584 = vst.msk [vmem:[#allocation3 + $0x20] sm:$0xff] %vm1579, %v1492
        %1585 = vst.msk [vmem:[#allocation3 + $0x28] sm:$0xff] %vm1579, %v1494
        %1586 = vst.msk [vmem:[#allocation3 + $0x30] sm:$0xff] %vm1579, %v1496
        %1587 = vst.msk [vmem:[#allocation3 + $0x38] sm:$0xff] %vm1579, %v1498
        %1588 = vst.msk [vmem:[#allocation3 + $0x40] sm:$0xff] %vm1579, %v1500
        %1589 = vst.msk [vmem:[#allocation3 + $0x48] sm:$0xff] %vm1579, %v1502
        %1590 = vst.msk [vmem:[#allocation3 + $0x50] sm:$0xff] %vm1579, %v1504
        %1591 = vst.msk [vmem:[#allocation3 + $0x58] sm:$0xff] %vm1579, %v1506
        %1592 = vst.msk [vmem:[#allocation3 + $0x60] sm:$0xff] %vm1579, %v1508
        %1593 = vst.msk [vmem:[#allocation3 + $0x68] sm:$0xff] %vm1579, %v1510
        %1594 = vst.msk [vmem:[#allocation3 + $0x70] sm:$0xff] %vm1579, %v1512
        %1595 = vst.msk [vmem:[#allocation3 + $0x78] sm:$0xff] %vm1579, %v1514
        %1596 = vst.msk [vmem:[#allocation3 + $0x80] sm:$0xff] %vm1579, %v1516
        %1597 = vst.msk [vmem:[#allocation3 + $0x88] sm:$0xff] %vm1579, %v1518
        %1598 = vst.msk [vmem:[#allocation3 + $0x90] sm:$0xff] %vm1579, %v1520
        %1599 = vst.msk [vmem:[#allocation3 + $0x98] sm:$0xff] %vm1579, %v1522
        %1600 = vst.msk [vmem:[#allocation3 + $0xa0] sm:$0xff] %vm1579, %v1524
        %1601 = vst.msk [vmem:[#allocation3 + $0xa8] sm:$0xff] %vm1579, %v1526
        %1602 = vst.msk [vmem:[#allocation3 + $0xb0] sm:$0xff] %vm1579, %v1528
        %1603 = vst.msk [vmem:[#allocation3 + $0xb8] sm:$0xff] %vm1579, %v1530
        %1604 = vst.msk [vmem:[#allocation3 + $0xc0] sm:$0xff] %vm1579, %v1532
        %1605 = vst.msk [vmem:[#allocation3 + $0xc8] sm:$0xff] %vm1579, %v1534
        %1606 = vst.msk [vmem:[#allocation3 + $0xd0] sm:$0xff] %vm1579, %v1536
        %1607 = vst.msk [vmem:[#allocation3 + $0xd8] sm:$0xff] %vm1579, %v1538
        %1608 = vst.msk [vmem:[#allocation3 + $0xe0] sm:$0xff] %vm1579, %v1540
        %1609 = vst.msk [vmem:[#allocation3 + $0xe8] sm:$0xff] %vm1579, %v1542
        %1610 = vst.msk [vmem:[#allocation3 + $0xf0] sm:$0xff] %vm1579, %v1544
        %1611 = vst.msk [vmem:[#allocation3 + $0xf8] sm:$0xff] %vm1579, %v1546
        %v1612 = vld [vmem:[%s1418 + $0x1] sm:$0xff]
        %v1613 = vld [vmem:[%s1418 + $0x9] sm:$0xff]
        %v1614 = vld [vmem:[%s1418 + $0x19] sm:$0xff]
        %v1615 = vld [vmem:[%s1418 + $0x21] sm:$0xff]
        %v1616 = vld [vmem:[%s1418 + $0x31] sm:$0xff]
        %v1617 = vld [vmem:[%s1418 + $0x39] sm:$0xff]
        %v1618 = vld [vmem:[%s1418 + $0x49] sm:$0xff]
        %v1619 = vld [vmem:[%s1418 + $0x51] sm:$0xff]
        %v1620 = vld [vmem:[%s1418 + $0x61] sm:$0xff]
        %v1621 = vld [vmem:[%s1418 + $0x69] sm:$0xff]
        %v1622 = vld [vmem:[%s1418 + $0x79] sm:$0xff]
        %v1623 = vld [vmem:[%s1418 + $0x81] sm:$0xff]
        %v1624 = vld [vmem:[%s1418 + $0x91] sm:$0xff]
        %v1625 = vld [vmem:[%s1418 + $0x99] sm:$0xff]
        %v1626 = vld [vmem:[%s1418 + $0xa9] sm:$0xff]
        %v1627 = vld [vmem:[%s1418 + $0xb1] sm:$0xff]
        %v1628 = vld [vmem:[%s1418 + $0xc1] sm:$0xff]
        %v1629 = vld [vmem:[%s1418 + $0xc9] sm:$0xff]
        %v1630 = vld [vmem:[%s1418 + $0xd9] sm:$0xff]
        %v1631 = vld [vmem:[%s1418 + $0xe1] sm:$0xff]
        %v1632 = vld [vmem:[%s1418 + $0xf1] sm:$0xff]
        %v1633 = vld [vmem:[%s1418 + $0xf9] sm:$0xff]
        %v1634 = vld [vmem:[%s1418 + $0x109] sm:$0xff]
        %v1635 = vld [vmem:[%s1418 + $0x111] sm:$0xff]
        %v1636 = vld [vmem:[%s1418 + $0x121] sm:$0xff]
        %v1637 = vld [vmem:[%s1418 + $0x129] sm:$0xff]
        %v1638 = vld [vmem:[%s1418 + $0x139] sm:$0xff]
        %v1639 = vld [vmem:[%s1418 + $0x141] sm:$0xff]
        %v1640 = vld [vmem:[%s1418 + $0x151] sm:$0xff]
        %v1641 = vld [vmem:[%s1418 + $0x159] sm:$0xff]
        %v1642 = vld [vmem:[%s1418 + $0x169] sm:$0xff]
        %v1643 = vld [vmem:[%s1418 + $0x171] sm:$0xff]
        %1676 = vrot.lane.b32.xlu0 %v1612, 28
        %v1677 = vpop.permute.xlu0 %1676
        %1678 = vrot.lane.b32.xlu0 %v1613, 28
        %v1679 = vpop.permute.xlu0 %1678
        %1680 = vrot.lane.b32.xlu0 %v1614, 28
        %v1681 = vpop.permute.xlu0 %1680
        %1682 = vrot.lane.b32.xlu0 %v1615, 28
        %v1683 = vpop.permute.xlu0 %1682
        %1684 = vrot.lane.b32.xlu0 %v1616, 28
        %v1685 = vpop.permute.xlu0 %1684
        %1686 = vrot.lane.b32.xlu0 %v1617, 28
        %v1687 = vpop.permute.xlu0 %1686
        %1688 = vrot.lane.b32.xlu0 %v1618, 28
        %v1689 = vpop.permute.xlu0 %1688
        %1690 = vrot.lane.b32.xlu0 %v1619, 28
        %v1691 = vpop.permute.xlu0 %1690
        %1692 = vrot.lane.b32.xlu0 %v1620, 28
        %v1693 = vpop.permute.xlu0 %1692
        %1694 = vrot.lane.b32.xlu0 %v1621, 28
        %v1695 = vpop.permute.xlu0 %1694
        %1696 = vrot.lane.b32.xlu0 %v1622, 28
        %v1697 = vpop.permute.xlu0 %1696
        %1698 = vrot.lane.b32.xlu0 %v1623, 28
        %v1699 = vpop.permute.xlu0 %1698
        %1700 = vrot.lane.b32.xlu0 %v1624, 28
        %v1701 = vpop.permute.xlu0 %1700
        %1702 = vrot.lane.b32.xlu0 %v1625, 28
        %v1703 = vpop.permute.xlu0 %1702
        %1704 = vrot.lane.b32.xlu0 %v1626, 28
        %v1705 = vpop.permute.xlu0 %1704
        %1706 = vrot.lane.b32.xlu0 %v1627, 28
        %v1707 = vpop.permute.xlu0 %1706
        %1708 = vrot.lane.b32.xlu0 %v1628, 28
        %v1709 = vpop.permute.xlu0 %1708
        %1710 = vrot.lane.b32.xlu0 %v1629, 28
        %v1711 = vpop.permute.xlu0 %1710
        %1712 = vrot.lane.b32.xlu0 %v1630, 28
        %v1713 = vpop.permute.xlu0 %1712
        %1714 = vrot.lane.b32.xlu0 %v1631, 28
        %v1715 = vpop.permute.xlu0 %1714
        %1716 = vrot.lane.b32.xlu0 %v1632, 28
        %v1717 = vpop.permute.xlu0 %1716
        %1718 = vrot.lane.b32.xlu0 %v1633, 28
        %v1719 = vpop.permute.xlu0 %1718
        %1720 = vrot.lane.b32.xlu0 %v1634, 28
        %v1721 = vpop.permute.xlu0 %1720
        %1722 = vrot.lane.b32.xlu0 %v1635, 28
        %v1723 = vpop.permute.xlu0 %1722
        %1724 = vrot.lane.b32.xlu0 %v1636, 28
        %v1725 = vpop.permute.xlu0 %1724
        %1726 = vrot.lane.b32.xlu0 %v1637, 28
        %v1727 = vpop.permute.xlu0 %1726
        %1728 = vrot.lane.b32.xlu0 %v1638, 28
        %v1729 = vpop.permute.xlu0 %1728
        %1730 = vrot.lane.b32.xlu0 %v1639, 28
        %v1731 = vpop.permute.xlu0 %1730
        %1732 = vrot.lane.b32.xlu0 %v1640, 28
        %v1733 = vpop.permute.xlu0 %1732
        %1734 = vrot.lane.b32.xlu0 %v1641, 28
        %v1735 = vpop.permute.xlu0 %1734
        %1736 = vrot.lane.b32.xlu0 %v1642, 28
        %v1737 = vpop.permute.xlu0 %1736
        %1738 = vrot.lane.b32.xlu0 %v1643, 28
        %v1739 = vpop.permute.xlu0 %1738
        %vm1772 = vcmask 261344
        %1773 = vst.msk [vmem:[#allocation3] sm:$0xff] %vm1772, %v1677
        %1774 = vst.msk [vmem:[#allocation3 + $0x8] sm:$0xff] %vm1772, %v1679
        %1775 = vst.msk [vmem:[#allocation3 + $0x10] sm:$0xff] %vm1772, %v1681
        %1776 = vst.msk [vmem:[#allocation3 + $0x18] sm:$0xff] %vm1772, %v1683
        %1777 = vst.msk [vmem:[#allocation3 + $0x20] sm:$0xff] %vm1772, %v1685
        %1778 = vst.msk [vmem:[#allocation3 + $0x28] sm:$0xff] %vm1772, %v1687
        %1779 = vst.msk [vmem:[#allocation3 + $0x30] sm:$0xff] %vm1772, %v1689
        %1780 = vst.msk [vmem:[#allocation3 + $0x38] sm:$0xff] %vm1772, %v1691
        %1781 = vst.msk [vmem:[#allocation3 + $0x40] sm:$0xff] %vm1772, %v1693
        %1782 = vst.msk [vmem:[#allocation3 + $0x48] sm:$0xff] %vm1772, %v1695
        %1783 = vst.msk [vmem:[#allocation3 + $0x50] sm:$0xff] %vm1772, %v1697
        %1784 = vst.msk [vmem:[#allocation3 + $0x58] sm:$0xff] %vm1772, %v1699
        %1785 = vst.msk [vmem:[#allocation3 + $0x60] sm:$0xff] %vm1772, %v1701
        %1786 = vst.msk [vmem:[#allocation3 + $0x68] sm:$0xff] %vm1772, %v1703
        %1787 = vst.msk [vmem:[#allocation3 + $0x70] sm:$0xff] %vm1772, %v1705
        %1788 = vst.msk [vmem:[#allocation3 + $0x78] sm:$0xff] %vm1772, %v1707
        %1789 = vst.msk [vmem:[#allocation3 + $0x80] sm:$0xff] %vm1772, %v1709
        %1790 = vst.msk [vmem:[#allocation3 + $0x88] sm:$0xff] %vm1772, %v1711
        %1791 = vst.msk [vmem:[#allocation3 + $0x90] sm:$0xff] %vm1772, %v1713
        %1792 = vst.msk [vmem:[#allocation3 + $0x98] sm:$0xff] %vm1772, %v1715
        %1793 = vst.msk [vmem:[#allocation3 + $0xa0] sm:$0xff] %vm1772, %v1717
        %1794 = vst.msk [vmem:[#allocation3 + $0xa8] sm:$0xff] %vm1772, %v1719
        %1795 = vst.msk [vmem:[#allocation3 + $0xb0] sm:$0xff] %vm1772, %v1721
        %1796 = vst.msk [vmem:[#allocation3 + $0xb8] sm:$0xff] %vm1772, %v1723
        %1797 = vst.msk [vmem:[#allocation3 + $0xc0] sm:$0xff] %vm1772, %v1725
        %1798 = vst.msk [vmem:[#allocation3 + $0xc8] sm:$0xff] %vm1772, %v1727
        %1799 = vst.msk [vmem:[#allocation3 + $0xd0] sm:$0xff] %vm1772, %v1729
        %1800 = vst.msk [vmem:[#allocation3 + $0xd8] sm:$0xff] %vm1772, %v1731
        %1801 = vst.msk [vmem:[#allocation3 + $0xe0] sm:$0xff] %vm1772, %v1733
        %1802 = vst.msk [vmem:[#allocation3 + $0xe8] sm:$0xff] %vm1772, %v1735
        %1803 = vst.msk [vmem:[#allocation3 + $0xf0] sm:$0xff] %vm1772, %v1737
        %1804 = vst.msk [vmem:[#allocation3 + $0xf8] sm:$0xff] %vm1772, %v1739
        %v1805 = vld [vmem:[%s1418 + $0x2] sm:$0xff]
        %v1806 = vld [vmem:[%s1418 + $0xa] sm:$0xff]
        %v1807 = vld [vmem:[%s1418 + $0x1a] sm:$0xff]
        %v1808 = vld [vmem:[%s1418 + $0x22] sm:$0xff]
        %v1809 = vld [vmem:[%s1418 + $0x32] sm:$0xff]
        %v1810 = vld [vmem:[%s1418 + $0x3a] sm:$0xff]
        %v1811 = vld [vmem:[%s1418 + $0x4a] sm:$0xff]
        %v1812 = vld [vmem:[%s1418 + $0x52] sm:$0xff]
        %v1813 = vld [vmem:[%s1418 + $0x62] sm:$0xff]
        %v1814 = vld [vmem:[%s1418 + $0x6a] sm:$0xff]
        %v1815 = vld [vmem:[%s1418 + $0x7a] sm:$0xff]
        %v1816 = vld [vmem:[%s1418 + $0x82] sm:$0xff]
        %v1817 = vld [vmem:[%s1418 + $0x92] sm:$0xff]
        %v1818 = vld [vmem:[%s1418 + $0x9a] sm:$0xff]
        %v1819 = vld [vmem:[%s1418 + $0xaa] sm:$0xff]
        %v1820 = vld [vmem:[%s1418 + $0xb2] sm:$0xff]
        %v1821 = vld [vmem:[%s1418 + $0xc2] sm:$0xff]
        %v1822 = vld [vmem:[%s1418 + $0xca] sm:$0xff]
        %v1823 = vld [vmem:[%s1418 + $0xda] sm:$0xff]
        %v1824 = vld [vmem:[%s1418 + $0xe2] sm:$0xff]
        %v1825 = vld [vmem:[%s1418 + $0xf2] sm:$0xff]
        %v1826 = vld [vmem:[%s1418 + $0xfa] sm:$0xff]
        %v1827 = vld [vmem:[%s1418 + $0x10a] sm:$0xff]
        %v1828 = vld [vmem:[%s1418 + $0x112] sm:$0xff]
        %v1829 = vld [vmem:[%s1418 + $0x122] sm:$0xff]
        %v1830 = vld [vmem:[%s1418 + $0x12a] sm:$0xff]
        %v1831 = vld [vmem:[%s1418 + $0x13a] sm:$0xff]
        %v1832 = vld [vmem:[%s1418 + $0x142] sm:$0xff]
        %v1833 = vld [vmem:[%s1418 + $0x152] sm:$0xff]
        %v1834 = vld [vmem:[%s1418 + $0x15a] sm:$0xff]
        %v1835 = vld [vmem:[%s1418 + $0x16a] sm:$0xff]
        %v1836 = vld [vmem:[%s1418 + $0x172] sm:$0xff]
        %1869 = vrot.lane.b32.xlu0 %v1805, 32
        %v1870 = vpop.permute.xlu0 %1869
        %1871 = vrot.lane.b32.xlu0 %v1806, 32
        %v1872 = vpop.permute.xlu0 %1871
        %1873 = vrot.lane.b32.xlu0 %v1807, 32
        %v1874 = vpop.permute.xlu0 %1873
        %1875 = vrot.lane.b32.xlu0 %v1808, 32
        %v1876 = vpop.permute.xlu0 %1875
        %1877 = vrot.lane.b32.xlu0 %v1809, 32
        %v1878 = vpop.permute.xlu0 %1877
        %1879 = vrot.lane.b32.xlu0 %v1810, 32
        %v1880 = vpop.permute.xlu0 %1879
        %1881 = vrot.lane.b32.xlu0 %v1811, 32
        %v1882 = vpop.permute.xlu0 %1881
        %1883 = vrot.lane.b32.xlu0 %v1812, 32
        %v1884 = vpop.permute.xlu0 %1883
        %1885 = vrot.lane.b32.xlu0 %v1813, 32
        %v1886 = vpop.permute.xlu0 %1885
        %1887 = vrot.lane.b32.xlu0 %v1814, 32
        %v1888 = vpop.permute.xlu0 %1887
        %1889 = vrot.lane.b32.xlu0 %v1815, 32
        %v1890 = vpop.permute.xlu0 %1889
        %1891 = vrot.lane.b32.xlu0 %v1816, 32
        %v1892 = vpop.permute.xlu0 %1891
        %1893 = vrot.lane.b32.xlu0 %v1817, 32
        %v1894 = vpop.permute.xlu0 %1893
        %1895 = vrot.lane.b32.xlu0 %v1818, 32
        %v1896 = vpop.permute.xlu0 %1895
        %1897 = vrot.lane.b32.xlu0 %v1819, 32
        %v1898 = vpop.permute.xlu0 %1897
        %1899 = vrot.lane.b32.xlu0 %v1820, 32
        %v1900 = vpop.permute.xlu0 %1899
        %1901 = vrot.lane.b32.xlu0 %v1821, 32
        %v1902 = vpop.permute.xlu0 %1901
        %1903 = vrot.lane.b32.xlu0 %v1822, 32
        %v1904 = vpop.permute.xlu0 %1903
        %1905 = vrot.lane.b32.xlu0 %v1823, 32
        %v1906 = vpop.permute.xlu0 %1905
        %1907 = vrot.lane.b32.xlu0 %v1824, 32
        %v1908 = vpop.permute.xlu0 %1907
        %1909 = vrot.lane.b32.xlu0 %v1825, 32
        %v1910 = vpop.permute.xlu0 %1909
        %1911 = vrot.lane.b32.xlu0 %v1826, 32
        %v1912 = vpop.permute.xlu0 %1911
        %1913 = vrot.lane.b32.xlu0 %v1827, 32
        %v1914 = vpop.permute.xlu0 %1913
        %1915 = vrot.lane.b32.xlu0 %v1828, 32
        %v1916 = vpop.permute.xlu0 %1915
        %1917 = vrot.lane.b32.xlu0 %v1829, 32
        %v1918 = vpop.permute.xlu0 %1917
        %1919 = vrot.lane.b32.xlu0 %v1830, 32
        %v1920 = vpop.permute.xlu0 %1919
        %1921 = vrot.lane.b32.xlu0 %v1831, 32
        %v1922 = vpop.permute.xlu0 %1921
        %1923 = vrot.lane.b32.xlu0 %v1832, 32
        %v1924 = vpop.permute.xlu0 %1923
        %1925 = vrot.lane.b32.xlu0 %v1833, 32
        %v1926 = vpop.permute.xlu0 %1925
        %1927 = vrot.lane.b32.xlu0 %v1834, 32
        %v1928 = vpop.permute.xlu0 %1927
        %1929 = vrot.lane.b32.xlu0 %v1835, 32
        %v1930 = vpop.permute.xlu0 %1929
        %1931 = vrot.lane.b32.xlu0 %v1836, 32
        %v1932 = vpop.permute.xlu0 %1931
        %vm1965 = vcmask 294144
        %1966 = vst.msk [vmem:[#allocation3] sm:$0xff] %vm1965, %v1870
        %1967 = vst.msk [vmem:[#allocation3 + $0x8] sm:$0xff] %vm1965, %v1872
        %1968 = vst.msk [vmem:[#allocation3 + $0x10] sm:$0xff] %vm1965, %v1874
        %1969 = vst.msk [vmem:[#allocation3 + $0x18] sm:$0xff] %vm1965, %v1876
        %1970 = vst.msk [vmem:[#allocation3 + $0x20] sm:$0xff] %vm1965, %v1878
        %1971 = vst.msk [vmem:[#allocation3 + $0x28] sm:$0xff] %vm1965, %v1880
        %1972 = vst.msk [vmem:[#allocation3 + $0x30] sm:$0xff] %vm1965, %v1882
        %1973 = vst.msk [vmem:[#allocation3 + $0x38] sm:$0xff] %vm1965, %v1884
        %1974 = vst.msk [vmem:[#allocation3 + $0x40] sm:$0xff] %vm1965, %v1886
        %1975 = vst.msk [vmem:[#allocation3 + $0x48] sm:$0xff] %vm1965, %v1888
        %1976 = vst.msk [vmem:[#allocation3 + $0x50] sm:$0xff] %vm1965, %v1890
        %1977 = vst.msk [vmem:[#allocation3 + $0x58] sm:$0xff] %vm1965, %v1892
        %1978 = vst.msk [vmem:[#allocation3 + $0x60] sm:$0xff] %vm1965, %v1894
        %1979 = vst.msk [vmem:[#allocation3 + $0x68] sm:$0xff] %vm1965, %v1896
        %1980 = vst.msk [vmem:[#allocation3 + $0x70] sm:$0xff] %vm1965, %v1898
        %1981 = vst.msk [vmem:[#allocation3 + $0x78] sm:$0xff] %vm1965, %v1900
        %1982 = vst.msk [vmem:[#allocation3 + $0x80] sm:$0xff] %vm1965, %v1902
        %1983 = vst.msk [vmem:[#allocation3 + $0x88] sm:$0xff] %vm1965, %v1904
        %1984 = vst.msk [vmem:[#allocation3 + $0x90] sm:$0xff] %vm1965, %v1906
        %1985 = vst.msk [vmem:[#allocation3 + $0x98] sm:$0xff] %vm1965, %v1908
        %1986 = vst.msk [vmem:[#allocation3 + $0xa0] sm:$0xff] %vm1965, %v1910
        %1987 = vst.msk [vmem:[#allocation3 + $0xa8] sm:$0xff] %vm1965, %v1912
        %1988 = vst.msk [vmem:[#allocation3 + $0xb0] sm:$0xff] %vm1965, %v1914
        %1989 = vst.msk [vmem:[#allocation3 + $0xb8] sm:$0xff] %vm1965, %v1916
        %1990 = vst.msk [vmem:[#allocation3 + $0xc0] sm:$0xff] %vm1965, %v1918
        %1991 = vst.msk [vmem:[#allocation3 + $0xc8] sm:$0xff] %vm1965, %v1920
        %1992 = vst.msk [vmem:[#allocation3 + $0xd0] sm:$0xff] %vm1965, %v1922
        %1993 = vst.msk [vmem:[#allocation3 + $0xd8] sm:$0xff] %vm1965, %v1924
        %1994 = vst.msk [vmem:[#allocation3 + $0xe0] sm:$0xff] %vm1965, %v1926
        %1995 = vst.msk [vmem:[#allocation3 + $0xe8] sm:$0xff] %vm1965, %v1928
        %1996 = vst.msk [vmem:[#allocation3 + $0xf0] sm:$0xff] %vm1965, %v1930
        %1997 = vst.msk [vmem:[#allocation3 + $0xf8] sm:$0xff] %vm1965, %v1932
        %v1998 = vld [vmem:[#allocation3] sm:$0xff]
        %v1999 = vld [vmem:[#allocation3 + $0x8] sm:$0xff]
        %v2000 = vld [vmem:[#allocation3 + $0x10] sm:$0xff]
        %v2001 = vld [vmem:[#allocation3 + $0x18] sm:$0xff]
        %v2002 = vld [vmem:[#allocation3 + $0x20] sm:$0xff]
        %v2003 = vld [vmem:[#allocation3 + $0x28] sm:$0xff]
        %v2004 = vld [vmem:[#allocation3 + $0x30] sm:$0xff]
        %v2005 = vld [vmem:[#allocation3 + $0x38] sm:$0xff]
        %v2006 = vld [vmem:[#allocation3 + $0x40] sm:$0xff]
        %v2007 = vld [vmem:[#allocation3 + $0x48] sm:$0xff]
        %v2008 = vld [vmem:[#allocation3 + $0x50] sm:$0xff]
        %v2009 = vld [vmem:[#allocation3 + $0x58] sm:$0xff]
        %v2010 = vld [vmem:[#allocation3 + $0x60] sm:$0xff]
        %v2011 = vld [vmem:[#allocation3 + $0x68] sm:$0xff]
        %v2012 = vld [vmem:[#allocation3 + $0x70] sm:$0xff]
        %v2013 = vld [vmem:[#allocation3 + $0x78] sm:$0xff]
        %v2014 = vld [vmem:[#allocation3 + $0x80] sm:$0xff]
        %v2015 = vld [vmem:[#allocation3 + $0x88] sm:$0xff]
        %v2016 = vld [vmem:[#allocation3 + $0x90] sm:$0xff]
        %v2017 = vld [vmem:[#allocation3 + $0x98] sm:$0xff]
        %v2018 = vld [vmem:[#allocation3 + $0xa0] sm:$0xff]
        %v2019 = vld [vmem:[#allocation3 + $0xa8] sm:$0xff]
        %v2020 = vld [vmem:[#allocation3 + $0xb0] sm:$0xff]
        %v2021 = vld [vmem:[#allocation3 + $0xb8] sm:$0xff]
        %v2022 = vld [vmem:[#allocation3 + $0xc0] sm:$0xff]
        %v2023 = vld [vmem:[#allocation3 + $0xc8] sm:$0xff]
        %v2024 = vld [vmem:[#allocation3 + $0xd0] sm:$0xff]
        %v2025 = vld [vmem:[#allocation3 + $0xd8] sm:$0xff]
        %v2026 = vld [vmem:[#allocation3 + $0xe0] sm:$0xff]
        %v2027 = vld [vmem:[#allocation3 + $0xe8] sm:$0xff]
        %v2028 = vld [vmem:[#allocation3 + $0xf0] sm:$0xff]
        %v2029 = vld [vmem:[#allocation3 + $0xf8] sm:$0xff]
        %v2030 = vld [vmem:[%s1] sm:$0xff]
        %v2031 = vld [vmem:[%s1 + $0x8] sm:$0xff]
        %v2032 = vld [vmem:[%s1 + $0x10] sm:$0xff]
        %v2033 = vld [vmem:[%s1 + $0x18] sm:$0xff]
        %v2034 = vld [vmem:[%s1 + $0x20] sm:$0xf]
        %v2035 = vld [vmem:[%s2] sm:$0x1]
        %v2037 = vperm.slane %v2035, 0
        %vm2039 = vcmask 293888
        %v2041 = vsel %vm2039, %v1998, 0
        %v2044 = vsel %vm2039, %v1999, 0
        %v2047 = vsel %vm2039, %v2000, 0
        %v2050 = vsel %vm2039, %v2001, 0
        %v2053 = vsel %vm2039, %v2002, 0
        %v2056 = vsel %vm2039, %v2003, 0
        %v2059 = vsel %vm2039, %v2004, 0
        %v2062 = vsel %vm2039, %v2005, 0
        %v2065 = vsel %vm2039, %v2006, 0
        %v2068 = vsel %vm2039, %v2007, 0
        %v2071 = vsel %vm2039, %v2008, 0
        %v2074 = vsel %vm2039, %v2009, 0
        %v2077 = vsel %vm2039, %v2010, 0
        %v2080 = vsel %vm2039, %v2011, 0
        %v2083 = vsel %vm2039, %v2012, 0
        %v2086 = vsel %vm2039, %v2013, 0
        %v2089 = vsel %vm2039, %v2014, 0
        %v2092 = vsel %vm2039, %v2015, 0
        %v2095 = vsel %vm2039, %v2016, 0
        %v2098 = vsel %vm2039, %v2017, 0
        %v2101 = vsel %vm2039, %v2018, 0
        %v2104 = vsel %vm2039, %v2019, 0
        %v2107 = vsel %vm2039, %v2020, 0
        %v2110 = vsel %vm2039, %v2021, 0
        %v2113 = vsel %vm2039, %v2022, 0
        %v2116 = vsel %vm2039, %v2023, 0
        %v2119 = vsel %vm2039, %v2024, 0
        %v2122 = vsel %vm2039, %v2025, 0
        %v2125 = vsel %vm2039, %v2026, 0
        %v2128 = vsel %vm2039, %v2027, 0
        %v2131 = vsel %vm2039, %v2028, 0
        %v2134 = vsel %vm2039, %v2029, 0
        %vm2136 = vcmask 1043456
        %v2138 = vsel %vm2136, %v2034, 0
        %2140 = vmatpush.msra.mxu0 0.0
        %2141 = vmatpush.msra.mxu0 0.0
        %2142 = vmatpush.msra.mxu0 0.0
        %2143 = vmatpush.msra.mxu0 0.0
        %2144 = vmatpush.msra.mxu0 0.0
        %2145 = vmatpush.msra.mxu0 0.0
        %2146 = vmatpush.msra.mxu0 0.0
        %2147 = vmatpush.msra.mxu0 0.0
        %2148 = vmatpush.msra.mxu0 0.0
        %2149 = vmatpush.msra.mxu0 0.0
        %2150 = vmatpush.msra.mxu0 0.0
        %2151 = vmatpush.msra.mxu0 %v2138
        %2152 = vmatpush.msra.mxu0 %v2033
        %2153 = vmatpush.msra.mxu0 %v2032
        %2154 = vmatpush.msra.mxu0 %v2031
        %2155 = vmatpush.msra.mxu0 %v2030
        %2156 = vmatmul.f32.gmra.mxu0 %v2041
        %v2157 = vpop.f32.mrf.mxu0
        %v2158 = vadd.f32 %v2037, %v2157
        %2159 = vmatmul.f32.gmra.mxu0 %v2044
        %v2160 = vpop.f32.mrf.mxu0
        %v2161 = vadd.f32 %v2037, %v2160
        %2162 = vmatmul.f32.gmra.mxu0 %v2047
        %v2163 = vpop.f32.mrf.mxu0
        %v2164 = vadd.f32 %v2037, %v2163
        %2165 = vmatmul.f32.gmra.mxu0 %v2050
        %v2166 = vpop.f32.mrf.mxu0
        %v2167 = vadd.f32 %v2037, %v2166
        %2168 = vmatmul.f32.gmra.mxu0 %v2053
        %v2169 = vpop.f32.mrf.mxu0
        %v2170 = vadd.f32 %v2037, %v2169
        %2171 = vmatmul.f32.gmra.mxu0 %v2056
        %v2172 = vpop.f32.mrf.mxu0
        %v2173 = vadd.f32 %v2037, %v2172
        %2174 = vmatmul.f32.gmra.mxu0 %v2059
        %v2175 = vpop.f32.mrf.mxu0
        %v2176 = vadd.f32 %v2037, %v2175
        %2177 = vmatmul.f32.gmra.mxu0 %v2062
        %v2178 = vpop.f32.mrf.mxu0
        %v2179 = vadd.f32 %v2037, %v2178
        %2180 = vmatmul.f32.gmra.mxu0 %v2065
        %v2181 = vpop.f32.mrf.mxu0
        %v2182 = vadd.f32 %v2037, %v2181
        %2183 = vmatmul.f32.gmra.mxu0 %v2068
        %v2184 = vpop.f32.mrf.mxu0
        %v2185 = vadd.f32 %v2037, %v2184
        %2186 = vmatmul.f32.gmra.mxu0 %v2071
        %v2187 = vpop.f32.mrf.mxu0
        %v2188 = vadd.f32 %v2037, %v2187
        %2189 = vmatmul.f32.gmra.mxu0 %v2074
        %v2190 = vpop.f32.mrf.mxu0
        %v2191 = vadd.f32 %v2037, %v2190
        %2192 = vmatmul.f32.gmra.mxu0 %v2077
        %v2193 = vpop.f32.mrf.mxu0
        %v2194 = vadd.f32 %v2037, %v2193
        %2195 = vmatmul.f32.gmra.mxu0 %v2080
        %v2196 = vpop.f32.mrf.mxu0
        %v2197 = vadd.f32 %v2037, %v2196
        %2198 = vmatmul.f32.gmra.mxu0 %v2083
        %v2199 = vpop.f32.mrf.mxu0
        %v2200 = vadd.f32 %v2037, %v2199
        %2201 = vmatmul.f32.gmra.mxu0 %v2086
        %v2202 = vpop.f32.mrf.mxu0
        %v2203 = vadd.f32 %v2037, %v2202
        %2204 = vmatmul.f32.gmra.mxu0 %v2089
        %v2205 = vpop.f32.mrf.mxu0
        %v2206 = vadd.f32 %v2037, %v2205
        %2207 = vmatmul.f32.gmra.mxu0 %v2092
        %v2208 = vpop.f32.mrf.mxu0
        %v2209 = vadd.f32 %v2037, %v2208
        %2210 = vmatmul.f32.gmra.mxu0 %v2095
        %v2211 = vpop.f32.mrf.mxu0
        %v2212 = vadd.f32 %v2037, %v2211
        %2213 = vmatmul.f32.gmra.mxu0 %v2098
        %v2214 = vpop.f32.mrf.mxu0
        %v2215 = vadd.f32 %v2037, %v2214
        %2216 = vmatmul.f32.gmra.mxu0 %v2101
        %v2217 = vpop.f32.mrf.mxu0
        %v2218 = vadd.f32 %v2037, %v2217
        %2219 = vmatmul.f32.gmra.mxu0 %v2104
        %v2220 = vpop.f32.mrf.mxu0
        %v2221 = vadd.f32 %v2037, %v2220
        %2222 = vmatmul.f32.gmra.mxu0 %v2107
        %v2223 = vpop.f32.mrf.mxu0
        %v2224 = vadd.f32 %v2037, %v2223
        %2225 = vmatmul.f32.gmra.mxu0 %v2110
        %v2226 = vpop.f32.mrf.mxu0
        %v2227 = vadd.f32 %v2037, %v2226
        %2228 = vmatmul.f32.gmra.mxu0 %v2113
        %v2229 = vpop.f32.mrf.mxu0
        %v2230 = vadd.f32 %v2037, %v2229
        %2231 = vmatmul.f32.gmra.mxu0 %v2116
        %v2232 = vpop.f32.mrf.mxu0
        %v2233 = vadd.f32 %v2037, %v2232
        %2234 = vmatmul.f32.gmra.mxu0 %v2119
        %v2235 = vpop.f32.mrf.mxu0
        %v2236 = vadd.f32 %v2037, %v2235
        %2237 = vmatmul.f32.gmra.mxu0 %v2122
        %v2238 = vpop.f32.mrf.mxu0
        %v2239 = vadd.f32 %v2037, %v2238
        %2240 = vmatmul.f32.gmra.mxu0 %v2125
        %v2241 = vpop.f32.mrf.mxu0
        %v2242 = vadd.f32 %v2037, %v2241
        %2243 = vmatmul.f32.gmra.mxu0 %v2128
        %v2244 = vpop.f32.mrf.mxu0
        %v2245 = vadd.f32 %v2037, %v2244
        %2246 = vmatmul.f32.gmra.mxu0 %v2131
        %v2247 = vpop.f32.mrf.mxu0
        %v2248 = vadd.f32 %v2037, %v2247
        %2249 = vmatmul.f32.gmra.mxu0 %v2134
        %v2250 = vpop.f32.mrf.mxu0
        %v2251 = vadd.f32 %v2037, %v2250
        %2252 = vdwg.mxu0
        %v2253 = vmax.f32 %v2158, 0.0
        %v2254 = vmax.f32 %v2161, 0.0
        %v2255 = vmax.f32 %v2164, 0.0
        %v2256 = vmax.f32 %v2167, 0.0
        %v2257 = vmax.f32 %v2170, 0.0
        %v2258 = vmax.f32 %v2173, 0.0
        %v2259 = vmax.f32 %v2176, 0.0
        %v2260 = vmax.f32 %v2179, 0.0
        %v2261 = vmax.f32 %v2182, 0.0
        %v2262 = vmax.f32 %v2185, 0.0
        %v2263 = vmax.f32 %v2188, 0.0
        %v2264 = vmax.f32 %v2191, 0.0
        %v2265 = vmax.f32 %v2194, 0.0
        %v2266 = vmax.f32 %v2197, 0.0
        %v2267 = vmax.f32 %v2200, 0.0
        %v2268 = vmax.f32 %v2203, 0.0
        %v2269 = vmax.f32 %v2206, 0.0
        %v2270 = vmax.f32 %v2209, 0.0
        %v2271 = vmax.f32 %v2212, 0.0
        %v2272 = vmax.f32 %v2215, 0.0
        %v2273 = vmax.f32 %v2218, 0.0
        %v2274 = vmax.f32 %v2221, 0.0
        %v2275 = vmax.f32 %v2224, 0.0
        %v2276 = vmax.f32 %v2227, 0.0
        %v2277 = vmax.f32 %v2230, 0.0
        %v2278 = vmax.f32 %v2233, 0.0
        %v2279 = vmax.f32 %v2236, 0.0
        %v2280 = vmax.f32 %v2239, 0.0
        %v2281 = vmax.f32 %v2242, 0.0
        %v2282 = vmax.f32 %v2245, 0.0
        %v2283 = vmax.f32 %v2248, 0.0
        %v2284 = vmax.f32 %v2251, 0.0
        %vm2285 = vcmask 26624
        %2286 = vst.msk [vmem:[#allocation4 + $0x10] sm:$0x7] %vm2285, 0.0
        %2287 = vst.msk [vmem:[#allocation4 + $0x28] sm:$0x7] %vm2285, 0.0
        %2288 = vst.msk [vmem:[#allocation4 + $0x40] sm:$0x7] %vm2285, 0.0
        %2289 = vst.msk [vmem:[#allocation4 + $0x58] sm:$0x7] %vm2285, 0.0
        %2290 = vst.msk [vmem:[#allocation4 + $0x70] sm:$0x7] %vm2285, 0.0
        %2291 = vst.msk [vmem:[#allocation4 + $0x88] sm:$0x7] %vm2285, 0.0
        %2292 = vst.msk [vmem:[#allocation4 + $0xa0] sm:$0x7] %vm2285, 0.0
        %2293 = vst.msk [vmem:[#allocation4 + $0xb8] sm:$0x7] %vm2285, 0.0
        %2294 = vst.msk [vmem:[#allocation4 + $0xd0] sm:$0x7] %vm2285, 0.0
        %2295 = vst.msk [vmem:[#allocation4 + $0xe8] sm:$0x7] %vm2285, 0.0
        %2296 = vst.msk [vmem:[#allocation4 + $0x100] sm:$0x7] %vm2285, 0.0
        %2297 = vst.msk [vmem:[#allocation4 + $0x118] sm:$0x7] %vm2285, 0.0
        %2298 = vst.msk [vmem:[#allocation4 + $0x130] sm:$0x7] %vm2285, 0.0
        %2299 = vst.msk [vmem:[#allocation4 + $0x148] sm:$0x7] %vm2285, 0.0
        %2300 = vst.msk [vmem:[#allocation4 + $0x160] sm:$0x7] %vm2285, 0.0
        %2301 = vst.msk [vmem:[#allocation4 + $0x178] sm:$0x7] %vm2285, 0.0
        %2302 = vst.msk [vmem:[#allocation4] sm:$0xff] %vm278, %v2253
        %2303 = vst.msk [vmem:[#allocation4 + $0x8] sm:$0xff] %vm278, %v2254
        %2304 = vst.msk [vmem:[#allocation4 + $0x18] sm:$0xff] %vm278, %v2255
        %2305 = vst.msk [vmem:[#allocation4 + $0x20] sm:$0xff] %vm278, %v2256
        %2306 = vst.msk [vmem:[#allocation4 + $0x30] sm:$0xff] %vm278, %v2257
        %2307 = vst.msk [vmem:[#allocation4 + $0x38] sm:$0xff] %vm278, %v2258
        %2308 = vst.msk [vmem:[#allocation4 + $0x48] sm:$0xff] %vm278, %v2259
        %2309 = vst.msk [vmem:[#allocation4 + $0x50] sm:$0xff] %vm278, %v2260
        %2310 = vst.msk [vmem:[#allocation4 + $0x60] sm:$0xff] %vm278, %v2261
        %2311 = vst.msk [vmem:[#allocation4 + $0x68] sm:$0xff] %vm278, %v2262
        %2312 = vst.msk [vmem:[#allocation4 + $0x78] sm:$0xff] %vm278, %v2263
        %2313 = vst.msk [vmem:[#allocation4 + $0x80] sm:$0xff] %vm278, %v2264
        %2314 = vst.msk [vmem:[#allocation4 + $0x90] sm:$0xff] %vm278, %v2265
        %2315 = vst.msk [vmem:[#allocation4 + $0x98] sm:$0xff] %vm278, %v2266
        %2316 = vst.msk [vmem:[#allocation4 + $0xa8] sm:$0xff] %vm278, %v2267
        %2317 = vst.msk [vmem:[#allocation4 + $0xb0] sm:$0xff] %vm278, %v2268
        %2318 = vst.msk [vmem:[#allocation4 + $0xc0] sm:$0xff] %vm278, %v2269
        %2319 = vst.msk [vmem:[#allocation4 + $0xc8] sm:$0xff] %vm278, %v2270
        %2320 = vst.msk [vmem:[#allocation4 + $0xd8] sm:$0xff] %vm278, %v2271
        %2321 = vst.msk [vmem:[#allocation4 + $0xe0] sm:$0xff] %vm278, %v2272
        %2322 = vst.msk [vmem:[#allocation4 + $0xf0] sm:$0xff] %vm278, %v2273
        %2323 = vst.msk [vmem:[#allocation4 + $0xf8] sm:$0xff] %vm278, %v2274
        %2324 = vst.msk [vmem:[#allocation4 + $0x108] sm:$0xff] %vm278, %v2275
        %2325 = vst.msk [vmem:[#allocation4 + $0x110] sm:$0xff] %vm278, %v2276
        %2326 = vst.msk [vmem:[#allocation4 + $0x120] sm:$0xff] %vm278, %v2277
        %2327 = vst.msk [vmem:[#allocation4 + $0x128] sm:$0xff] %vm278, %v2278
        %2328 = vst.msk [vmem:[#allocation4 + $0x138] sm:$0xff] %vm278, %v2279
        %2329 = vst.msk [vmem:[#allocation4 + $0x140] sm:$0xff] %vm278, %v2280
        %2330 = vst.msk [vmem:[#allocation4 + $0x150] sm:$0xff] %vm278, %v2281
        %2331 = vst.msk [vmem:[#allocation4 + $0x158] sm:$0xff] %vm278, %v2282
        %2332 = vst.msk [vmem:[#allocation4 + $0x168] sm:$0xff] %vm278, %v2283
        %2333 = vst.msk [vmem:[#allocation4 + $0x170] sm:$0xff] %vm278, %v2284
        %v2334 = vld [vmem:[#allocation4] sm:$0xff]
        %v2335 = vld [vmem:[#allocation4 + $0x8] sm:$0xff]
        %v2336 = vld [vmem:[#allocation4 + $0x18] sm:$0xff]
        %v2337 = vld [vmem:[#allocation4 + $0x20] sm:$0xff]
        %v2338 = vld [vmem:[#allocation4 + $0x30] sm:$0xff]
        %v2339 = vld [vmem:[#allocation4 + $0x38] sm:$0xff]
        %v2340 = vld [vmem:[#allocation4 + $0x48] sm:$0xff]
        %v2341 = vld [vmem:[#allocation4 + $0x50] sm:$0xff]
        %v2342 = vld [vmem:[#allocation4 + $0x60] sm:$0xff]
        %v2343 = vld [vmem:[#allocation4 + $0x68] sm:$0xff]
        %v2344 = vld [vmem:[#allocation4 + $0x78] sm:$0xff]
        %v2345 = vld [vmem:[#allocation4 + $0x80] sm:$0xff]
        %v2346 = vld [vmem:[#allocation4 + $0x90] sm:$0xff]
        %v2347 = vld [vmem:[#allocation4 + $0x98] sm:$0xff]
        %v2348 = vld [vmem:[#allocation4 + $0xa8] sm:$0xff]
        %v2349 = vld [vmem:[#allocation4 + $0xb0] sm:$0xff]
        %v2350 = vld [vmem:[#allocation4 + $0xc0] sm:$0xff]
        %v2351 = vld [vmem:[#allocation4 + $0xc8] sm:$0xff]
        %v2352 = vld [vmem:[#allocation4 + $0xd8] sm:$0xff]
        %v2353 = vld [vmem:[#allocation4 + $0xe0] sm:$0xff]
        %v2354 = vld [vmem:[#allocation4 + $0xf0] sm:$0xff]
        %v2355 = vld [vmem:[#allocation4 + $0xf8] sm:$0xff]
        %v2356 = vld [vmem:[#allocation4 + $0x108] sm:$0xff]
        %v2357 = vld [vmem:[#allocation4 + $0x110] sm:$0xff]
        %v2358 = vld [vmem:[#allocation4 + $0x120] sm:$0xff]
        %v2359 = vld [vmem:[#allocation4 + $0x128] sm:$0xff]
        %2360 = vst.msk [vmem:[#allocation5] sm:$0xff] %vm278, %v2334
        %2361 = vst.msk [vmem:[#allocation5 + $0x8] sm:$0xff] %vm278, %v2335
        %2362 = vst.msk [vmem:[#allocation5 + $0x10] sm:$0xff] %vm278, %v2336
        %2363 = vst.msk [vmem:[#allocation5 + $0x18] sm:$0xff] %vm278, %v2337
        %2364 = vst.msk [vmem:[#allocation5 + $0x20] sm:$0xff] %vm278, %v2338
        %2365 = vst.msk [vmem:[#allocation5 + $0x28] sm:$0xff] %vm278, %v2339
        %2366 = vst.msk [vmem:[#allocation5 + $0x30] sm:$0xff] %vm278, %v2340
        %2367 = vst.msk [vmem:[#allocation5 + $0x38] sm:$0xff] %vm278, %v2341
        %2368 = vst.msk [vmem:[#allocation5 + $0x40] sm:$0xff] %vm278, %v2342
        %2369 = vst.msk [vmem:[#allocation5 + $0x48] sm:$0xff] %vm278, %v2343
        %2370 = vst.msk [vmem:[#allocation5 + $0x50] sm:$0xff] %vm278, %v2344
        %2371 = vst.msk [vmem:[#allocation5 + $0x58] sm:$0xff] %vm278, %v2345
        %2372 = vst.msk [vmem:[#allocation5 + $0x60] sm:$0xff] %vm278, %v2346
        %2373 = vst.msk [vmem:[#allocation5 + $0x68] sm:$0xff] %vm278, %v2347
        %2374 = vst.msk [vmem:[#allocation5 + $0x70] sm:$0xff] %vm278, %v2348
        %2375 = vst.msk [vmem:[#allocation5 + $0x78] sm:$0xff] %vm278, %v2349
        %2376 = vst.msk [vmem:[#allocation5 + $0x80] sm:$0xff] %vm278, %v2350
        %2377 = vst.msk [vmem:[#allocation5 + $0x88] sm:$0xff] %vm278, %v2351
        %2378 = vst.msk [vmem:[#allocation5 + $0x90] sm:$0xff] %vm278, %v2352
        %2379 = vst.msk [vmem:[#allocation5 + $0x98] sm:$0xff] %vm278, %v2353
        %2380 = vst.msk [vmem:[#allocation5 + $0xa0] sm:$0xff] %vm278, %v2354
        %2381 = vst.msk [vmem:[#allocation5 + $0xa8] sm:$0xff] %vm278, %v2355
        %2382 = vst.msk [vmem:[#allocation5 + $0xb0] sm:$0xff] %vm278, %v2356
        %2383 = vst.msk [vmem:[#allocation5 + $0xb8] sm:$0xff] %vm278, %v2357
        %2384 = vst.msk [vmem:[#allocation5 + $0xc0] sm:$0xff] %vm278, %v2358
        %2385 = vst.msk [vmem:[#allocation5 + $0xc8] sm:$0xff] %vm278, %v2359
        %v2386 = vld [vmem:[#allocation4 + $0x1] sm:$0xff]
        %v2387 = vld [vmem:[#allocation4 + $0x9] sm:$0xff]
        %v2388 = vld [vmem:[#allocation4 + $0x19] sm:$0xff]
        %v2389 = vld [vmem:[#allocation4 + $0x21] sm:$0xff]
        %v2390 = vld [vmem:[#allocation4 + $0x31] sm:$0xff]
        %v2391 = vld [vmem:[#allocation4 + $0x39] sm:$0xff]
        %v2392 = vld [vmem:[#allocation4 + $0x49] sm:$0xff]
        %v2393 = vld [vmem:[#allocation4 + $0x51] sm:$0xff]
        %v2394 = vld [vmem:[#allocation4 + $0x61] sm:$0xff]
        %v2395 = vld [vmem:[#allocation4 + $0x69] sm:$0xff]
        %v2396 = vld [vmem:[#allocation4 + $0x79] sm:$0xff]
        %v2397 = vld [vmem:[#allocation4 + $0x81] sm:$0xff]
        %v2398 = vld [vmem:[#allocation4 + $0x91] sm:$0xff]
        %v2399 = vld [vmem:[#allocation4 + $0x99] sm:$0xff]
        %v2400 = vld [vmem:[#allocation4 + $0xa9] sm:$0xff]
        %v2401 = vld [vmem:[#allocation4 + $0xb1] sm:$0xff]
        %v2402 = vld [vmem:[#allocation4 + $0xc1] sm:$0xff]
        %v2403 = vld [vmem:[#allocation4 + $0xc9] sm:$0xff]
        %v2404 = vld [vmem:[#allocation4 + $0xd9] sm:$0xff]
        %v2405 = vld [vmem:[#allocation4 + $0xe1] sm:$0xff]
        %v2406 = vld [vmem:[#allocation4 + $0xf1] sm:$0xff]
        %v2407 = vld [vmem:[#allocation4 + $0xf9] sm:$0xff]
        %v2408 = vld [vmem:[#allocation4 + $0x109] sm:$0xff]
        %v2409 = vld [vmem:[#allocation4 + $0x111] sm:$0xff]
        %v2410 = vld [vmem:[#allocation4 + $0x121] sm:$0xff]
        %v2411 = vld [vmem:[#allocation4 + $0x129] sm:$0xff]
        %2438 = vrot.lane.b32.xlu0 %v2386, 4
        %v2439 = vpop.permute.xlu0 %2438
        %2440 = vrot.lane.b32.xlu0 %v2387, 4
        %v2441 = vpop.permute.xlu0 %2440
        %2442 = vrot.lane.b32.xlu0 %v2388, 4
        %v2443 = vpop.permute.xlu0 %2442
        %2444 = vrot.lane.b32.xlu0 %v2389, 4
        %v2445 = vpop.permute.xlu0 %2444
        %2446 = vrot.lane.b32.xlu0 %v2390, 4
        %v2447 = vpop.permute.xlu0 %2446
        %2448 = vrot.lane.b32.xlu0 %v2391, 4
        %v2449 = vpop.permute.xlu0 %2448
        %2450 = vrot.lane.b32.xlu0 %v2392, 4
        %v2451 = vpop.permute.xlu0 %2450
        %2452 = vrot.lane.b32.xlu0 %v2393, 4
        %v2453 = vpop.permute.xlu0 %2452
        %2454 = vrot.lane.b32.xlu0 %v2394, 4
        %v2455 = vpop.permute.xlu0 %2454
        %2456 = vrot.lane.b32.xlu0 %v2395, 4
        %v2457 = vpop.permute.xlu0 %2456
        %2458 = vrot.lane.b32.xlu0 %v2396, 4
        %v2459 = vpop.permute.xlu0 %2458
        %2460 = vrot.lane.b32.xlu0 %v2397, 4
        %v2461 = vpop.permute.xlu0 %2460
        %2462 = vrot.lane.b32.xlu0 %v2398, 4
        %v2463 = vpop.permute.xlu0 %2462
        %2464 = vrot.lane.b32.xlu0 %v2399, 4
        %v2465 = vpop.permute.xlu0 %2464
        %2466 = vrot.lane.b32.xlu0 %v2400, 4
        %v2467 = vpop.permute.xlu0 %2466
        %2468 = vrot.lane.b32.xlu0 %v2401, 4
        %v2469 = vpop.permute.xlu0 %2468
        %2470 = vrot.lane.b32.xlu0 %v2402, 4
        %v2471 = vpop.permute.xlu0 %2470
        %2472 = vrot.lane.b32.xlu0 %v2403, 4
        %v2473 = vpop.permute.xlu0 %2472
        %2474 = vrot.lane.b32.xlu0 %v2404, 4
        %v2475 = vpop.permute.xlu0 %2474
        %2476 = vrot.lane.b32.xlu0 %v2405, 4
        %v2477 = vpop.permute.xlu0 %2476
        %2478 = vrot.lane.b32.xlu0 %v2406, 4
        %v2479 = vpop.permute.xlu0 %2478
        %2480 = vrot.lane.b32.xlu0 %v2407, 4
        %v2481 = vpop.permute.xlu0 %2480
        %2482 = vrot.lane.b32.xlu0 %v2408, 4
        %v2483 = vpop.permute.xlu0 %2482
        %2484 = vrot.lane.b32.xlu0 %v2409, 4
        %v2485 = vpop.permute.xlu0 %2484
        %2486 = vrot.lane.b32.xlu0 %v2410, 4
        %v2487 = vpop.permute.xlu0 %2486
        %2488 = vrot.lane.b32.xlu0 %v2411, 4
        %v2489 = vpop.permute.xlu0 %2488
        %2516 = vst.msk [vmem:[#allocation5] sm:$0xff] %vm613, %v2439
        %2517 = vst.msk [vmem:[#allocation5 + $0x8] sm:$0xff] %vm613, %v2441
        %2518 = vst.msk [vmem:[#allocation5 + $0x10] sm:$0xff] %vm613, %v2443
        %2519 = vst.msk [vmem:[#allocation5 + $0x18] sm:$0xff] %vm613, %v2445
        %2520 = vst.msk [vmem:[#allocation5 + $0x20] sm:$0xff] %vm613, %v2447
        %2521 = vst.msk [vmem:[#allocation5 + $0x28] sm:$0xff] %vm613, %v2449
        %2522 = vst.msk [vmem:[#allocation5 + $0x30] sm:$0xff] %vm613, %v2451
        %2523 = vst.msk [vmem:[#allocation5 + $0x38] sm:$0xff] %vm613, %v2453
        %2524 = vst.msk [vmem:[#allocation5 + $0x40] sm:$0xff] %vm613, %v2455
        %2525 = vst.msk [vmem:[#allocation5 + $0x48] sm:$0xff] %vm613, %v2457
        %2526 = vst.msk [vmem:[#allocation5 + $0x50] sm:$0xff] %vm613, %v2459
        %2527 = vst.msk [vmem:[#allocation5 + $0x58] sm:$0xff] %vm613, %v2461
        %2528 = vst.msk [vmem:[#allocation5 + $0x60] sm:$0xff] %vm613, %v2463
        %2529 = vst.msk [vmem:[#allocation5 + $0x68] sm:$0xff] %vm613, %v2465
        %2530 = vst.msk [vmem:[#allocation5 + $0x70] sm:$0xff] %vm613, %v2467
        %2531 = vst.msk [vmem:[#allocation5 + $0x78] sm:$0xff] %vm613, %v2469
        %2532 = vst.msk [vmem:[#allocation5 + $0x80] sm:$0xff] %vm613, %v2471
        %2533 = vst.msk [vmem:[#allocation5 + $0x88] sm:$0xff] %vm613, %v2473
        %2534 = vst.msk [vmem:[#allocation5 + $0x90] sm:$0xff] %vm613, %v2475
        %2535 = vst.msk [vmem:[#allocation5 + $0x98] sm:$0xff] %vm613, %v2477
        %2536 = vst.msk [vmem:[#allocation5 + $0xa0] sm:$0xff] %vm613, %v2479
        %2537 = vst.msk [vmem:[#allocation5 + $0xa8] sm:$0xff] %vm613, %v2481
        %2538 = vst.msk [vmem:[#allocation5 + $0xb0] sm:$0xff] %vm613, %v2483
        %2539 = vst.msk [vmem:[#allocation5 + $0xb8] sm:$0xff] %vm613, %v2485
        %2540 = vst.msk [vmem:[#allocation5 + $0xc0] sm:$0xff] %vm613, %v2487
        %2541 = vst.msk [vmem:[#allocation5 + $0xc8] sm:$0xff] %vm613, %v2489
        %v2542 = vld [vmem:[#allocation4 + $0x2] sm:$0xff]
        %v2543 = vld [vmem:[#allocation4 + $0xa] sm:$0xff]
        %v2544 = vld [vmem:[#allocation4 + $0x1a] sm:$0xff]
        %v2545 = vld [vmem:[#allocation4 + $0x22] sm:$0xff]
        %v2546 = vld [vmem:[#allocation4 + $0x32] sm:$0xff]
        %v2547 = vld [vmem:[#allocation4 + $0x3a] sm:$0xff]
        %v2548 = vld [vmem:[#allocation4 + $0x4a] sm:$0xff]
        %v2549 = vld [vmem:[#allocation4 + $0x52] sm:$0xff]
        %v2550 = vld [vmem:[#allocation4 + $0x62] sm:$0xff]
        %v2551 = vld [vmem:[#allocation4 + $0x6a] sm:$0xff]
        %v2552 = vld [vmem:[#allocation4 + $0x7a] sm:$0xff]
        %v2553 = vld [vmem:[#allocation4 + $0x82] sm:$0xff]
        %v2554 = vld [vmem:[#allocation4 + $0x92] sm:$0xff]
        %v2555 = vld [vmem:[#allocation4 + $0x9a] sm:$0xff]
        %v2556 = vld [vmem:[#allocation4 + $0xaa] sm:$0xff]
        %v2557 = vld [vmem:[#allocation4 + $0xb2] sm:$0xff]
        %v2558 = vld [vmem:[#allocation4 + $0xc2] sm:$0xff]
        %v2559 = vld [vmem:[#allocation4 + $0xca] sm:$0xff]
        %v2560 = vld [vmem:[#allocation4 + $0xda] sm:$0xff]
        %v2561 = vld [vmem:[#allocation4 + $0xe2] sm:$0xff]
        %v2562 = vld [vmem:[#allocation4 + $0xf2] sm:$0xff]
        %v2563 = vld [vmem:[#allocation4 + $0xfa] sm:$0xff]
        %v2564 = vld [vmem:[#allocation4 + $0x10a] sm:$0xff]
        %v2565 = vld [vmem:[#allocation4 + $0x112] sm:$0xff]
        %v2566 = vld [vmem:[#allocation4 + $0x122] sm:$0xff]
        %v2567 = vld [vmem:[#allocation4 + $0x12a] sm:$0xff]
        %2594 = vrot.lane.b32.xlu0 %v2542, 8
        %v2595 = vpop.permute.xlu0 %2594
        %2596 = vrot.lane.b32.xlu0 %v2543, 8
        %v2597 = vpop.permute.xlu0 %2596
        %2598 = vrot.lane.b32.xlu0 %v2544, 8
        %v2599 = vpop.permute.xlu0 %2598
        %2600 = vrot.lane.b32.xlu0 %v2545, 8
        %v2601 = vpop.permute.xlu0 %2600
        %2602 = vrot.lane.b32.xlu0 %v2546, 8
        %v2603 = vpop.permute.xlu0 %2602
        %2604 = vrot.lane.b32.xlu0 %v2547, 8
        %v2605 = vpop.permute.xlu0 %2604
        %2606 = vrot.lane.b32.xlu0 %v2548, 8
        %v2607 = vpop.permute.xlu0 %2606
        %2608 = vrot.lane.b32.xlu0 %v2549, 8
        %v2609 = vpop.permute.xlu0 %2608
        %2610 = vrot.lane.b32.xlu0 %v2550, 8
        %v2611 = vpop.permute.xlu0 %2610
        %2612 = vrot.lane.b32.xlu0 %v2551, 8
        %v2613 = vpop.permute.xlu0 %2612
        %2614 = vrot.lane.b32.xlu0 %v2552, 8
        %v2615 = vpop.permute.xlu0 %2614
        %2616 = vrot.lane.b32.xlu0 %v2553, 8
        %v2617 = vpop.permute.xlu0 %2616
        %2618 = vrot.lane.b32.xlu0 %v2554, 8
        %v2619 = vpop.permute.xlu0 %2618
        %2620 = vrot.lane.b32.xlu0 %v2555, 8
        %v2621 = vpop.permute.xlu0 %2620
        %2622 = vrot.lane.b32.xlu0 %v2556, 8
        %v2623 = vpop.permute.xlu0 %2622
        %2624 = vrot.lane.b32.xlu0 %v2557, 8
        %v2625 = vpop.permute.xlu0 %2624
        %2626 = vrot.lane.b32.xlu0 %v2558, 8
        %v2627 = vpop.permute.xlu0 %2626
        %2628 = vrot.lane.b32.xlu0 %v2559, 8
        %v2629 = vpop.permute.xlu0 %2628
        %2630 = vrot.lane.b32.xlu0 %v2560, 8
        %v2631 = vpop.permute.xlu0 %2630
        %2632 = vrot.lane.b32.xlu0 %v2561, 8
        %v2633 = vpop.permute.xlu0 %2632
        %2634 = vrot.lane.b32.xlu0 %v2562, 8
        %v2635 = vpop.permute.xlu0 %2634
        %2636 = vrot.lane.b32.xlu0 %v2563, 8
        %v2637 = vpop.permute.xlu0 %2636
        %2638 = vrot.lane.b32.xlu0 %v2564, 8
        %v2639 = vpop.permute.xlu0 %2638
        %2640 = vrot.lane.b32.xlu0 %v2565, 8
        %v2641 = vpop.permute.xlu0 %2640
        %2642 = vrot.lane.b32.xlu0 %v2566, 8
        %v2643 = vpop.permute.xlu0 %2642
        %2644 = vrot.lane.b32.xlu0 %v2567, 8
        %v2645 = vpop.permute.xlu0 %2644
        %2672 = vst.msk [vmem:[#allocation5] sm:$0xff] %vm806, %v2595
        %2673 = vst.msk [vmem:[#allocation5 + $0x8] sm:$0xff] %vm806, %v2597
        %2674 = vst.msk [vmem:[#allocation5 + $0x10] sm:$0xff] %vm806, %v2599
        %2675 = vst.msk [vmem:[#allocation5 + $0x18] sm:$0xff] %vm806, %v2601
        %2676 = vst.msk [vmem:[#allocation5 + $0x20] sm:$0xff] %vm806, %v2603
        %2677 = vst.msk [vmem:[#allocation5 + $0x28] sm:$0xff] %vm806, %v2605
        %2678 = vst.msk [vmem:[#allocation5 + $0x30] sm:$0xff] %vm806, %v2607
        %2679 = vst.msk [vmem:[#allocation5 + $0x38] sm:$0xff] %vm806, %v2609
        %2680 = vst.msk [vmem:[#allocation5 + $0x40] sm:$0xff] %vm806, %v2611
        %2681 = vst.msk [vmem:[#allocation5 + $0x48] sm:$0xff] %vm806, %v2613
        %2682 = vst.msk [vmem:[#allocation5 + $0x50] sm:$0xff] %vm806, %v2615
        %2683 = vst.msk [vmem:[#allocation5 + $0x58] sm:$0xff] %vm806, %v2617
        %2684 = vst.msk [vmem:[#allocation5 + $0x60] sm:$0xff] %vm806, %v2619
        %2685 = vst.msk [vmem:[#allocation5 + $0x68] sm:$0xff] %vm806, %v2621
        %2686 = vst.msk [vmem:[#allocation5 + $0x70] sm:$0xff] %vm806, %v2623
        %2687 = vst.msk [vmem:[#allocation5 + $0x78] sm:$0xff] %vm806, %v2625
        %2688 = vst.msk [vmem:[#allocation5 + $0x80] sm:$0xff] %vm806, %v2627
        %2689 = vst.msk [vmem:[#allocation5 + $0x88] sm:$0xff] %vm806, %v2629
        %2690 = vst.msk [vmem:[#allocation5 + $0x90] sm:$0xff] %vm806, %v2631
        %2691 = vst.msk [vmem:[#allocation5 + $0x98] sm:$0xff] %vm806, %v2633
        %2692 = vst.msk [vmem:[#allocation5 + $0xa0] sm:$0xff] %vm806, %v2635
        %2693 = vst.msk [vmem:[#allocation5 + $0xa8] sm:$0xff] %vm806, %v2637
        %2694 = vst.msk [vmem:[#allocation5 + $0xb0] sm:$0xff] %vm806, %v2639
        %2695 = vst.msk [vmem:[#allocation5 + $0xb8] sm:$0xff] %vm806, %v2641
        %2696 = vst.msk [vmem:[#allocation5 + $0xc0] sm:$0xff] %vm806, %v2643
        %2697 = vst.msk [vmem:[#allocation5 + $0xc8] sm:$0xff] %vm806, %v2645
        %v2698 = vld [vmem:[#allocation4 + $0x3] sm:$0xff]
        %v2699 = vld [vmem:[#allocation4 + $0xb] sm:$0xff]
        %v2700 = vld [vmem:[#allocation4 + $0x1b] sm:$0xff]
        %v2701 = vld [vmem:[#allocation4 + $0x23] sm:$0xff]
        %v2702 = vld [vmem:[#allocation4 + $0x33] sm:$0xff]
        %v2703 = vld [vmem:[#allocation4 + $0x3b] sm:$0xff]
        %v2704 = vld [vmem:[#allocation4 + $0x4b] sm:$0xff]
        %v2705 = vld [vmem:[#allocation4 + $0x53] sm:$0xff]
        %v2706 = vld [vmem:[#allocation4 + $0x63] sm:$0xff]
        %v2707 = vld [vmem:[#allocation4 + $0x6b] sm:$0xff]
        %v2708 = vld [vmem:[#allocation4 + $0x7b] sm:$0xff]
        %v2709 = vld [vmem:[#allocation4 + $0x83] sm:$0xff]
        %v2710 = vld [vmem:[#allocation4 + $0x93] sm:$0xff]
        %v2711 = vld [vmem:[#allocation4 + $0x9b] sm:$0xff]
        %v2712 = vld [vmem:[#allocation4 + $0xab] sm:$0xff]
        %v2713 = vld [vmem:[#allocation4 + $0xb3] sm:$0xff]
        %v2714 = vld [vmem:[#allocation4 + $0xc3] sm:$0xff]
        %v2715 = vld [vmem:[#allocation4 + $0xcb] sm:$0xff]
        %v2716 = vld [vmem:[#allocation4 + $0xdb] sm:$0xff]
        %v2717 = vld [vmem:[#allocation4 + $0xe3] sm:$0xff]
        %v2718 = vld [vmem:[#allocation4 + $0xf3] sm:$0xff]
        %v2719 = vld [vmem:[#allocation4 + $0xfb] sm:$0xff]
        %v2720 = vld [vmem:[#allocation4 + $0x10b] sm:$0xff]
        %v2721 = vld [vmem:[#allocation4 + $0x113] sm:$0xff]
        %v2722 = vld [vmem:[#allocation4 + $0x123] sm:$0xff]
        %v2723 = vld [vmem:[#allocation4 + $0x12b] sm:$0xff]
        %2750 = vrot.lane.b32.xlu0 %v2698, 12
        %v2751 = vpop.permute.xlu0 %2750
        %2752 = vrot.lane.b32.xlu0 %v2699, 12
        %v2753 = vpop.permute.xlu0 %2752
        %2754 = vrot.lane.b32.xlu0 %v2700, 12
        %v2755 = vpop.permute.xlu0 %2754
        %2756 = vrot.lane.b32.xlu0 %v2701, 12
        %v2757 = vpop.permute.xlu0 %2756
        %2758 = vrot.lane.b32.xlu0 %v2702, 12
        %v2759 = vpop.permute.xlu0 %2758
        %2760 = vrot.lane.b32.xlu0 %v2703, 12
        %v2761 = vpop.permute.xlu0 %2760
        %2762 = vrot.lane.b32.xlu0 %v2704, 12
        %v2763 = vpop.permute.xlu0 %2762
        %2764 = vrot.lane.b32.xlu0 %v2705, 12
        %v2765 = vpop.permute.xlu0 %2764
        %2766 = vrot.lane.b32.xlu0 %v2706, 12
        %v2767 = vpop.permute.xlu0 %2766
        %2768 = vrot.lane.b32.xlu0 %v2707, 12
        %v2769 = vpop.permute.xlu0 %2768
        %2770 = vrot.lane.b32.xlu0 %v2708, 12
        %v2771 = vpop.permute.xlu0 %2770
        %2772 = vrot.lane.b32.xlu0 %v2709, 12
        %v2773 = vpop.permute.xlu0 %2772
        %2774 = vrot.lane.b32.xlu0 %v2710, 12
        %v2775 = vpop.permute.xlu0 %2774
        %2776 = vrot.lane.b32.xlu0 %v2711, 12
        %v2777 = vpop.permute.xlu0 %2776
        %2778 = vrot.lane.b32.xlu0 %v2712, 12
        %v2779 = vpop.permute.xlu0 %2778
        %2780 = vrot.lane.b32.xlu0 %v2713, 12
        %v2781 = vpop.permute.xlu0 %2780
        %2782 = vrot.lane.b32.xlu0 %v2714, 12
        %v2783 = vpop.permute.xlu0 %2782
        %2784 = vrot.lane.b32.xlu0 %v2715, 12
        %v2785 = vpop.permute.xlu0 %2784
        %2786 = vrot.lane.b32.xlu0 %v2716, 12
        %v2787 = vpop.permute.xlu0 %2786
        %2788 = vrot.lane.b32.xlu0 %v2717, 12
        %v2789 = vpop.permute.xlu0 %2788
        %2790 = vrot.lane.b32.xlu0 %v2718, 12
        %v2791 = vpop.permute.xlu0 %2790
        %2792 = vrot.lane.b32.xlu0 %v2719, 12
        %v2793 = vpop.permute.xlu0 %2792
        %2794 = vrot.lane.b32.xlu0 %v2720, 12
        %v2795 = vpop.permute.xlu0 %2794
        %2796 = vrot.lane.b32.xlu0 %v2721, 12
        %v2797 = vpop.permute.xlu0 %2796
        %2798 = vrot.lane.b32.xlu0 %v2722, 12
        %v2799 = vpop.permute.xlu0 %2798
        %2800 = vrot.lane.b32.xlu0 %v2723, 12
        %v2801 = vpop.permute.xlu0 %2800
        %2828 = vst.msk [vmem:[#allocation5] sm:$0xff] %vm999, %v2751
        %2829 = vst.msk [vmem:[#allocation5 + $0x8] sm:$0xff] %vm999, %v2753
        %2830 = vst.msk [vmem:[#allocation5 + $0x10] sm:$0xff] %vm999, %v2755
        %2831 = vst.msk [vmem:[#allocation5 + $0x18] sm:$0xff] %vm999, %v2757
        %2832 = vst.msk [vmem:[#allocation5 + $0x20] sm:$0xff] %vm999, %v2759
        %2833 = vst.msk [vmem:[#allocation5 + $0x28] sm:$0xff] %vm999, %v2761
        %2834 = vst.msk [vmem:[#allocation5 + $0x30] sm:$0xff] %vm999, %v2763
        %2835 = vst.msk [vmem:[#allocation5 + $0x38] sm:$0xff] %vm999, %v2765
        %2836 = vst.msk [vmem:[#allocation5 + $0x40] sm:$0xff] %vm999, %v2767
        %2837 = vst.msk [vmem:[#allocation5 + $0x48] sm:$0xff] %vm999, %v2769
        %2838 = vst.msk [vmem:[#allocation5 + $0x50] sm:$0xff] %vm999, %v2771
        %2839 = vst.msk [vmem:[#allocation5 + $0x58] sm:$0xff] %vm999, %v2773
        %2840 = vst.msk [vmem:[#allocation5 + $0x60] sm:$0xff] %vm999, %v2775
        %2841 = vst.msk [vmem:[#allocation5 + $0x68] sm:$0xff] %vm999, %v2777
        %2842 = vst.msk [vmem:[#allocation5 + $0x70] sm:$0xff] %vm999, %v2779
        %2843 = vst.msk [vmem:[#allocation5 + $0x78] sm:$0xff] %vm999, %v2781
        %2844 = vst.msk [vmem:[#allocation5 + $0x80] sm:$0xff] %vm999, %v2783
        %2845 = vst.msk [vmem:[#allocation5 + $0x88] sm:$0xff] %vm999, %v2785
        %2846 = vst.msk [vmem:[#allocation5 + $0x90] sm:$0xff] %vm999, %v2787
        %2847 = vst.msk [vmem:[#allocation5 + $0x98] sm:$0xff] %vm999, %v2789
        %2848 = vst.msk [vmem:[#allocation5 + $0xa0] sm:$0xff] %vm999, %v2791
        %2849 = vst.msk [vmem:[#allocation5 + $0xa8] sm:$0xff] %vm999, %v2793
        %2850 = vst.msk [vmem:[#allocation5 + $0xb0] sm:$0xff] %vm999, %v2795
        %2851 = vst.msk [vmem:[#allocation5 + $0xb8] sm:$0xff] %vm999, %v2797
        %2852 = vst.msk [vmem:[#allocation5 + $0xc0] sm:$0xff] %vm999, %v2799
        %2853 = vst.msk [vmem:[#allocation5 + $0xc8] sm:$0xff] %vm999, %v2801
        %s2854 = scalar_lea.vmem [#allocation4], 24
        %v2855 = vld [vmem:[%s2854] sm:$0xff]
        %v2856 = vld [vmem:[%s2854 + $0x8] sm:$0xff]
        %v2857 = vld [vmem:[%s2854 + $0x18] sm:$0xff]
        %v2858 = vld [vmem:[%s2854 + $0x20] sm:$0xff]
        %v2859 = vld [vmem:[%s2854 + $0x30] sm:$0xff]
        %v2860 = vld [vmem:[%s2854 + $0x38] sm:$0xff]
        %v2861 = vld [vmem:[%s2854 + $0x48] sm:$0xff]
        %v2862 = vld [vmem:[%s2854 + $0x50] sm:$0xff]
        %v2863 = vld [vmem:[%s2854 + $0x60] sm:$0xff]
        %v2864 = vld [vmem:[%s2854 + $0x68] sm:$0xff]
        %v2865 = vld [vmem:[%s2854 + $0x78] sm:$0xff]
        %v2866 = vld [vmem:[%s2854 + $0x80] sm:$0xff]
        %v2867 = vld [vmem:[%s2854 + $0x90] sm:$0xff]
        %v2868 = vld [vmem:[%s2854 + $0x98] sm:$0xff]
        %v2869 = vld [vmem:[%s2854 + $0xa8] sm:$0xff]
        %v2870 = vld [vmem:[%s2854 + $0xb0] sm:$0xff]
        %v2871 = vld [vmem:[%s2854 + $0xc0] sm:$0xff]
        %v2872 = vld [vmem:[%s2854 + $0xc8] sm:$0xff]
        %v2873 = vld [vmem:[%s2854 + $0xd8] sm:$0xff]
        %v2874 = vld [vmem:[%s2854 + $0xe0] sm:$0xff]
        %v2875 = vld [vmem:[%s2854 + $0xf0] sm:$0xff]
        %v2876 = vld [vmem:[%s2854 + $0xf8] sm:$0xff]
        %v2877 = vld [vmem:[%s2854 + $0x108] sm:$0xff]
        %v2878 = vld [vmem:[%s2854 + $0x110] sm:$0xff]
        %v2879 = vld [vmem:[%s2854 + $0x120] sm:$0xff]
        %v2880 = vld [vmem:[%s2854 + $0x128] sm:$0xff]
        %2907 = vrot.lane.b32.xlu0 %v2855, 16
        %v2908 = vpop.permute.xlu0 %2907
        %2909 = vrot.lane.b32.xlu0 %v2856, 16
        %v2910 = vpop.permute.xlu0 %2909
        %2911 = vrot.lane.b32.xlu0 %v2857, 16
        %v2912 = vpop.permute.xlu0 %2911
        %2913 = vrot.lane.b32.xlu0 %v2858, 16
        %v2914 = vpop.permute.xlu0 %2913
        %2915 = vrot.lane.b32.xlu0 %v2859, 16
        %v2916 = vpop.permute.xlu0 %2915
        %2917 = vrot.lane.b32.xlu0 %v2860, 16
        %v2918 = vpop.permute.xlu0 %2917
        %2919 = vrot.lane.b32.xlu0 %v2861, 16
        %v2920 = vpop.permute.xlu0 %2919
        %2921 = vrot.lane.b32.xlu0 %v2862, 16
        %v2922 = vpop.permute.xlu0 %2921
        %2923 = vrot.lane.b32.xlu0 %v2863, 16
        %v2924 = vpop.permute.xlu0 %2923
        %2925 = vrot.lane.b32.xlu0 %v2864, 16
        %v2926 = vpop.permute.xlu0 %2925
        %2927 = vrot.lane.b32.xlu0 %v2865, 16
        %v2928 = vpop.permute.xlu0 %2927
        %2929 = vrot.lane.b32.xlu0 %v2866, 16
        %v2930 = vpop.permute.xlu0 %2929
        %2931 = vrot.lane.b32.xlu0 %v2867, 16
        %v2932 = vpop.permute.xlu0 %2931
        %2933 = vrot.lane.b32.xlu0 %v2868, 16
        %v2934 = vpop.permute.xlu0 %2933
        %2935 = vrot.lane.b32.xlu0 %v2869, 16
        %v2936 = vpop.permute.xlu0 %2935
        %2937 = vrot.lane.b32.xlu0 %v2870, 16
        %v2938 = vpop.permute.xlu0 %2937
        %2939 = vrot.lane.b32.xlu0 %v2871, 16
        %v2940 = vpop.permute.xlu0 %2939
        %2941 = vrot.lane.b32.xlu0 %v2872, 16
        %v2942 = vpop.permute.xlu0 %2941
        %2943 = vrot.lane.b32.xlu0 %v2873, 16
        %v2944 = vpop.permute.xlu0 %2943
        %2945 = vrot.lane.b32.xlu0 %v2874, 16
        %v2946 = vpop.permute.xlu0 %2945
        %2947 = vrot.lane.b32.xlu0 %v2875, 16
        %v2948 = vpop.permute.xlu0 %2947
        %2949 = vrot.lane.b32.xlu0 %v2876, 16
        %v2950 = vpop.permute.xlu0 %2949
        %2951 = vrot.lane.b32.xlu0 %v2877, 16
        %v2952 = vpop.permute.xlu0 %2951
        %2953 = vrot.lane.b32.xlu0 %v2878, 16
        %v2954 = vpop.permute.xlu0 %2953
        %2955 = vrot.lane.b32.xlu0 %v2879, 16
        %v2956 = vpop.permute.xlu0 %2955
        %2957 = vrot.lane.b32.xlu0 %v2880, 16
        %v2958 = vpop.permute.xlu0 %2957
        %2985 = vst.msk [vmem:[#allocation5] sm:$0xff] %vm1192, %v2908
        %2986 = vst.msk [vmem:[#allocation5 + $0x8] sm:$0xff] %vm1192, %v2910
        %2987 = vst.msk [vmem:[#allocation5 + $0x10] sm:$0xff] %vm1192, %v2912
        %2988 = vst.msk [vmem:[#allocation5 + $0x18] sm:$0xff] %vm1192, %v2914
        %2989 = vst.msk [vmem:[#allocation5 + $0x20] sm:$0xff] %vm1192, %v2916
        %2990 = vst.msk [vmem:[#allocation5 + $0x28] sm:$0xff] %vm1192, %v2918
        %2991 = vst.msk [vmem:[#allocation5 + $0x30] sm:$0xff] %vm1192, %v2920
        %2992 = vst.msk [vmem:[#allocation5 + $0x38] sm:$0xff] %vm1192, %v2922
        %2993 = vst.msk [vmem:[#allocation5 + $0x40] sm:$0xff] %vm1192, %v2924
        %2994 = vst.msk [vmem:[#allocation5 + $0x48] sm:$0xff] %vm1192, %v2926
        %2995 = vst.msk [vmem:[#allocation5 + $0x50] sm:$0xff] %vm1192, %v2928
        %2996 = vst.msk [vmem:[#allocation5 + $0x58] sm:$0xff] %vm1192, %v2930
        %2997 = vst.msk [vmem:[#allocation5 + $0x60] sm:$0xff] %vm1192, %v2932
        %2998 = vst.msk [vmem:[#allocation5 + $0x68] sm:$0xff] %vm1192, %v2934
        %2999 = vst.msk [vmem:[#allocation5 + $0x70] sm:$0xff] %vm1192, %v2936
        %3000 = vst.msk [vmem:[#allocation5 + $0x78] sm:$0xff] %vm1192, %v2938
        %3001 = vst.msk [vmem:[#allocation5 + $0x80] sm:$0xff] %vm1192, %v2940
        %3002 = vst.msk [vmem:[#allocation5 + $0x88] sm:$0xff] %vm1192, %v2942
        %3003 = vst.msk [vmem:[#allocation5 + $0x90] sm:$0xff] %vm1192, %v2944
        %3004 = vst.msk [vmem:[#allocation5 + $0x98] sm:$0xff] %vm1192, %v2946
        %3005 = vst.msk [vmem:[#allocation5 + $0xa0] sm:$0xff] %vm1192, %v2948
        %3006 = vst.msk [vmem:[#allocation5 + $0xa8] sm:$0xff] %vm1192, %v2950
        %3007 = vst.msk [vmem:[#allocation5 + $0xb0] sm:$0xff] %vm1192, %v2952
        %3008 = vst.msk [vmem:[#allocation5 + $0xb8] sm:$0xff] %vm1192, %v2954
        %3009 = vst.msk [vmem:[#allocation5 + $0xc0] sm:$0xff] %vm1192, %v2956
        %3010 = vst.msk [vmem:[#allocation5 + $0xc8] sm:$0xff] %vm1192, %v2958
        %v3011 = vld [vmem:[%s2854 + $0x1] sm:$0xff]
        %v3012 = vld [vmem:[%s2854 + $0x9] sm:$0xff]
        %v3013 = vld [vmem:[%s2854 + $0x19] sm:$0xff]
        %v3014 = vld [vmem:[%s2854 + $0x21] sm:$0xff]
        %v3015 = vld [vmem:[%s2854 + $0x31] sm:$0xff]
        %v3016 = vld [vmem:[%s2854 + $0x39] sm:$0xff]
        %v3017 = vld [vmem:[%s2854 + $0x49] sm:$0xff]
        %v3018 = vld [vmem:[%s2854 + $0x51] sm:$0xff]
        %v3019 = vld [vmem:[%s2854 + $0x61] sm:$0xff]
        %v3020 = vld [vmem:[%s2854 + $0x69] sm:$0xff]
        %v3021 = vld [vmem:[%s2854 + $0x79] sm:$0xff]
        %v3022 = vld [vmem:[%s2854 + $0x81] sm:$0xff]
        %v3023 = vld [vmem:[%s2854 + $0x91] sm:$0xff]
        %v3024 = vld [vmem:[%s2854 + $0x99] sm:$0xff]
        %v3025 = vld [vmem:[%s2854 + $0xa9] sm:$0xff]
        %v3026 = vld [vmem:[%s2854 + $0xb1] sm:$0xff]
        %v3027 = vld [vmem:[%s2854 + $0xc1] sm:$0xff]
        %v3028 = vld [vmem:[%s2854 + $0xc9] sm:$0xff]
        %v3029 = vld [vmem:[%s2854 + $0xd9] sm:$0xff]
        %v3030 = vld [vmem:[%s2854 + $0xe1] sm:$0xff]
        %v3031 = vld [vmem:[%s2854 + $0xf1] sm:$0xff]
        %v3032 = vld [vmem:[%s2854 + $0xf9] sm:$0xff]
        %v3033 = vld [vmem:[%s2854 + $0x109] sm:$0xff]
        %v3034 = vld [vmem:[%s2854 + $0x111] sm:$0xff]
        %v3035 = vld [vmem:[%s2854 + $0x121] sm:$0xff]
        %v3036 = vld [vmem:[%s2854 + $0x129] sm:$0xff]
        %3063 = vrot.lane.b32.xlu0 %v3011, 20
        %v3064 = vpop.permute.xlu0 %3063
        %3065 = vrot.lane.b32.xlu0 %v3012, 20
        %v3066 = vpop.permute.xlu0 %3065
        %3067 = vrot.lane.b32.xlu0 %v3013, 20
        %v3068 = vpop.permute.xlu0 %3067
        %3069 = vrot.lane.b32.xlu0 %v3014, 20
        %v3070 = vpop.permute.xlu0 %3069
        %3071 = vrot.lane.b32.xlu0 %v3015, 20
        %v3072 = vpop.permute.xlu0 %3071
        %3073 = vrot.lane.b32.xlu0 %v3016, 20
        %v3074 = vpop.permute.xlu0 %3073
        %3075 = vrot.lane.b32.xlu0 %v3017, 20
        %v3076 = vpop.permute.xlu0 %3075
        %3077 = vrot.lane.b32.xlu0 %v3018, 20
        %v3078 = vpop.permute.xlu0 %3077
        %3079 = vrot.lane.b32.xlu0 %v3019, 20
        %v3080 = vpop.permute.xlu0 %3079
        %3081 = vrot.lane.b32.xlu0 %v3020, 20
        %v3082 = vpop.permute.xlu0 %3081
        %3083 = vrot.lane.b32.xlu0 %v3021, 20
        %v3084 = vpop.permute.xlu0 %3083
        %3085 = vrot.lane.b32.xlu0 %v3022, 20
        %v3086 = vpop.permute.xlu0 %3085
        %3087 = vrot.lane.b32.xlu0 %v3023, 20
        %v3088 = vpop.permute.xlu0 %3087
        %3089 = vrot.lane.b32.xlu0 %v3024, 20
        %v3090 = vpop.permute.xlu0 %3089
        %3091 = vrot.lane.b32.xlu0 %v3025, 20
        %v3092 = vpop.permute.xlu0 %3091
        %3093 = vrot.lane.b32.xlu0 %v3026, 20
        %v3094 = vpop.permute.xlu0 %3093
        %3095 = vrot.lane.b32.xlu0 %v3027, 20
        %v3096 = vpop.permute.xlu0 %3095
        %3097 = vrot.lane.b32.xlu0 %v3028, 20
        %v3098 = vpop.permute.xlu0 %3097
        %3099 = vrot.lane.b32.xlu0 %v3029, 20
        %v3100 = vpop.permute.xlu0 %3099
        %3101 = vrot.lane.b32.xlu0 %v3030, 20
        %v3102 = vpop.permute.xlu0 %3101
        %3103 = vrot.lane.b32.xlu0 %v3031, 20
        %v3104 = vpop.permute.xlu0 %3103
        %3105 = vrot.lane.b32.xlu0 %v3032, 20
        %v3106 = vpop.permute.xlu0 %3105
        %3107 = vrot.lane.b32.xlu0 %v3033, 20
        %v3108 = vpop.permute.xlu0 %3107
        %3109 = vrot.lane.b32.xlu0 %v3034, 20
        %v3110 = vpop.permute.xlu0 %3109
        %3111 = vrot.lane.b32.xlu0 %v3035, 20
        %v3112 = vpop.permute.xlu0 %3111
        %3113 = vrot.lane.b32.xlu0 %v3036, 20
        %v3114 = vpop.permute.xlu0 %3113
        %3141 = vst.msk [vmem:[#allocation5] sm:$0xff] %vm1385, %v3064
        %3142 = vst.msk [vmem:[#allocation5 + $0x8] sm:$0xff] %vm1385, %v3066
        %3143 = vst.msk [vmem:[#allocation5 + $0x10] sm:$0xff] %vm1385, %v3068
        %3144 = vst.msk [vmem:[#allocation5 + $0x18] sm:$0xff] %vm1385, %v3070
        %3145 = vst.msk [vmem:[#allocation5 + $0x20] sm:$0xff] %vm1385, %v3072
        %3146 = vst.msk [vmem:[#allocation5 + $0x28] sm:$0xff] %vm1385, %v3074
        %3147 = vst.msk [vmem:[#allocation5 + $0x30] sm:$0xff] %vm1385, %v3076
        %3148 = vst.msk [vmem:[#allocation5 + $0x38] sm:$0xff] %vm1385, %v3078
        %3149 = vst.msk [vmem:[#allocation5 + $0x40] sm:$0xff] %vm1385, %v3080
        %3150 = vst.msk [vmem:[#allocation5 + $0x48] sm:$0xff] %vm1385, %v3082
        %3151 = vst.msk [vmem:[#allocation5 + $0x50] sm:$0xff] %vm1385, %v3084
        %3152 = vst.msk [vmem:[#allocation5 + $0x58] sm:$0xff] %vm1385, %v3086
        %3153 = vst.msk [vmem:[#allocation5 + $0x60] sm:$0xff] %vm1385, %v3088
        %3154 = vst.msk [vmem:[#allocation5 + $0x68] sm:$0xff] %vm1385, %v3090
        %3155 = vst.msk [vmem:[#allocation5 + $0x70] sm:$0xff] %vm1385, %v3092
        %3156 = vst.msk [vmem:[#allocation5 + $0x78] sm:$0xff] %vm1385, %v3094
        %3157 = vst.msk [vmem:[#allocation5 + $0x80] sm:$0xff] %vm1385, %v3096
        %3158 = vst.msk [vmem:[#allocation5 + $0x88] sm:$0xff] %vm1385, %v3098
        %3159 = vst.msk [vmem:[#allocation5 + $0x90] sm:$0xff] %vm1385, %v3100
        %3160 = vst.msk [vmem:[#allocation5 + $0x98] sm:$0xff] %vm1385, %v3102
        %3161 = vst.msk [vmem:[#allocation5 + $0xa0] sm:$0xff] %vm1385, %v3104
        %3162 = vst.msk [vmem:[#allocation5 + $0xa8] sm:$0xff] %vm1385, %v3106
        %3163 = vst.msk [vmem:[#allocation5 + $0xb0] sm:$0xff] %vm1385, %v3108
        %3164 = vst.msk [vmem:[#allocation5 + $0xb8] sm:$0xff] %vm1385, %v3110
        %3165 = vst.msk [vmem:[#allocation5 + $0xc0] sm:$0xff] %vm1385, %v3112
        %3166 = vst.msk [vmem:[#allocation5 + $0xc8] sm:$0xff] %vm1385, %v3114
        %v3167 = vld [vmem:[%s2854 + $0x2] sm:$0xff]
        %v3168 = vld [vmem:[%s2854 + $0xa] sm:$0xff]
        %v3169 = vld [vmem:[%s2854 + $0x1a] sm:$0xff]
        %v3170 = vld [vmem:[%s2854 + $0x22] sm:$0xff]
        %v3171 = vld [vmem:[%s2854 + $0x32] sm:$0xff]
        %v3172 = vld [vmem:[%s2854 + $0x3a] sm:$0xff]
        %v3173 = vld [vmem:[%s2854 + $0x4a] sm:$0xff]
        %v3174 = vld [vmem:[%s2854 + $0x52] sm:$0xff]
        %v3175 = vld [vmem:[%s2854 + $0x62] sm:$0xff]
        %v3176 = vld [vmem:[%s2854 + $0x6a] sm:$0xff]
        %v3177 = vld [vmem:[%s2854 + $0x7a] sm:$0xff]
        %v3178 = vld [vmem:[%s2854 + $0x82] sm:$0xff]
        %v3179 = vld [vmem:[%s2854 + $0x92] sm:$0xff]
        %v3180 = vld [vmem:[%s2854 + $0x9a] sm:$0xff]
        %v3181 = vld [vmem:[%s2854 + $0xaa] sm:$0xff]
        %v3182 = vld [vmem:[%s2854 + $0xb2] sm:$0xff]
        %v3183 = vld [vmem:[%s2854 + $0xc2] sm:$0xff]
        %v3184 = vld [vmem:[%s2854 + $0xca] sm:$0xff]
        %v3185 = vld [vmem:[%s2854 + $0xda] sm:$0xff]
        %v3186 = vld [vmem:[%s2854 + $0xe2] sm:$0xff]
        %v3187 = vld [vmem:[%s2854 + $0xf2] sm:$0xff]
        %v3188 = vld [vmem:[%s2854 + $0xfa] sm:$0xff]
        %v3189 = vld [vmem:[%s2854 + $0x10a] sm:$0xff]
        %v3190 = vld [vmem:[%s2854 + $0x112] sm:$0xff]
        %v3191 = vld [vmem:[%s2854 + $0x122] sm:$0xff]
        %v3192 = vld [vmem:[%s2854 + $0x12a] sm:$0xff]
        %3219 = vrot.lane.b32.xlu0 %v3167, 24
        %v3220 = vpop.permute.xlu0 %3219
        %3221 = vrot.lane.b32.xlu0 %v3168, 24
        %v3222 = vpop.permute.xlu0 %3221
        %3223 = vrot.lane.b32.xlu0 %v3169, 24
        %v3224 = vpop.permute.xlu0 %3223
        %3225 = vrot.lane.b32.xlu0 %v3170, 24
        %v3226 = vpop.permute.xlu0 %3225
        %3227 = vrot.lane.b32.xlu0 %v3171, 24
        %v3228 = vpop.permute.xlu0 %3227
        %3229 = vrot.lane.b32.xlu0 %v3172, 24
        %v3230 = vpop.permute.xlu0 %3229
        %3231 = vrot.lane.b32.xlu0 %v3173, 24
        %v3232 = vpop.permute.xlu0 %3231
        %3233 = vrot.lane.b32.xlu0 %v3174, 24
        %v3234 = vpop.permute.xlu0 %3233
        %3235 = vrot.lane.b32.xlu0 %v3175, 24
        %v3236 = vpop.permute.xlu0 %3235
        %3237 = vrot.lane.b32.xlu0 %v3176, 24
        %v3238 = vpop.permute.xlu0 %3237
        %3239 = vrot.lane.b32.xlu0 %v3177, 24
        %v3240 = vpop.permute.xlu0 %3239
        %3241 = vrot.lane.b32.xlu0 %v3178, 24
        %v3242 = vpop.permute.xlu0 %3241
        %3243 = vrot.lane.b32.xlu0 %v3179, 24
        %v3244 = vpop.permute.xlu0 %3243
        %3245 = vrot.lane.b32.xlu0 %v3180, 24
        %v3246 = vpop.permute.xlu0 %3245
        %3247 = vrot.lane.b32.xlu0 %v3181, 24
        %v3248 = vpop.permute.xlu0 %3247
        %3249 = vrot.lane.b32.xlu0 %v3182, 24
        %v3250 = vpop.permute.xlu0 %3249
        %3251 = vrot.lane.b32.xlu0 %v3183, 24
        %v3252 = vpop.permute.xlu0 %3251
        %3253 = vrot.lane.b32.xlu0 %v3184, 24
        %v3254 = vpop.permute.xlu0 %3253
        %3255 = vrot.lane.b32.xlu0 %v3185, 24
        %v3256 = vpop.permute.xlu0 %3255
        %3257 = vrot.lane.b32.xlu0 %v3186, 24
        %v3258 = vpop.permute.xlu0 %3257
        %3259 = vrot.lane.b32.xlu0 %v3187, 24
        %v3260 = vpop.permute.xlu0 %3259
        %3261 = vrot.lane.b32.xlu0 %v3188, 24
        %v3262 = vpop.permute.xlu0 %3261
        %3263 = vrot.lane.b32.xlu0 %v3189, 24
        %v3264 = vpop.permute.xlu0 %3263
        %3265 = vrot.lane.b32.xlu0 %v3190, 24
        %v3266 = vpop.permute.xlu0 %3265
        %3267 = vrot.lane.b32.xlu0 %v3191, 24
        %v3268 = vpop.permute.xlu0 %3267
        %3269 = vrot.lane.b32.xlu0 %v3192, 24
        %v3270 = vpop.permute.xlu0 %3269
        %3297 = vst.msk [vmem:[#allocation5] sm:$0xff] %vm1579, %v3220
        %3298 = vst.msk [vmem:[#allocation5 + $0x8] sm:$0xff] %vm1579, %v3222
        %3299 = vst.msk [vmem:[#allocation5 + $0x10] sm:$0xff] %vm1579, %v3224
        %3300 = vst.msk [vmem:[#allocation5 + $0x18] sm:$0xff] %vm1579, %v3226
        %3301 = vst.msk [vmem:[#allocation5 + $0x20] sm:$0xff] %vm1579, %v3228
        %3302 = vst.msk [vmem:[#allocation5 + $0x28] sm:$0xff] %vm1579, %v3230
        %3303 = vst.msk [vmem:[#allocation5 + $0x30] sm:$0xff] %vm1579, %v3232
        %3304 = vst.msk [vmem:[#allocation5 + $0x38] sm:$0xff] %vm1579, %v3234
        %3305 = vst.msk [vmem:[#allocation5 + $0x40] sm:$0xff] %vm1579, %v3236
        %3306 = vst.msk [vmem:[#allocation5 + $0x48] sm:$0xff] %vm1579, %v3238
        %3307 = vst.msk [vmem:[#allocation5 + $0x50] sm:$0xff] %vm1579, %v3240
        %3308 = vst.msk [vmem:[#allocation5 + $0x58] sm:$0xff] %vm1579, %v3242
        %3309 = vst.msk [vmem:[#allocation5 + $0x60] sm:$0xff] %vm1579, %v3244
        %3310 = vst.msk [vmem:[#allocation5 + $0x68] sm:$0xff] %vm1579, %v3246
        %3311 = vst.msk [vmem:[#allocation5 + $0x70] sm:$0xff] %vm1579, %v3248
        %3312 = vst.msk [vmem:[#allocation5 + $0x78] sm:$0xff] %vm1579, %v3250
        %3313 = vst.msk [vmem:[#allocation5 + $0x80] sm:$0xff] %vm1579, %v3252
        %3314 = vst.msk [vmem:[#allocation5 + $0x88] sm:$0xff] %vm1579, %v3254
        %3315 = vst.msk [vmem:[#allocation5 + $0x90] sm:$0xff] %vm1579, %v3256
        %3316 = vst.msk [vmem:[#allocation5 + $0x98] sm:$0xff] %vm1579, %v3258
        %3317 = vst.msk [vmem:[#allocation5 + $0xa0] sm:$0xff] %vm1579, %v3260
        %3318 = vst.msk [vmem:[#allocation5 + $0xa8] sm:$0xff] %vm1579, %v3262
        %3319 = vst.msk [vmem:[#allocation5 + $0xb0] sm:$0xff] %vm1579, %v3264
        %3320 = vst.msk [vmem:[#allocation5 + $0xb8] sm:$0xff] %vm1579, %v3266
        %3321 = vst.msk [vmem:[#allocation5 + $0xc0] sm:$0xff] %vm1579, %v3268
        %3322 = vst.msk [vmem:[#allocation5 + $0xc8] sm:$0xff] %vm1579, %v3270
        %v3323 = vld [vmem:[%s2854 + $0x3] sm:$0xff]
        %v3324 = vld [vmem:[%s2854 + $0xb] sm:$0xff]
        %v3325 = vld [vmem:[%s2854 + $0x1b] sm:$0xff]
        %v3326 = vld [vmem:[%s2854 + $0x23] sm:$0xff]
        %v3327 = vld [vmem:[%s2854 + $0x33] sm:$0xff]
        %v3328 = vld [vmem:[%s2854 + $0x3b] sm:$0xff]
        %v3329 = vld [vmem:[%s2854 + $0x4b] sm:$0xff]
        %v3330 = vld [vmem:[%s2854 + $0x53] sm:$0xff]
        %v3331 = vld [vmem:[%s2854 + $0x63] sm:$0xff]
        %v3332 = vld [vmem:[%s2854 + $0x6b] sm:$0xff]
        %v3333 = vld [vmem:[%s2854 + $0x7b] sm:$0xff]
        %v3334 = vld [vmem:[%s2854 + $0x83] sm:$0xff]
        %v3335 = vld [vmem:[%s2854 + $0x93] sm:$0xff]
        %v3336 = vld [vmem:[%s2854 + $0x9b] sm:$0xff]
        %v3337 = vld [vmem:[%s2854 + $0xab] sm:$0xff]
        %v3338 = vld [vmem:[%s2854 + $0xb3] sm:$0xff]
        %v3339 = vld [vmem:[%s2854 + $0xc3] sm:$0xff]
        %v3340 = vld [vmem:[%s2854 + $0xcb] sm:$0xff]
        %v3341 = vld [vmem:[%s2854 + $0xdb] sm:$0xff]
        %v3342 = vld [vmem:[%s2854 + $0xe3] sm:$0xff]
        %v3343 = vld [vmem:[%s2854 + $0xf3] sm:$0xff]
        %v3344 = vld [vmem:[%s2854 + $0xfb] sm:$0xff]
        %v3345 = vld [vmem:[%s2854 + $0x10b] sm:$0xff]
        %v3346 = vld [vmem:[%s2854 + $0x113] sm:$0xff]
        %v3347 = vld [vmem:[%s2854 + $0x123] sm:$0xff]
        %v3348 = vld [vmem:[%s2854 + $0x12b] sm:$0xff]
        %3375 = vrot.lane.b32.xlu0 %v3323, 28
        %v3376 = vpop.permute.xlu0 %3375
        %3377 = vrot.lane.b32.xlu0 %v3324, 28
        %v3378 = vpop.permute.xlu0 %3377
        %3379 = vrot.lane.b32.xlu0 %v3325, 28
        %v3380 = vpop.permute.xlu0 %3379
        %3381 = vrot.lane.b32.xlu0 %v3326, 28
        %v3382 = vpop.permute.xlu0 %3381
        %3383 = vrot.lane.b32.xlu0 %v3327, 28
        %v3384 = vpop.permute.xlu0 %3383
        %3385 = vrot.lane.b32.xlu0 %v3328, 28
        %v3386 = vpop.permute.xlu0 %3385
        %3387 = vrot.lane.b32.xlu0 %v3329, 28
        %v3388 = vpop.permute.xlu0 %3387
        %3389 = vrot.lane.b32.xlu0 %v3330, 28
        %v3390 = vpop.permute.xlu0 %3389
        %3391 = vrot.lane.b32.xlu0 %v3331, 28
        %v3392 = vpop.permute.xlu0 %3391
        %3393 = vrot.lane.b32.xlu0 %v3332, 28
        %v3394 = vpop.permute.xlu0 %3393
        %3395 = vrot.lane.b32.xlu0 %v3333, 28
        %v3396 = vpop.permute.xlu0 %3395
        %3397 = vrot.lane.b32.xlu0 %v3334, 28
        %v3398 = vpop.permute.xlu0 %3397
        %3399 = vrot.lane.b32.xlu0 %v3335, 28
        %v3400 = vpop.permute.xlu0 %3399
        %3401 = vrot.lane.b32.xlu0 %v3336, 28
        %v3402 = vpop.permute.xlu0 %3401
        %3403 = vrot.lane.b32.xlu0 %v3337, 28
        %v3404 = vpop.permute.xlu0 %3403
        %3405 = vrot.lane.b32.xlu0 %v3338, 28
        %v3406 = vpop.permute.xlu0 %3405
        %3407 = vrot.lane.b32.xlu0 %v3339, 28
        %v3408 = vpop.permute.xlu0 %3407
        %3409 = vrot.lane.b32.xlu0 %v3340, 28
        %v3410 = vpop.permute.xlu0 %3409
        %3411 = vrot.lane.b32.xlu0 %v3341, 28
        %v3412 = vpop.permute.xlu0 %3411
        %3413 = vrot.lane.b32.xlu0 %v3342, 28
        %v3414 = vpop.permute.xlu0 %3413
        %3415 = vrot.lane.b32.xlu0 %v3343, 28
        %v3416 = vpop.permute.xlu0 %3415
        %3417 = vrot.lane.b32.xlu0 %v3344, 28
        %v3418 = vpop.permute.xlu0 %3417
        %3419 = vrot.lane.b32.xlu0 %v3345, 28
        %v3420 = vpop.permute.xlu0 %3419
        %3421 = vrot.lane.b32.xlu0 %v3346, 28
        %v3422 = vpop.permute.xlu0 %3421
        %3423 = vrot.lane.b32.xlu0 %v3347, 28
        %v3424 = vpop.permute.xlu0 %3423
        %3425 = vrot.lane.b32.xlu0 %v3348, 28
        %v3426 = vpop.permute.xlu0 %3425
        %3453 = vst.msk [vmem:[#allocation5] sm:$0xff] %vm1772, %v3376
        %3454 = vst.msk [vmem:[#allocation5 + $0x8] sm:$0xff] %vm1772, %v3378
        %3455 = vst.msk [vmem:[#allocation5 + $0x10] sm:$0xff] %vm1772, %v3380
        %3456 = vst.msk [vmem:[#allocation5 + $0x18] sm:$0xff] %vm1772, %v3382
        %3457 = vst.msk [vmem:[#allocation5 + $0x20] sm:$0xff] %vm1772, %v3384
        %3458 = vst.msk [vmem:[#allocation5 + $0x28] sm:$0xff] %vm1772, %v3386
        %3459 = vst.msk [vmem:[#allocation5 + $0x30] sm:$0xff] %vm1772, %v3388
        %3460 = vst.msk [vmem:[#allocation5 + $0x38] sm:$0xff] %vm1772, %v3390
        %3461 = vst.msk [vmem:[#allocation5 + $0x40] sm:$0xff] %vm1772, %v3392
        %3462 = vst.msk [vmem:[#allocation5 + $0x48] sm:$0xff] %vm1772, %v3394
        %3463 = vst.msk [vmem:[#allocation5 + $0x50] sm:$0xff] %vm1772, %v3396
        %3464 = vst.msk [vmem:[#allocation5 + $0x58] sm:$0xff] %vm1772, %v3398
        %3465 = vst.msk [vmem:[#allocation5 + $0x60] sm:$0xff] %vm1772, %v3400
        %3466 = vst.msk [vmem:[#allocation5 + $0x68] sm:$0xff] %vm1772, %v3402
        %3467 = vst.msk [vmem:[#allocation5 + $0x70] sm:$0xff] %vm1772, %v3404
        %3468 = vst.msk [vmem:[#allocation5 + $0x78] sm:$0xff] %vm1772, %v3406
        %3469 = vst.msk [vmem:[#allocation5 + $0x80] sm:$0xff] %vm1772, %v3408
        %3470 = vst.msk [vmem:[#allocation5 + $0x88] sm:$0xff] %vm1772, %v3410
        %3471 = vst.msk [vmem:[#allocation5 + $0x90] sm:$0xff] %vm1772, %v3412
        %3472 = vst.msk [vmem:[#allocation5 + $0x98] sm:$0xff] %vm1772, %v3414
        %3473 = vst.msk [vmem:[#allocation5 + $0xa0] sm:$0xff] %vm1772, %v3416
        %3474 = vst.msk [vmem:[#allocation5 + $0xa8] sm:$0xff] %vm1772, %v3418
        %3475 = vst.msk [vmem:[#allocation5 + $0xb0] sm:$0xff] %vm1772, %v3420
        %3476 = vst.msk [vmem:[#allocation5 + $0xb8] sm:$0xff] %vm1772, %v3422
        %3477 = vst.msk [vmem:[#allocation5 + $0xc0] sm:$0xff] %vm1772, %v3424
        %3478 = vst.msk [vmem:[#allocation5 + $0xc8] sm:$0xff] %vm1772, %v3426
        %s3479 = scalar_lea.vmem [#allocation4], 48
        %v3480 = vld [vmem:[%s3479] sm:$0xff]
        %v3481 = vld [vmem:[%s3479 + $0x8] sm:$0xff]
        %v3482 = vld [vmem:[%s3479 + $0x18] sm:$0xff]
        %v3483 = vld [vmem:[%s3479 + $0x20] sm:$0xff]
        %v3484 = vld [vmem:[%s3479 + $0x30] sm:$0xff]
        %v3485 = vld [vmem:[%s3479 + $0x38] sm:$0xff]
        %v3486 = vld [vmem:[%s3479 + $0x48] sm:$0xff]
        %v3487 = vld [vmem:[%s3479 + $0x50] sm:$0xff]
        %v3488 = vld [vmem:[%s3479 + $0x60] sm:$0xff]
        %v3489 = vld [vmem:[%s3479 + $0x68] sm:$0xff]
        %v3490 = vld [vmem:[%s3479 + $0x78] sm:$0xff]
        %v3491 = vld [vmem:[%s3479 + $0x80] sm:$0xff]
        %v3492 = vld [vmem:[%s3479 + $0x90] sm:$0xff]
        %v3493 = vld [vmem:[%s3479 + $0x98] sm:$0xff]
        %v3494 = vld [vmem:[%s3479 + $0xa8] sm:$0xff]
        %v3495 = vld [vmem:[%s3479 + $0xb0] sm:$0xff]
        %v3496 = vld [vmem:[%s3479 + $0xc0] sm:$0xff]
        %v3497 = vld [vmem:[%s3479 + $0xc8] sm:$0xff]
        %v3498 = vld [vmem:[%s3479 + $0xd8] sm:$0xff]
        %v3499 = vld [vmem:[%s3479 + $0xe0] sm:$0xff]
        %v3500 = vld [vmem:[%s3479 + $0xf0] sm:$0xff]
        %v3501 = vld [vmem:[%s3479 + $0xf8] sm:$0xff]
        %v3502 = vld [vmem:[%s3479 + $0x108] sm:$0xff]
        %v3503 = vld [vmem:[%s3479 + $0x110] sm:$0xff]
        %v3504 = vld [vmem:[%s3479 + $0x120] sm:$0xff]
        %v3505 = vld [vmem:[%s3479 + $0x128] sm:$0xff]
        %3532 = vrot.lane.b32.xlu0 %v3480, 32
        %v3533 = vpop.permute.xlu0 %3532
        %3534 = vrot.lane.b32.xlu0 %v3481, 32
        %v3535 = vpop.permute.xlu0 %3534
        %3536 = vrot.lane.b32.xlu0 %v3482, 32
        %v3537 = vpop.permute.xlu0 %3536
        %3538 = vrot.lane.b32.xlu0 %v3483, 32
        %v3539 = vpop.permute.xlu0 %3538
        %3540 = vrot.lane.b32.xlu0 %v3484, 32
        %v3541 = vpop.permute.xlu0 %3540
        %3542 = vrot.lane.b32.xlu0 %v3485, 32
        %v3543 = vpop.permute.xlu0 %3542
        %3544 = vrot.lane.b32.xlu0 %v3486, 32
        %v3545 = vpop.permute.xlu0 %3544
        %3546 = vrot.lane.b32.xlu0 %v3487, 32
        %v3547 = vpop.permute.xlu0 %3546
        %3548 = vrot.lane.b32.xlu0 %v3488, 32
        %v3549 = vpop.permute.xlu0 %3548
        %3550 = vrot.lane.b32.xlu0 %v3489, 32
        %v3551 = vpop.permute.xlu0 %3550
        %3552 = vrot.lane.b32.xlu0 %v3490, 32
        %v3553 = vpop.permute.xlu0 %3552
        %3554 = vrot.lane.b32.xlu0 %v3491, 32
        %v3555 = vpop.permute.xlu0 %3554
        %3556 = vrot.lane.b32.xlu0 %v3492, 32
        %v3557 = vpop.permute.xlu0 %3556
        %3558 = vrot.lane.b32.xlu0 %v3493, 32
        %v3559 = vpop.permute.xlu0 %3558
        %3560 = vrot.lane.b32.xlu0 %v3494, 32
        %v3561 = vpop.permute.xlu0 %3560
        %3562 = vrot.lane.b32.xlu0 %v3495, 32
        %v3563 = vpop.permute.xlu0 %3562
        %3564 = vrot.lane.b32.xlu0 %v3496, 32
        %v3565 = vpop.permute.xlu0 %3564
        %3566 = vrot.lane.b32.xlu0 %v3497, 32
        %v3567 = vpop.permute.xlu0 %3566
        %3568 = vrot.lane.b32.xlu0 %v3498, 32
        %v3569 = vpop.permute.xlu0 %3568
        %3570 = vrot.lane.b32.xlu0 %v3499, 32
        %v3571 = vpop.permute.xlu0 %3570
        %3572 = vrot.lane.b32.xlu0 %v3500, 32
        %v3573 = vpop.permute.xlu0 %3572
        %3574 = vrot.lane.b32.xlu0 %v3501, 32
        %v3575 = vpop.permute.xlu0 %3574
        %3576 = vrot.lane.b32.xlu0 %v3502, 32
        %v3577 = vpop.permute.xlu0 %3576
        %3578 = vrot.lane.b32.xlu0 %v3503, 32
        %v3579 = vpop.permute.xlu0 %3578
        %3580 = vrot.lane.b32.xlu0 %v3504, 32
        %v3581 = vpop.permute.xlu0 %3580
        %3582 = vrot.lane.b32.xlu0 %v3505, 32
        %v3583 = vpop.permute.xlu0 %3582
        %3610 = vst.msk [vmem:[#allocation5] sm:$0xff] %vm1965, %v3533
        %3611 = vst.msk [vmem:[#allocation5 + $0x8] sm:$0xff] %vm1965, %v3535
        %3612 = vst.msk [vmem:[#allocation5 + $0x10] sm:$0xff] %vm1965, %v3537
        %3613 = vst.msk [vmem:[#allocation5 + $0x18] sm:$0xff] %vm1965, %v3539
        %3614 = vst.msk [vmem:[#allocation5 + $0x20] sm:$0xff] %vm1965, %v3541
        %3615 = vst.msk [vmem:[#allocation5 + $0x28] sm:$0xff] %vm1965, %v3543
        %3616 = vst.msk [vmem:[#allocation5 + $0x30] sm:$0xff] %vm1965, %v3545
        %3617 = vst.msk [vmem:[#allocation5 + $0x38] sm:$0xff] %vm1965, %v3547
        %3618 = vst.msk [vmem:[#allocation5 + $0x40] sm:$0xff] %vm1965, %v3549
        %3619 = vst.msk [vmem:[#allocation5 + $0x48] sm:$0xff] %vm1965, %v3551
        %3620 = vst.msk [vmem:[#allocation5 + $0x50] sm:$0xff] %vm1965, %v3553
        %3621 = vst.msk [vmem:[#allocation5 + $0x58] sm:$0xff] %vm1965, %v3555
        %3622 = vst.msk [vmem:[#allocation5 + $0x60] sm:$0xff] %vm1965, %v3557
        %3623 = vst.msk [vmem:[#allocation5 + $0x68] sm:$0xff] %vm1965, %v3559
        %3624 = vst.msk [vmem:[#allocation5 + $0x70] sm:$0xff] %vm1965, %v3561
        %3625 = vst.msk [vmem:[#allocation5 + $0x78] sm:$0xff] %vm1965, %v3563
        %3626 = vst.msk [vmem:[#allocation5 + $0x80] sm:$0xff] %vm1965, %v3565
        %3627 = vst.msk [vmem:[#allocation5 + $0x88] sm:$0xff] %vm1965, %v3567
        %3628 = vst.msk [vmem:[#allocation5 + $0x90] sm:$0xff] %vm1965, %v3569
        %3629 = vst.msk [vmem:[#allocation5 + $0x98] sm:$0xff] %vm1965, %v3571
        %3630 = vst.msk [vmem:[#allocation5 + $0xa0] sm:$0xff] %vm1965, %v3573
        %3631 = vst.msk [vmem:[#allocation5 + $0xa8] sm:$0xff] %vm1965, %v3575
        %3632 = vst.msk [vmem:[#allocation5 + $0xb0] sm:$0xff] %vm1965, %v3577
        %3633 = vst.msk [vmem:[#allocation5 + $0xb8] sm:$0xff] %vm1965, %v3579
        %3634 = vst.msk [vmem:[#allocation5 + $0xc0] sm:$0xff] %vm1965, %v3581
        %3635 = vst.msk [vmem:[#allocation5 + $0xc8] sm:$0xff] %vm1965, %v3583
        %v3636 = vld [vmem:[%s3479 + $0x1] sm:$0xff]
        %v3637 = vld [vmem:[%s3479 + $0x9] sm:$0xff]
        %v3638 = vld [vmem:[%s3479 + $0x19] sm:$0xff]
        %v3639 = vld [vmem:[%s3479 + $0x21] sm:$0xff]
        %v3640 = vld [vmem:[%s3479 + $0x31] sm:$0xff]
        %v3641 = vld [vmem:[%s3479 + $0x39] sm:$0xff]
        %v3642 = vld [vmem:[%s3479 + $0x49] sm:$0xff]
        %v3643 = vld [vmem:[%s3479 + $0x51] sm:$0xff]
        %v3644 = vld [vmem:[%s3479 + $0x61] sm:$0xff]
        %v3645 = vld [vmem:[%s3479 + $0x69] sm:$0xff]
        %v3646 = vld [vmem:[%s3479 + $0x79] sm:$0xff]
        %v3647 = vld [vmem:[%s3479 + $0x81] sm:$0xff]
        %v3648 = vld [vmem:[%s3479 + $0x91] sm:$0xff]
        %v3649 = vld [vmem:[%s3479 + $0x99] sm:$0xff]
        %v3650 = vld [vmem:[%s3479 + $0xa9] sm:$0xff]
        %v3651 = vld [vmem:[%s3479 + $0xb1] sm:$0xff]
        %v3652 = vld [vmem:[%s3479 + $0xc1] sm:$0xff]
        %v3653 = vld [vmem:[%s3479 + $0xc9] sm:$0xff]
        %v3654 = vld [vmem:[%s3479 + $0xd9] sm:$0xff]
        %v3655 = vld [vmem:[%s3479 + $0xe1] sm:$0xff]
        %v3656 = vld [vmem:[%s3479 + $0xf1] sm:$0xff]
        %v3657 = vld [vmem:[%s3479 + $0xf9] sm:$0xff]
        %v3658 = vld [vmem:[%s3479 + $0x109] sm:$0xff]
        %v3659 = vld [vmem:[%s3479 + $0x111] sm:$0xff]
        %v3660 = vld [vmem:[%s3479 + $0x121] sm:$0xff]
        %v3661 = vld [vmem:[%s3479 + $0x129] sm:$0xff]
        %3688 = vrot.lane.b32.xlu0 %v3636, 36
        %v3689 = vpop.permute.xlu0 %3688
        %3690 = vrot.lane.b32.xlu0 %v3637, 36
        %v3691 = vpop.permute.xlu0 %3690
        %3692 = vrot.lane.b32.xlu0 %v3638, 36
        %v3693 = vpop.permute.xlu0 %3692
        %3694 = vrot.lane.b32.xlu0 %v3639, 36
        %v3695 = vpop.permute.xlu0 %3694
        %3696 = vrot.lane.b32.xlu0 %v3640, 36
        %v3697 = vpop.permute.xlu0 %3696
        %3698 = vrot.lane.b32.xlu0 %v3641, 36
        %v3699 = vpop.permute.xlu0 %3698
        %3700 = vrot.lane.b32.xlu0 %v3642, 36
        %v3701 = vpop.permute.xlu0 %3700
        %3702 = vrot.lane.b32.xlu0 %v3643, 36
        %v3703 = vpop.permute.xlu0 %3702
        %3704 = vrot.lane.b32.xlu0 %v3644, 36
        %v3705 = vpop.permute.xlu0 %3704
        %3706 = vrot.lane.b32.xlu0 %v3645, 36
        %v3707 = vpop.permute.xlu0 %3706
        %3708 = vrot.lane.b32.xlu0 %v3646, 36
        %v3709 = vpop.permute.xlu0 %3708
        %3710 = vrot.lane.b32.xlu0 %v3647, 36
        %v3711 = vpop.permute.xlu0 %3710
        %3712 = vrot.lane.b32.xlu0 %v3648, 36
        %v3713 = vpop.permute.xlu0 %3712
        %3714 = vrot.lane.b32.xlu0 %v3649, 36
        %v3715 = vpop.permute.xlu0 %3714
        %3716 = vrot.lane.b32.xlu0 %v3650, 36
        %v3717 = vpop.permute.xlu0 %3716
        %3718 = vrot.lane.b32.xlu0 %v3651, 36
        %v3719 = vpop.permute.xlu0 %3718
        %3720 = vrot.lane.b32.xlu0 %v3652, 36
        %v3721 = vpop.permute.xlu0 %3720
        %3722 = vrot.lane.b32.xlu0 %v3653, 36
        %v3723 = vpop.permute.xlu0 %3722
        %3724 = vrot.lane.b32.xlu0 %v3654, 36
        %v3725 = vpop.permute.xlu0 %3724
        %3726 = vrot.lane.b32.xlu0 %v3655, 36
        %v3727 = vpop.permute.xlu0 %3726
        %3728 = vrot.lane.b32.xlu0 %v3656, 36
        %v3729 = vpop.permute.xlu0 %3728
        %3730 = vrot.lane.b32.xlu0 %v3657, 36
        %v3731 = vpop.permute.xlu0 %3730
        %3732 = vrot.lane.b32.xlu0 %v3658, 36
        %v3733 = vpop.permute.xlu0 %3732
        %3734 = vrot.lane.b32.xlu0 %v3659, 36
        %v3735 = vpop.permute.xlu0 %3734
        %3736 = vrot.lane.b32.xlu0 %v3660, 36
        %v3737 = vpop.permute.xlu0 %3736
        %3738 = vrot.lane.b32.xlu0 %v3661, 36
        %v3739 = vpop.permute.xlu0 %3738
        %vm3766 = vcmask 326944
        %3767 = vst.msk [vmem:[#allocation5] sm:$0xff] %vm3766, %v3689
        %3768 = vst.msk [vmem:[#allocation5 + $0x8] sm:$0xff] %vm3766, %v3691
        %3769 = vst.msk [vmem:[#allocation5 + $0x10] sm:$0xff] %vm3766, %v3693
        %3770 = vst.msk [vmem:[#allocation5 + $0x18] sm:$0xff] %vm3766, %v3695
        %3771 = vst.msk [vmem:[#allocation5 + $0x20] sm:$0xff] %vm3766, %v3697
        %3772 = vst.msk [vmem:[#allocation5 + $0x28] sm:$0xff] %vm3766, %v3699
        %3773 = vst.msk [vmem:[#allocation5 + $0x30] sm:$0xff] %vm3766, %v3701
        %3774 = vst.msk [vmem:[#allocation5 + $0x38] sm:$0xff] %vm3766, %v3703
        %3775 = vst.msk [vmem:[#allocation5 + $0x40] sm:$0xff] %vm3766, %v3705
        %3776 = vst.msk [vmem:[#allocation5 + $0x48] sm:$0xff] %vm3766, %v3707
        %3777 = vst.msk [vmem:[#allocation5 + $0x50] sm:$0xff] %vm3766, %v3709
        %3778 = vst.msk [vmem:[#allocation5 + $0x58] sm:$0xff] %vm3766, %v3711
        %3779 = vst.msk [vmem:[#allocation5 + $0x60] sm:$0xff] %vm3766, %v3713
        %3780 = vst.msk [vmem:[#allocation5 + $0x68] sm:$0xff] %vm3766, %v3715
        %3781 = vst.msk [vmem:[#allocation5 + $0x70] sm:$0xff] %vm3766, %v3717
        %3782 = vst.msk [vmem:[#allocation5 + $0x78] sm:$0xff] %vm3766, %v3719
        %3783 = vst.msk [vmem:[#allocation5 + $0x80] sm:$0xff] %vm3766, %v3721
        %3784 = vst.msk [vmem:[#allocation5 + $0x88] sm:$0xff] %vm3766, %v3723
        %3785 = vst.msk [vmem:[#allocation5 + $0x90] sm:$0xff] %vm3766, %v3725
        %3786 = vst.msk [vmem:[#allocation5 + $0x98] sm:$0xff] %vm3766, %v3727
        %3787 = vst.msk [vmem:[#allocation5 + $0xa0] sm:$0xff] %vm3766, %v3729
        %3788 = vst.msk [vmem:[#allocation5 + $0xa8] sm:$0xff] %vm3766, %v3731
        %3789 = vst.msk [vmem:[#allocation5 + $0xb0] sm:$0xff] %vm3766, %v3733
        %3790 = vst.msk [vmem:[#allocation5 + $0xb8] sm:$0xff] %vm3766, %v3735
        %3791 = vst.msk [vmem:[#allocation5 + $0xc0] sm:$0xff] %vm3766, %v3737
        %3792 = vst.msk [vmem:[#allocation5 + $0xc8] sm:$0xff] %vm3766, %v3739
        %v3793 = vld [vmem:[%s3479 + $0x2] sm:$0xff]
        %v3794 = vld [vmem:[%s3479 + $0xa] sm:$0xff]
        %v3795 = vld [vmem:[%s3479 + $0x1a] sm:$0xff]
        %v3796 = vld [vmem:[%s3479 + $0x22] sm:$0xff]
        %v3797 = vld [vmem:[%s3479 + $0x32] sm:$0xff]
        %v3798 = vld [vmem:[%s3479 + $0x3a] sm:$0xff]
        %v3799 = vld [vmem:[%s3479 + $0x4a] sm:$0xff]
        %v3800 = vld [vmem:[%s3479 + $0x52] sm:$0xff]
        %v3801 = vld [vmem:[%s3479 + $0x62] sm:$0xff]
        %v3802 = vld [vmem:[%s3479 + $0x6a] sm:$0xff]
        %v3803 = vld [vmem:[%s3479 + $0x7a] sm:$0xff]
        %v3804 = vld [vmem:[%s3479 + $0x82] sm:$0xff]
        %v3805 = vld [vmem:[%s3479 + $0x92] sm:$0xff]
        %v3806 = vld [vmem:[%s3479 + $0x9a] sm:$0xff]
        %v3807 = vld [vmem:[%s3479 + $0xaa] sm:$0xff]
        %v3808 = vld [vmem:[%s3479 + $0xb2] sm:$0xff]
        %v3809 = vld [vmem:[%s3479 + $0xc2] sm:$0xff]
        %v3810 = vld [vmem:[%s3479 + $0xca] sm:$0xff]
        %v3811 = vld [vmem:[%s3479 + $0xda] sm:$0xff]
        %v3812 = vld [vmem:[%s3479 + $0xe2] sm:$0xff]
        %v3813 = vld [vmem:[%s3479 + $0xf2] sm:$0xff]
        %v3814 = vld [vmem:[%s3479 + $0xfa] sm:$0xff]
        %v3815 = vld [vmem:[%s3479 + $0x10a] sm:$0xff]
        %v3816 = vld [vmem:[%s3479 + $0x112] sm:$0xff]
        %v3817 = vld [vmem:[%s3479 + $0x122] sm:$0xff]
        %v3818 = vld [vmem:[%s3479 + $0x12a] sm:$0xff]
        %3845 = vrot.lane.b32.xlu0 %v3793, 40
        %v3846 = vpop.permute.xlu0 %3845
        %3847 = vrot.lane.b32.xlu0 %v3794, 40
        %v3848 = vpop.permute.xlu0 %3847
        %3849 = vrot.lane.b32.xlu0 %v3795, 40
        %v3850 = vpop.permute.xlu0 %3849
        %3851 = vrot.lane.b32.xlu0 %v3796, 40
        %v3852 = vpop.permute.xlu0 %3851
        %3853 = vrot.lane.b32.xlu0 %v3797, 40
        %v3854 = vpop.permute.xlu0 %3853
        %3855 = vrot.lane.b32.xlu0 %v3798, 40
        %v3856 = vpop.permute.xlu0 %3855
        %3857 = vrot.lane.b32.xlu0 %v3799, 40
        %v3858 = vpop.permute.xlu0 %3857
        %3859 = vrot.lane.b32.xlu0 %v3800, 40
        %v3860 = vpop.permute.xlu0 %3859
        %3861 = vrot.lane.b32.xlu0 %v3801, 40
        %v3862 = vpop.permute.xlu0 %3861
        %3863 = vrot.lane.b32.xlu0 %v3802, 40
        %v3864 = vpop.permute.xlu0 %3863
        %3865 = vrot.lane.b32.xlu0 %v3803, 40
        %v3866 = vpop.permute.xlu0 %3865
        %3867 = vrot.lane.b32.xlu0 %v3804, 40
        %v3868 = vpop.permute.xlu0 %3867
        %3869 = vrot.lane.b32.xlu0 %v3805, 40
        %v3870 = vpop.permute.xlu0 %3869
        %3871 = vrot.lane.b32.xlu0 %v3806, 40
        %v3872 = vpop.permute.xlu0 %3871
        %3873 = vrot.lane.b32.xlu0 %v3807, 40
        %v3874 = vpop.permute.xlu0 %3873
        %3875 = vrot.lane.b32.xlu0 %v3808, 40
        %v3876 = vpop.permute.xlu0 %3875
        %3877 = vrot.lane.b32.xlu0 %v3809, 40
        %v3878 = vpop.permute.xlu0 %3877
        %3879 = vrot.lane.b32.xlu0 %v3810, 40
        %v3880 = vpop.permute.xlu0 %3879
        %3881 = vrot.lane.b32.xlu0 %v3811, 40
        %v3882 = vpop.permute.xlu0 %3881
        %3883 = vrot.lane.b32.xlu0 %v3812, 40
        %v3884 = vpop.permute.xlu0 %3883
        %3885 = vrot.lane.b32.xlu0 %v3813, 40
        %v3886 = vpop.permute.xlu0 %3885
        %3887 = vrot.lane.b32.xlu0 %v3814, 40
        %v3888 = vpop.permute.xlu0 %3887
        %3889 = vrot.lane.b32.xlu0 %v3815, 40
        %v3890 = vpop.permute.xlu0 %3889
        %3891 = vrot.lane.b32.xlu0 %v3816, 40
        %v3892 = vpop.permute.xlu0 %3891
        %3893 = vrot.lane.b32.xlu0 %v3817, 40
        %v3894 = vpop.permute.xlu0 %3893
        %3895 = vrot.lane.b32.xlu0 %v3818, 40
        %v3896 = vpop.permute.xlu0 %3895
        %vm3923 = vcmask 359744
        %3924 = vst.msk [vmem:[#allocation5] sm:$0xff] %vm3923, %v3846
        %3925 = vst.msk [vmem:[#allocation5 + $0x8] sm:$0xff] %vm3923, %v3848
        %3926 = vst.msk [vmem:[#allocation5 + $0x10] sm:$0xff] %vm3923, %v3850
        %3927 = vst.msk [vmem:[#allocation5 + $0x18] sm:$0xff] %vm3923, %v3852
        %3928 = vst.msk [vmem:[#allocation5 + $0x20] sm:$0xff] %vm3923, %v3854
        %3929 = vst.msk [vmem:[#allocation5 + $0x28] sm:$0xff] %vm3923, %v3856
        %3930 = vst.msk [vmem:[#allocation5 + $0x30] sm:$0xff] %vm3923, %v3858
        %3931 = vst.msk [vmem:[#allocation5 + $0x38] sm:$0xff] %vm3923, %v3860
        %3932 = vst.msk [vmem:[#allocation5 + $0x40] sm:$0xff] %vm3923, %v3862
        %3933 = vst.msk [vmem:[#allocation5 + $0x48] sm:$0xff] %vm3923, %v3864
        %3934 = vst.msk [vmem:[#allocation5 + $0x50] sm:$0xff] %vm3923, %v3866
        %3935 = vst.msk [vmem:[#allocation5 + $0x58] sm:$0xff] %vm3923, %v3868
        %3936 = vst.msk [vmem:[#allocation5 + $0x60] sm:$0xff] %vm3923, %v3870
        %3937 = vst.msk [vmem:[#allocation5 + $0x68] sm:$0xff] %vm3923, %v3872
        %3938 = vst.msk [vmem:[#allocation5 + $0x70] sm:$0xff] %vm3923, %v3874
        %3939 = vst.msk [vmem:[#allocation5 + $0x78] sm:$0xff] %vm3923, %v3876
        %3940 = vst.msk [vmem:[#allocation5 + $0x80] sm:$0xff] %vm3923, %v3878
        %3941 = vst.msk [vmem:[#allocation5 + $0x88] sm:$0xff] %vm3923, %v3880
        %3942 = vst.msk [vmem:[#allocation5 + $0x90] sm:$0xff] %vm3923, %v3882
        %3943 = vst.msk [vmem:[#allocation5 + $0x98] sm:$0xff] %vm3923, %v3884
        %3944 = vst.msk [vmem:[#allocation5 + $0xa0] sm:$0xff] %vm3923, %v3886
        %3945 = vst.msk [vmem:[#allocation5 + $0xa8] sm:$0xff] %vm3923, %v3888
        %3946 = vst.msk [vmem:[#allocation5 + $0xb0] sm:$0xff] %vm3923, %v3890
        %3947 = vst.msk [vmem:[#allocation5 + $0xb8] sm:$0xff] %vm3923, %v3892
        %3948 = vst.msk [vmem:[#allocation5 + $0xc0] sm:$0xff] %vm3923, %v3894
        %3949 = vst.msk [vmem:[#allocation5 + $0xc8] sm:$0xff] %vm3923, %v3896
        %v3950 = vld [vmem:[%s3479 + $0x3] sm:$0xff]
        %v3951 = vld [vmem:[%s3479 + $0xb] sm:$0xff]
        %v3952 = vld [vmem:[%s3479 + $0x1b] sm:$0xff]
        %v3953 = vld [vmem:[%s3479 + $0x23] sm:$0xff]
        %v3954 = vld [vmem:[%s3479 + $0x33] sm:$0xff]
        %v3955 = vld [vmem:[%s3479 + $0x3b] sm:$0xff]
        %v3956 = vld [vmem:[%s3479 + $0x4b] sm:$0xff]
        %v3957 = vld [vmem:[%s3479 + $0x53] sm:$0xff]
        %v3958 = vld [vmem:[%s3479 + $0x63] sm:$0xff]
        %v3959 = vld [vmem:[%s3479 + $0x6b] sm:$0xff]
        %v3960 = vld [vmem:[%s3479 + $0x7b] sm:$0xff]
        %v3961 = vld [vmem:[%s3479 + $0x83] sm:$0xff]
        %v3962 = vld [vmem:[%s3479 + $0x93] sm:$0xff]
        %v3963 = vld [vmem:[%s3479 + $0x9b] sm:$0xff]
        %v3964 = vld [vmem:[%s3479 + $0xab] sm:$0xff]
        %v3965 = vld [vmem:[%s3479 + $0xb3] sm:$0xff]
        %v3966 = vld [vmem:[%s3479 + $0xc3] sm:$0xff]
        %v3967 = vld [vmem:[%s3479 + $0xcb] sm:$0xff]
        %v3968 = vld [vmem:[%s3479 + $0xdb] sm:$0xff]
        %v3969 = vld [vmem:[%s3479 + $0xe3] sm:$0xff]
        %v3970 = vld [vmem:[%s3479 + $0xf3] sm:$0xff]
        %v3971 = vld [vmem:[%s3479 + $0xfb] sm:$0xff]
        %v3972 = vld [vmem:[%s3479 + $0x10b] sm:$0xff]
        %v3973 = vld [vmem:[%s3479 + $0x113] sm:$0xff]
        %v3974 = vld [vmem:[%s3479 + $0x123] sm:$0xff]
        %v3975 = vld [vmem:[%s3479 + $0x12b] sm:$0xff]
        %4002 = vrot.lane.b32.xlu0 %v3950, 44
        %v4003 = vpop.permute.xlu0 %4002
        %4004 = vrot.lane.b32.xlu0 %v3951, 44
        %v4005 = vpop.permute.xlu0 %4004
        %4006 = vrot.lane.b32.xlu0 %v3952, 44
        %v4007 = vpop.permute.xlu0 %4006
        %4008 = vrot.lane.b32.xlu0 %v3953, 44
        %v4009 = vpop.permute.xlu0 %4008
        %4010 = vrot.lane.b32.xlu0 %v3954, 44
        %v4011 = vpop.permute.xlu0 %4010
        %4012 = vrot.lane.b32.xlu0 %v3955, 44
        %v4013 = vpop.permute.xlu0 %4012
        %4014 = vrot.lane.b32.xlu0 %v3956, 44
        %v4015 = vpop.permute.xlu0 %4014
        %4016 = vrot.lane.b32.xlu0 %v3957, 44
        %v4017 = vpop.permute.xlu0 %4016
        %4018 = vrot.lane.b32.xlu0 %v3958, 44
        %v4019 = vpop.permute.xlu0 %4018
        %4020 = vrot.lane.b32.xlu0 %v3959, 44
        %v4021 = vpop.permute.xlu0 %4020
        %4022 = vrot.lane.b32.xlu0 %v3960, 44
        %v4023 = vpop.permute.xlu0 %4022
        %4024 = vrot.lane.b32.xlu0 %v3961, 44
        %v4025 = vpop.permute.xlu0 %4024
        %4026 = vrot.lane.b32.xlu0 %v3962, 44
        %v4027 = vpop.permute.xlu0 %4026
        %4028 = vrot.lane.b32.xlu0 %v3963, 44
        %v4029 = vpop.permute.xlu0 %4028
        %4030 = vrot.lane.b32.xlu0 %v3964, 44
        %v4031 = vpop.permute.xlu0 %4030
        %4032 = vrot.lane.b32.xlu0 %v3965, 44
        %v4033 = vpop.permute.xlu0 %4032
        %4034 = vrot.lane.b32.xlu0 %v3966, 44
        %v4035 = vpop.permute.xlu0 %4034
        %4036 = vrot.lane.b32.xlu0 %v3967, 44
        %v4037 = vpop.permute.xlu0 %4036
        %4038 = vrot.lane.b32.xlu0 %v3968, 44
        %v4039 = vpop.permute.xlu0 %4038
        %4040 = vrot.lane.b32.xlu0 %v3969, 44
        %v4041 = vpop.permute.xlu0 %4040
        %4042 = vrot.lane.b32.xlu0 %v3970, 44
        %v4043 = vpop.permute.xlu0 %4042
        %4044 = vrot.lane.b32.xlu0 %v3971, 44
        %v4045 = vpop.permute.xlu0 %4044
        %4046 = vrot.lane.b32.xlu0 %v3972, 44
        %v4047 = vpop.permute.xlu0 %4046
        %4048 = vrot.lane.b32.xlu0 %v3973, 44
        %v4049 = vpop.permute.xlu0 %4048
        %4050 = vrot.lane.b32.xlu0 %v3974, 44
        %v4051 = vpop.permute.xlu0 %4050
        %4052 = vrot.lane.b32.xlu0 %v3975, 44
        %v4053 = vpop.permute.xlu0 %4052
        %vm4080 = vcmask 392544
        %4081 = vst.msk [vmem:[#allocation5] sm:$0xff] %vm4080, %v4003
        %4082 = vst.msk [vmem:[#allocation5 + $0x8] sm:$0xff] %vm4080, %v4005
        %4083 = vst.msk [vmem:[#allocation5 + $0x10] sm:$0xff] %vm4080, %v4007
        %4084 = vst.msk [vmem:[#allocation5 + $0x18] sm:$0xff] %vm4080, %v4009
        %4085 = vst.msk [vmem:[#allocation5 + $0x20] sm:$0xff] %vm4080, %v4011
        %4086 = vst.msk [vmem:[#allocation5 + $0x28] sm:$0xff] %vm4080, %v4013
        %4087 = vst.msk [vmem:[#allocation5 + $0x30] sm:$0xff] %vm4080, %v4015
        %4088 = vst.msk [vmem:[#allocation5 + $0x38] sm:$0xff] %vm4080, %v4017
        %4089 = vst.msk [vmem:[#allocation5 + $0x40] sm:$0xff] %vm4080, %v4019
        %4090 = vst.msk [vmem:[#allocation5 + $0x48] sm:$0xff] %vm4080, %v4021
        %4091 = vst.msk [vmem:[#allocation5 + $0x50] sm:$0xff] %vm4080, %v4023
        %4092 = vst.msk [vmem:[#allocation5 + $0x58] sm:$0xff] %vm4080, %v4025
        %4093 = vst.msk [vmem:[#allocation5 + $0x60] sm:$0xff] %vm4080, %v4027
        %4094 = vst.msk [vmem:[#allocation5 + $0x68] sm:$0xff] %vm4080, %v4029
        %4095 = vst.msk [vmem:[#allocation5 + $0x70] sm:$0xff] %vm4080, %v4031
        %4096 = vst.msk [vmem:[#allocation5 + $0x78] sm:$0xff] %vm4080, %v4033
        %4097 = vst.msk [vmem:[#allocation5 + $0x80] sm:$0xff] %vm4080, %v4035
        %4098 = vst.msk [vmem:[#allocation5 + $0x88] sm:$0xff] %vm4080, %v4037
        %4099 = vst.msk [vmem:[#allocation5 + $0x90] sm:$0xff] %vm4080, %v4039
        %4100 = vst.msk [vmem:[#allocation5 + $0x98] sm:$0xff] %vm4080, %v4041
        %4101 = vst.msk [vmem:[#allocation5 + $0xa0] sm:$0xff] %vm4080, %v4043
        %4102 = vst.msk [vmem:[#allocation5 + $0xa8] sm:$0xff] %vm4080, %v4045
        %4103 = vst.msk [vmem:[#allocation5 + $0xb0] sm:$0xff] %vm4080, %v4047
        %4104 = vst.msk [vmem:[#allocation5 + $0xb8] sm:$0xff] %vm4080, %v4049
        %4105 = vst.msk [vmem:[#allocation5 + $0xc0] sm:$0xff] %vm4080, %v4051
        %4106 = vst.msk [vmem:[#allocation5 + $0xc8] sm:$0xff] %vm4080, %v4053
        %s4107 = scalar_lea.vmem [#allocation4], 72
        %v4108 = vld [vmem:[%s4107] sm:$0xff]
        %v4109 = vld [vmem:[%s4107 + $0x8] sm:$0xff]
        %v4110 = vld [vmem:[%s4107 + $0x18] sm:$0xff]
        %v4111 = vld [vmem:[%s4107 + $0x20] sm:$0xff]
        %v4112 = vld [vmem:[%s4107 + $0x30] sm:$0xff]
        %v4113 = vld [vmem:[%s4107 + $0x38] sm:$0xff]
        %v4114 = vld [vmem:[%s4107 + $0x48] sm:$0xff]
        %v4115 = vld [vmem:[%s4107 + $0x50] sm:$0xff]
        %v4116 = vld [vmem:[%s4107 + $0x60] sm:$0xff]
        %v4117 = vld [vmem:[%s4107 + $0x68] sm:$0xff]
        %v4118 = vld [vmem:[%s4107 + $0x78] sm:$0xff]
        %v4119 = vld [vmem:[%s4107 + $0x80] sm:$0xff]
        %v4120 = vld [vmem:[%s4107 + $0x90] sm:$0xff]
        %v4121 = vld [vmem:[%s4107 + $0x98] sm:$0xff]
        %v4122 = vld [vmem:[%s4107 + $0xa8] sm:$0xff]
        %v4123 = vld [vmem:[%s4107 + $0xb0] sm:$0xff]
        %v4124 = vld [vmem:[%s4107 + $0xc0] sm:$0xff]
        %v4125 = vld [vmem:[%s4107 + $0xc8] sm:$0xff]
        %v4126 = vld [vmem:[%s4107 + $0xd8] sm:$0xff]
        %v4127 = vld [vmem:[%s4107 + $0xe0] sm:$0xff]
        %v4128 = vld [vmem:[%s4107 + $0xf0] sm:$0xff]
        %v4129 = vld [vmem:[%s4107 + $0xf8] sm:$0xff]
        %v4130 = vld [vmem:[%s4107 + $0x108] sm:$0xff]
        %v4131 = vld [vmem:[%s4107 + $0x110] sm:$0xff]
        %v4132 = vld [vmem:[%s4107 + $0x120] sm:$0xff]
        %v4133 = vld [vmem:[%s4107 + $0x128] sm:$0xff]
        %4160 = vrot.lane.b32.xlu0 %v4108, 48
        %v4161 = vpop.permute.xlu0 %4160
        %4162 = vrot.lane.b32.xlu0 %v4109, 48
        %v4163 = vpop.permute.xlu0 %4162
        %4164 = vrot.lane.b32.xlu0 %v4110, 48
        %v4165 = vpop.permute.xlu0 %4164
        %4166 = vrot.lane.b32.xlu0 %v4111, 48
        %v4167 = vpop.permute.xlu0 %4166
        %4168 = vrot.lane.b32.xlu0 %v4112, 48
        %v4169 = vpop.permute.xlu0 %4168
        %4170 = vrot.lane.b32.xlu0 %v4113, 48
        %v4171 = vpop.permute.xlu0 %4170
        %4172 = vrot.lane.b32.xlu0 %v4114, 48
        %v4173 = vpop.permute.xlu0 %4172
        %4174 = vrot.lane.b32.xlu0 %v4115, 48
        %v4175 = vpop.permute.xlu0 %4174
        %4176 = vrot.lane.b32.xlu0 %v4116, 48
        %v4177 = vpop.permute.xlu0 %4176
        %4178 = vrot.lane.b32.xlu0 %v4117, 48
        %v4179 = vpop.permute.xlu0 %4178
        %4180 = vrot.lane.b32.xlu0 %v4118, 48
        %v4181 = vpop.permute.xlu0 %4180
        %4182 = vrot.lane.b32.xlu0 %v4119, 48
        %v4183 = vpop.permute.xlu0 %4182
        %4184 = vrot.lane.b32.xlu0 %v4120, 48
        %v4185 = vpop.permute.xlu0 %4184
        %4186 = vrot.lane.b32.xlu0 %v4121, 48
        %v4187 = vpop.permute.xlu0 %4186
        %4188 = vrot.lane.b32.xlu0 %v4122, 48
        %v4189 = vpop.permute.xlu0 %4188
        %4190 = vrot.lane.b32.xlu0 %v4123, 48
        %v4191 = vpop.permute.xlu0 %4190
        %4192 = vrot.lane.b32.xlu0 %v4124, 48
        %v4193 = vpop.permute.xlu0 %4192
        %4194 = vrot.lane.b32.xlu0 %v4125, 48
        %v4195 = vpop.permute.xlu0 %4194
        %4196 = vrot.lane.b32.xlu0 %v4126, 48
        %v4197 = vpop.permute.xlu0 %4196
        %4198 = vrot.lane.b32.xlu0 %v4127, 48
        %v4199 = vpop.permute.xlu0 %4198
        %4200 = vrot.lane.b32.xlu0 %v4128, 48
        %v4201 = vpop.permute.xlu0 %4200
        %4202 = vrot.lane.b32.xlu0 %v4129, 48
        %v4203 = vpop.permute.xlu0 %4202
        %4204 = vrot.lane.b32.xlu0 %v4130, 48
        %v4205 = vpop.permute.xlu0 %4204
        %4206 = vrot.lane.b32.xlu0 %v4131, 48
        %v4207 = vpop.permute.xlu0 %4206
        %4208 = vrot.lane.b32.xlu0 %v4132, 48
        %v4209 = vpop.permute.xlu0 %4208
        %4210 = vrot.lane.b32.xlu0 %v4133, 48
        %v4211 = vpop.permute.xlu0 %4210
        %vm4238 = vcmask 425344
        %4239 = vst.msk [vmem:[#allocation5] sm:$0xff] %vm4238, %v4161
        %4240 = vst.msk [vmem:[#allocation5 + $0x8] sm:$0xff] %vm4238, %v4163
        %4241 = vst.msk [vmem:[#allocation5 + $0x10] sm:$0xff] %vm4238, %v4165
        %4242 = vst.msk [vmem:[#allocation5 + $0x18] sm:$0xff] %vm4238, %v4167
        %4243 = vst.msk [vmem:[#allocation5 + $0x20] sm:$0xff] %vm4238, %v4169
        %4244 = vst.msk [vmem:[#allocation5 + $0x28] sm:$0xff] %vm4238, %v4171
        %4245 = vst.msk [vmem:[#allocation5 + $0x30] sm:$0xff] %vm4238, %v4173
        %4246 = vst.msk [vmem:[#allocation5 + $0x38] sm:$0xff] %vm4238, %v4175
        %4247 = vst.msk [vmem:[#allocation5 + $0x40] sm:$0xff] %vm4238, %v4177
        %4248 = vst.msk [vmem:[#allocation5 + $0x48] sm:$0xff] %vm4238, %v4179
        %4249 = vst.msk [vmem:[#allocation5 + $0x50] sm:$0xff] %vm4238, %v4181
        %4250 = vst.msk [vmem:[#allocation5 + $0x58] sm:$0xff] %vm4238, %v4183
        %4251 = vst.msk [vmem:[#allocation5 + $0x60] sm:$0xff] %vm4238, %v4185
        %4252 = vst.msk [vmem:[#allocation5 + $0x68] sm:$0xff] %vm4238, %v4187
        %4253 = vst.msk [vmem:[#allocation5 + $0x70] sm:$0xff] %vm4238, %v4189
        %4254 = vst.msk [vmem:[#allocation5 + $0x78] sm:$0xff] %vm4238, %v4191
        %4255 = vst.msk [vmem:[#allocation5 + $0x80] sm:$0xff] %vm4238, %v4193
        %4256 = vst.msk [vmem:[#allocation5 + $0x88] sm:$0xff] %vm4238, %v4195
        %4257 = vst.msk [vmem:[#allocation5 + $0x90] sm:$0xff] %vm4238, %v4197
        %4258 = vst.msk [vmem:[#allocation5 + $0x98] sm:$0xff] %vm4238, %v4199
        %4259 = vst.msk [vmem:[#allocation5 + $0xa0] sm:$0xff] %vm4238, %v4201
        %4260 = vst.msk [vmem:[#allocation5 + $0xa8] sm:$0xff] %vm4238, %v4203
        %4261 = vst.msk [vmem:[#allocation5 + $0xb0] sm:$0xff] %vm4238, %v4205
        %4262 = vst.msk [vmem:[#allocation5 + $0xb8] sm:$0xff] %vm4238, %v4207
        %4263 = vst.msk [vmem:[#allocation5 + $0xc0] sm:$0xff] %vm4238, %v4209
        %4264 = vst.msk [vmem:[#allocation5 + $0xc8] sm:$0xff] %vm4238, %v4211
        %v4265 = vld [vmem:[%s4107 + $0x1] sm:$0xff]
        %v4266 = vld [vmem:[%s4107 + $0x9] sm:$0xff]
        %v4267 = vld [vmem:[%s4107 + $0x19] sm:$0xff]
        %v4268 = vld [vmem:[%s4107 + $0x21] sm:$0xff]
        %v4269 = vld [vmem:[%s4107 + $0x31] sm:$0xff]
        %v4270 = vld [vmem:[%s4107 + $0x39] sm:$0xff]
        %v4271 = vld [vmem:[%s4107 + $0x49] sm:$0xff]
        %v4272 = vld [vmem:[%s4107 + $0x51] sm:$0xff]
        %v4273 = vld [vmem:[%s4107 + $0x61] sm:$0xff]
        %v4274 = vld [vmem:[%s4107 + $0x69] sm:$0xff]
        %v4275 = vld [vmem:[%s4107 + $0x79] sm:$0xff]
        %v4276 = vld [vmem:[%s4107 + $0x81] sm:$0xff]
        %v4277 = vld [vmem:[%s4107 + $0x91] sm:$0xff]
        %v4278 = vld [vmem:[%s4107 + $0x99] sm:$0xff]
        %v4279 = vld [vmem:[%s4107 + $0xa9] sm:$0xff]
        %v4280 = vld [vmem:[%s4107 + $0xb1] sm:$0xff]
        %v4281 = vld [vmem:[%s4107 + $0xc1] sm:$0xff]
        %v4282 = vld [vmem:[%s4107 + $0xc9] sm:$0xff]
        %v4283 = vld [vmem:[%s4107 + $0xd9] sm:$0xff]
        %v4284 = vld [vmem:[%s4107 + $0xe1] sm:$0xff]
        %v4285 = vld [vmem:[%s4107 + $0xf1] sm:$0xff]
        %v4286 = vld [vmem:[%s4107 + $0xf9] sm:$0xff]
        %v4287 = vld [vmem:[%s4107 + $0x109] sm:$0xff]
        %v4288 = vld [vmem:[%s4107 + $0x111] sm:$0xff]
        %v4289 = vld [vmem:[%s4107 + $0x121] sm:$0xff]
        %v4290 = vld [vmem:[%s4107 + $0x129] sm:$0xff]
        %4317 = vrot.lane.b32.xlu0 %v4265, 52
        %v4318 = vpop.permute.xlu0 %4317
        %4319 = vrot.lane.b32.xlu0 %v4266, 52
        %v4320 = vpop.permute.xlu0 %4319
        %4321 = vrot.lane.b32.xlu0 %v4267, 52
        %v4322 = vpop.permute.xlu0 %4321
        %4323 = vrot.lane.b32.xlu0 %v4268, 52
        %v4324 = vpop.permute.xlu0 %4323
        %4325 = vrot.lane.b32.xlu0 %v4269, 52
        %v4326 = vpop.permute.xlu0 %4325
        %4327 = vrot.lane.b32.xlu0 %v4270, 52
        %v4328 = vpop.permute.xlu0 %4327
        %4329 = vrot.lane.b32.xlu0 %v4271, 52
        %v4330 = vpop.permute.xlu0 %4329
        %4331 = vrot.lane.b32.xlu0 %v4272, 52
        %v4332 = vpop.permute.xlu0 %4331
        %4333 = vrot.lane.b32.xlu0 %v4273, 52
        %v4334 = vpop.permute.xlu0 %4333
        %4335 = vrot.lane.b32.xlu0 %v4274, 52
        %v4336 = vpop.permute.xlu0 %4335
        %4337 = vrot.lane.b32.xlu0 %v4275, 52
        %v4338 = vpop.permute.xlu0 %4337
        %4339 = vrot.lane.b32.xlu0 %v4276, 52
        %v4340 = vpop.permute.xlu0 %4339
        %4341 = vrot.lane.b32.xlu0 %v4277, 52
        %v4342 = vpop.permute.xlu0 %4341
        %4343 = vrot.lane.b32.xlu0 %v4278, 52
        %v4344 = vpop.permute.xlu0 %4343
        %4345 = vrot.lane.b32.xlu0 %v4279, 52
        %v4346 = vpop.permute.xlu0 %4345
        %4347 = vrot.lane.b32.xlu0 %v4280, 52
        %v4348 = vpop.permute.xlu0 %4347
        %4349 = vrot.lane.b32.xlu0 %v4281, 52
        %v4350 = vpop.permute.xlu0 %4349
        %4351 = vrot.lane.b32.xlu0 %v4282, 52
        %v4352 = vpop.permute.xlu0 %4351
        %4353 = vrot.lane.b32.xlu0 %v4283, 52
        %v4354 = vpop.permute.xlu0 %4353
        %4355 = vrot.lane.b32.xlu0 %v4284, 52
        %v4356 = vpop.permute.xlu0 %4355
        %4357 = vrot.lane.b32.xlu0 %v4285, 52
        %v4358 = vpop.permute.xlu0 %4357
        %4359 = vrot.lane.b32.xlu0 %v4286, 52
        %v4360 = vpop.permute.xlu0 %4359
        %4361 = vrot.lane.b32.xlu0 %v4287, 52
        %v4362 = vpop.permute.xlu0 %4361
        %4363 = vrot.lane.b32.xlu0 %v4288, 52
        %v4364 = vpop.permute.xlu0 %4363
        %4365 = vrot.lane.b32.xlu0 %v4289, 52
        %v4366 = vpop.permute.xlu0 %4365
        %4367 = vrot.lane.b32.xlu0 %v4290, 52
        %v4368 = vpop.permute.xlu0 %4367
        %vm4395 = vcmask 458144
        %4396 = vst.msk [vmem:[#allocation5] sm:$0xff] %vm4395, %v4318
        %4397 = vst.msk [vmem:[#allocation5 + $0x8] sm:$0xff] %vm4395, %v4320
        %4398 = vst.msk [vmem:[#allocation5 + $0x10] sm:$0xff] %vm4395, %v4322
        %4399 = vst.msk [vmem:[#allocation5 + $0x18] sm:$0xff] %vm4395, %v4324
        %4400 = vst.msk [vmem:[#allocation5 + $0x20] sm:$0xff] %vm4395, %v4326
        %4401 = vst.msk [vmem:[#allocation5 + $0x28] sm:$0xff] %vm4395, %v4328
        %4402 = vst.msk [vmem:[#allocation5 + $0x30] sm:$0xff] %vm4395, %v4330
        %4403 = vst.msk [vmem:[#allocation5 + $0x38] sm:$0xff] %vm4395, %v4332
        %4404 = vst.msk [vmem:[#allocation5 + $0x40] sm:$0xff] %vm4395, %v4334
        %4405 = vst.msk [vmem:[#allocation5 + $0x48] sm:$0xff] %vm4395, %v4336
        %4406 = vst.msk [vmem:[#allocation5 + $0x50] sm:$0xff] %vm4395, %v4338
        %4407 = vst.msk [vmem:[#allocation5 + $0x58] sm:$0xff] %vm4395, %v4340
        %4408 = vst.msk [vmem:[#allocation5 + $0x60] sm:$0xff] %vm4395, %v4342
        %4409 = vst.msk [vmem:[#allocation5 + $0x68] sm:$0xff] %vm4395, %v4344
        %4410 = vst.msk [vmem:[#allocation5 + $0x70] sm:$0xff] %vm4395, %v4346
        %4411 = vst.msk [vmem:[#allocation5 + $0x78] sm:$0xff] %vm4395, %v4348
        %4412 = vst.msk [vmem:[#allocation5 + $0x80] sm:$0xff] %vm4395, %v4350
        %4413 = vst.msk [vmem:[#allocation5 + $0x88] sm:$0xff] %vm4395, %v4352
        %4414 = vst.msk [vmem:[#allocation5 + $0x90] sm:$0xff] %vm4395, %v4354
        %4415 = vst.msk [vmem:[#allocation5 + $0x98] sm:$0xff] %vm4395, %v4356
        %4416 = vst.msk [vmem:[#allocation5 + $0xa0] sm:$0xff] %vm4395, %v4358
        %4417 = vst.msk [vmem:[#allocation5 + $0xa8] sm:$0xff] %vm4395, %v4360
        %4418 = vst.msk [vmem:[#allocation5 + $0xb0] sm:$0xff] %vm4395, %v4362
        %4419 = vst.msk [vmem:[#allocation5 + $0xb8] sm:$0xff] %vm4395, %v4364
        %4420 = vst.msk [vmem:[#allocation5 + $0xc0] sm:$0xff] %vm4395, %v4366
        %4421 = vst.msk [vmem:[#allocation5 + $0xc8] sm:$0xff] %vm4395, %v4368
        %v4422 = vld [vmem:[%s4107 + $0x2] sm:$0xff]
        %v4423 = vld [vmem:[%s4107 + $0xa] sm:$0xff]
        %v4424 = vld [vmem:[%s4107 + $0x1a] sm:$0xff]
        %v4425 = vld [vmem:[%s4107 + $0x22] sm:$0xff]
        %v4426 = vld [vmem:[%s4107 + $0x32] sm:$0xff]
        %v4427 = vld [vmem:[%s4107 + $0x3a] sm:$0xff]
        %v4428 = vld [vmem:[%s4107 + $0x4a] sm:$0xff]
        %v4429 = vld [vmem:[%s4107 + $0x52] sm:$0xff]
        %v4430 = vld [vmem:[%s4107 + $0x62] sm:$0xff]
        %v4431 = vld [vmem:[%s4107 + $0x6a] sm:$0xff]
        %v4432 = vld [vmem:[%s4107 + $0x7a] sm:$0xff]
        %v4433 = vld [vmem:[%s4107 + $0x82] sm:$0xff]
        %v4434 = vld [vmem:[%s4107 + $0x92] sm:$0xff]
        %v4435 = vld [vmem:[%s4107 + $0x9a] sm:$0xff]
        %v4436 = vld [vmem:[%s4107 + $0xaa] sm:$0xff]
        %v4437 = vld [vmem:[%s4107 + $0xb2] sm:$0xff]
        %v4438 = vld [vmem:[%s4107 + $0xc2] sm:$0xff]
        %v4439 = vld [vmem:[%s4107 + $0xca] sm:$0xff]
        %v4440 = vld [vmem:[%s4107 + $0xda] sm:$0xff]
        %v4441 = vld [vmem:[%s4107 + $0xe2] sm:$0xff]
        %v4442 = vld [vmem:[%s4107 + $0xf2] sm:$0xff]
        %v4443 = vld [vmem:[%s4107 + $0xfa] sm:$0xff]
        %v4444 = vld [vmem:[%s4107 + $0x10a] sm:$0xff]
        %v4445 = vld [vmem:[%s4107 + $0x112] sm:$0xff]
        %v4446 = vld [vmem:[%s4107 + $0x122] sm:$0xff]
        %v4447 = vld [vmem:[%s4107 + $0x12a] sm:$0xff]
        %4474 = vrot.lane.b32.xlu0 %v4422, 56
        %v4475 = vpop.permute.xlu0 %4474
        %4476 = vrot.lane.b32.xlu0 %v4423, 56
        %v4477 = vpop.permute.xlu0 %4476
        %4478 = vrot.lane.b32.xlu0 %v4424, 56
        %v4479 = vpop.permute.xlu0 %4478
        %4480 = vrot.lane.b32.xlu0 %v4425, 56
        %v4481 = vpop.permute.xlu0 %4480
        %4482 = vrot.lane.b32.xlu0 %v4426, 56
        %v4483 = vpop.permute.xlu0 %4482
        %4484 = vrot.lane.b32.xlu0 %v4427, 56
        %v4485 = vpop.permute.xlu0 %4484
        %4486 = vrot.lane.b32.xlu0 %v4428, 56
        %v4487 = vpop.permute.xlu0 %4486
        %4488 = vrot.lane.b32.xlu0 %v4429, 56
        %v4489 = vpop.permute.xlu0 %4488
        %4490 = vrot.lane.b32.xlu0 %v4430, 56
        %v4491 = vpop.permute.xlu0 %4490
        %4492 = vrot.lane.b32.xlu0 %v4431, 56
        %v4493 = vpop.permute.xlu0 %4492
        %4494 = vrot.lane.b32.xlu0 %v4432, 56
        %v4495 = vpop.permute.xlu0 %4494
        %4496 = vrot.lane.b32.xlu0 %v4433, 56
        %v4497 = vpop.permute.xlu0 %4496
        %4498 = vrot.lane.b32.xlu0 %v4434, 56
        %v4499 = vpop.permute.xlu0 %4498
        %4500 = vrot.lane.b32.xlu0 %v4435, 56
        %v4501 = vpop.permute.xlu0 %4500
        %4502 = vrot.lane.b32.xlu0 %v4436, 56
        %v4503 = vpop.permute.xlu0 %4502
        %4504 = vrot.lane.b32.xlu0 %v4437, 56
        %v4505 = vpop.permute.xlu0 %4504
        %4506 = vrot.lane.b32.xlu0 %v4438, 56
        %v4507 = vpop.permute.xlu0 %4506
        %4508 = vrot.lane.b32.xlu0 %v4439, 56
        %v4509 = vpop.permute.xlu0 %4508
        %4510 = vrot.lane.b32.xlu0 %v4440, 56
        %v4511 = vpop.permute.xlu0 %4510
        %4512 = vrot.lane.b32.xlu0 %v4441, 56
        %v4513 = vpop.permute.xlu0 %4512
        %4514 = vrot.lane.b32.xlu0 %v4442, 56
        %v4515 = vpop.permute.xlu0 %4514
        %4516 = vrot.lane.b32.xlu0 %v4443, 56
        %v4517 = vpop.permute.xlu0 %4516
        %4518 = vrot.lane.b32.xlu0 %v4444, 56
        %v4519 = vpop.permute.xlu0 %4518
        %4520 = vrot.lane.b32.xlu0 %v4445, 56
        %v4521 = vpop.permute.xlu0 %4520
        %4522 = vrot.lane.b32.xlu0 %v4446, 56
        %v4523 = vpop.permute.xlu0 %4522
        %4524 = vrot.lane.b32.xlu0 %v4447, 56
        %v4525 = vpop.permute.xlu0 %4524
        %vm4552 = vcmask 490944
        %4553 = vst.msk [vmem:[#allocation5] sm:$0xff] %vm4552, %v4475
        %4554 = vst.msk [vmem:[#allocation5 + $0x8] sm:$0xff] %vm4552, %v4477
        %4555 = vst.msk [vmem:[#allocation5 + $0x10] sm:$0xff] %vm4552, %v4479
        %4556 = vst.msk [vmem:[#allocation5 + $0x18] sm:$0xff] %vm4552, %v4481
        %4557 = vst.msk [vmem:[#allocation5 + $0x20] sm:$0xff] %vm4552, %v4483
        %4558 = vst.msk [vmem:[#allocation5 + $0x28] sm:$0xff] %vm4552, %v4485
        %4559 = vst.msk [vmem:[#allocation5 + $0x30] sm:$0xff] %vm4552, %v4487
        %4560 = vst.msk [vmem:[#allocation5 + $0x38] sm:$0xff] %vm4552, %v4489
        %4561 = vst.msk [vmem:[#allocation5 + $0x40] sm:$0xff] %vm4552, %v4491
        %4562 = vst.msk [vmem:[#allocation5 + $0x48] sm:$0xff] %vm4552, %v4493
        %4563 = vst.msk [vmem:[#allocation5 + $0x50] sm:$0xff] %vm4552, %v4495
        %4564 = vst.msk [vmem:[#allocation5 + $0x58] sm:$0xff] %vm4552, %v4497
        %4565 = vst.msk [vmem:[#allocation5 + $0x60] sm:$0xff] %vm4552, %v4499
        %4566 = vst.msk [vmem:[#allocation5 + $0x68] sm:$0xff] %vm4552, %v4501
        %4567 = vst.msk [vmem:[#allocation5 + $0x70] sm:$0xff] %vm4552, %v4503
        %4568 = vst.msk [vmem:[#allocation5 + $0x78] sm:$0xff] %vm4552, %v4505
        %4569 = vst.msk [vmem:[#allocation5 + $0x80] sm:$0xff] %vm4552, %v4507
        %4570 = vst.msk [vmem:[#allocation5 + $0x88] sm:$0xff] %vm4552, %v4509
        %4571 = vst.msk [vmem:[#allocation5 + $0x90] sm:$0xff] %vm4552, %v4511
        %4572 = vst.msk [vmem:[#allocation5 + $0x98] sm:$0xff] %vm4552, %v4513
        %4573 = vst.msk [vmem:[#allocation5 + $0xa0] sm:$0xff] %vm4552, %v4515
        %4574 = vst.msk [vmem:[#allocation5 + $0xa8] sm:$0xff] %vm4552, %v4517
        %4575 = vst.msk [vmem:[#allocation5 + $0xb0] sm:$0xff] %vm4552, %v4519
        %4576 = vst.msk [vmem:[#allocation5 + $0xb8] sm:$0xff] %vm4552, %v4521
        %4577 = vst.msk [vmem:[#allocation5 + $0xc0] sm:$0xff] %vm4552, %v4523
        %4578 = vst.msk [vmem:[#allocation5 + $0xc8] sm:$0xff] %vm4552, %v4525
        %v4579 = vld [vmem:[%s4107 + $0x3] sm:$0xff]
        %v4580 = vld [vmem:[%s4107 + $0xb] sm:$0xff]
        %v4581 = vld [vmem:[%s4107 + $0x1b] sm:$0xff]
        %v4582 = vld [vmem:[%s4107 + $0x23] sm:$0xff]
        %v4583 = vld [vmem:[%s4107 + $0x33] sm:$0xff]
        %v4584 = vld [vmem:[%s4107 + $0x3b] sm:$0xff]
        %v4585 = vld [vmem:[%s4107 + $0x4b] sm:$0xff]
        %v4586 = vld [vmem:[%s4107 + $0x53] sm:$0xff]
        %v4587 = vld [vmem:[%s4107 + $0x63] sm:$0xff]
        %v4588 = vld [vmem:[%s4107 + $0x6b] sm:$0xff]
        %v4589 = vld [vmem:[%s4107 + $0x7b] sm:$0xff]
        %v4590 = vld [vmem:[%s4107 + $0x83] sm:$0xff]
        %v4591 = vld [vmem:[%s4107 + $0x93] sm:$0xff]
        %v4592 = vld [vmem:[%s4107 + $0x9b] sm:$0xff]
        %v4593 = vld [vmem:[%s4107 + $0xab] sm:$0xff]
        %v4594 = vld [vmem:[%s4107 + $0xb3] sm:$0xff]
        %v4595 = vld [vmem:[%s4107 + $0xc3] sm:$0xff]
        %v4596 = vld [vmem:[%s4107 + $0xcb] sm:$0xff]
        %v4597 = vld [vmem:[%s4107 + $0xdb] sm:$0xff]
        %v4598 = vld [vmem:[%s4107 + $0xe3] sm:$0xff]
        %v4599 = vld [vmem:[%s4107 + $0xf3] sm:$0xff]
        %v4600 = vld [vmem:[%s4107 + $0xfb] sm:$0xff]
        %v4601 = vld [vmem:[%s4107 + $0x10b] sm:$0xff]
        %v4602 = vld [vmem:[%s4107 + $0x113] sm:$0xff]
        %v4603 = vld [vmem:[%s4107 + $0x123] sm:$0xff]
        %v4604 = vld [vmem:[%s4107 + $0x12b] sm:$0xff]
        %4631 = vrot.lane.b32.xlu0 %v4579, 60
        %v4632 = vpop.permute.xlu0 %4631
        %4633 = vrot.lane.b32.xlu0 %v4580, 60
        %v4634 = vpop.permute.xlu0 %4633
        %4635 = vrot.lane.b32.xlu0 %v4581, 60
        %v4636 = vpop.permute.xlu0 %4635
        %4637 = vrot.lane.b32.xlu0 %v4582, 60
        %v4638 = vpop.permute.xlu0 %4637
        %4639 = vrot.lane.b32.xlu0 %v4583, 60
        %v4640 = vpop.permute.xlu0 %4639
        %4641 = vrot.lane.b32.xlu0 %v4584, 60
        %v4642 = vpop.permute.xlu0 %4641
        %4643 = vrot.lane.b32.xlu0 %v4585, 60
        %v4644 = vpop.permute.xlu0 %4643
        %4645 = vrot.lane.b32.xlu0 %v4586, 60
        %v4646 = vpop.permute.xlu0 %4645
        %4647 = vrot.lane.b32.xlu0 %v4587, 60
        %v4648 = vpop.permute.xlu0 %4647
        %4649 = vrot.lane.b32.xlu0 %v4588, 60
        %v4650 = vpop.permute.xlu0 %4649
        %4651 = vrot.lane.b32.xlu0 %v4589, 60
        %v4652 = vpop.permute.xlu0 %4651
        %4653 = vrot.lane.b32.xlu0 %v4590, 60
        %v4654 = vpop.permute.xlu0 %4653
        %4655 = vrot.lane.b32.xlu0 %v4591, 60
        %v4656 = vpop.permute.xlu0 %4655
        %4657 = vrot.lane.b32.xlu0 %v4592, 60
        %v4658 = vpop.permute.xlu0 %4657
        %4659 = vrot.lane.b32.xlu0 %v4593, 60
        %v4660 = vpop.permute.xlu0 %4659
        %4661 = vrot.lane.b32.xlu0 %v4594, 60
        %v4662 = vpop.permute.xlu0 %4661
        %4663 = vrot.lane.b32.xlu0 %v4595, 60
        %v4664 = vpop.permute.xlu0 %4663
        %4665 = vrot.lane.b32.xlu0 %v4596, 60
        %v4666 = vpop.permute.xlu0 %4665
        %4667 = vrot.lane.b32.xlu0 %v4597, 60
        %v4668 = vpop.permute.xlu0 %4667
        %4669 = vrot.lane.b32.xlu0 %v4598, 60
        %v4670 = vpop.permute.xlu0 %4669
        %4671 = vrot.lane.b32.xlu0 %v4599, 60
        %v4672 = vpop.permute.xlu0 %4671
        %4673 = vrot.lane.b32.xlu0 %v4600, 60
        %v4674 = vpop.permute.xlu0 %4673
        %4675 = vrot.lane.b32.xlu0 %v4601, 60
        %v4676 = vpop.permute.xlu0 %4675
        %4677 = vrot.lane.b32.xlu0 %v4602, 60
        %v4678 = vpop.permute.xlu0 %4677
        %4679 = vrot.lane.b32.xlu0 %v4603, 60
        %v4680 = vpop.permute.xlu0 %4679
        %4681 = vrot.lane.b32.xlu0 %v4604, 60
        %v4682 = vpop.permute.xlu0 %4681
        %vm4709 = vcmask 523744
        %4710 = vst.msk [vmem:[#allocation5] sm:$0xff] %vm4709, %v4632
        %4711 = vst.msk [vmem:[#allocation5 + $0x8] sm:$0xff] %vm4709, %v4634
        %4712 = vst.msk [vmem:[#allocation5 + $0x10] sm:$0xff] %vm4709, %v4636
        %4713 = vst.msk [vmem:[#allocation5 + $0x18] sm:$0xff] %vm4709, %v4638
        %4714 = vst.msk [vmem:[#allocation5 + $0x20] sm:$0xff] %vm4709, %v4640
        %4715 = vst.msk [vmem:[#allocation5 + $0x28] sm:$0xff] %vm4709, %v4642
        %4716 = vst.msk [vmem:[#allocation5 + $0x30] sm:$0xff] %vm4709, %v4644
        %4717 = vst.msk [vmem:[#allocation5 + $0x38] sm:$0xff] %vm4709, %v4646
        %4718 = vst.msk [vmem:[#allocation5 + $0x40] sm:$0xff] %vm4709, %v4648
        %4719 = vst.msk [vmem:[#allocation5 + $0x48] sm:$0xff] %vm4709, %v4650
        %4720 = vst.msk [vmem:[#allocation5 + $0x50] sm:$0xff] %vm4709, %v4652
        %4721 = vst.msk [vmem:[#allocation5 + $0x58] sm:$0xff] %vm4709, %v4654
        %4722 = vst.msk [vmem:[#allocation5 + $0x60] sm:$0xff] %vm4709, %v4656
        %4723 = vst.msk [vmem:[#allocation5 + $0x68] sm:$0xff] %vm4709, %v4658
        %4724 = vst.msk [vmem:[#allocation5 + $0x70] sm:$0xff] %vm4709, %v4660
        %4725 = vst.msk [vmem:[#allocation5 + $0x78] sm:$0xff] %vm4709, %v4662
        %4726 = vst.msk [vmem:[#allocation5 + $0x80] sm:$0xff] %vm4709, %v4664
        %4727 = vst.msk [vmem:[#allocation5 + $0x88] sm:$0xff] %vm4709, %v4666
        %4728 = vst.msk [vmem:[#allocation5 + $0x90] sm:$0xff] %vm4709, %v4668
        %4729 = vst.msk [vmem:[#allocation5 + $0x98] sm:$0xff] %vm4709, %v4670
        %4730 = vst.msk [vmem:[#allocation5 + $0xa0] sm:$0xff] %vm4709, %v4672
        %4731 = vst.msk [vmem:[#allocation5 + $0xa8] sm:$0xff] %vm4709, %v4674
        %4732 = vst.msk [vmem:[#allocation5 + $0xb0] sm:$0xff] %vm4709, %v4676
        %4733 = vst.msk [vmem:[#allocation5 + $0xb8] sm:$0xff] %vm4709, %v4678
        %4734 = vst.msk [vmem:[#allocation5 + $0xc0] sm:$0xff] %vm4709, %v4680
        %4735 = vst.msk [vmem:[#allocation5 + $0xc8] sm:$0xff] %vm4709, %v4682
        %v4736 = vld [vmem:[#allocation5] sm:$0xff]
        %v4737 = vld [vmem:[#allocation5 + $0x8] sm:$0xff]
        %v4738 = vld [vmem:[#allocation5 + $0x10] sm:$0xff]
        %v4739 = vld [vmem:[#allocation5 + $0x18] sm:$0xff]
        %v4740 = vld [vmem:[#allocation5 + $0x20] sm:$0xff]
        %v4741 = vld [vmem:[#allocation5 + $0x28] sm:$0xff]
        %v4742 = vld [vmem:[#allocation5 + $0x30] sm:$0xff]
        %v4743 = vld [vmem:[#allocation5 + $0x38] sm:$0xff]
        %v4744 = vld [vmem:[#allocation5 + $0x40] sm:$0xff]
        %v4745 = vld [vmem:[#allocation5 + $0x48] sm:$0xff]
        %v4746 = vld [vmem:[#allocation5 + $0x50] sm:$0xff]
        %v4747 = vld [vmem:[#allocation5 + $0x58] sm:$0xff]
        %v4748 = vld [vmem:[#allocation5 + $0x60] sm:$0xff]
        %v4749 = vld [vmem:[#allocation5 + $0x68] sm:$0xff]
        %v4750 = vld [vmem:[#allocation5 + $0x70] sm:$0xff]
        %v4751 = vld [vmem:[#allocation5 + $0x78] sm:$0xff]
        %v4752 = vld [vmem:[#allocation5 + $0x80] sm:$0xff]
        %v4753 = vld [vmem:[#allocation5 + $0x88] sm:$0xff]
        %v4754 = vld [vmem:[#allocation5 + $0x90] sm:$0xff]
        %v4755 = vld [vmem:[#allocation5 + $0x98] sm:$0xff]
        %v4756 = vld [vmem:[#allocation5 + $0xa0] sm:$0xff]
        %v4757 = vld [vmem:[#allocation5 + $0xa8] sm:$0xff]
        %v4758 = vld [vmem:[#allocation5 + $0xb0] sm:$0xff]
        %v4759 = vld [vmem:[#allocation5 + $0xb8] sm:$0xff]
        %v4760 = vld [vmem:[#allocation5 + $0xc0] sm:$0xff]
        %v4761 = vld [vmem:[#allocation5 + $0xc8] sm:$0xff]
        %v4762 = vld [vmem:[%s3] sm:$0xff]
        %v4763 = vld [vmem:[%s3 + $0x8] sm:$0xff]
        %v4764 = vld [vmem:[%s3 + $0x10] sm:$0xff]
        %v4765 = vld [vmem:[%s3 + $0x18] sm:$0xff]
        %v4766 = vld [vmem:[%s3 + $0x20] sm:$0xff]
        %v4767 = vld [vmem:[%s3 + $0x28] sm:$0xff]
        %v4768 = vld [vmem:[%s3 + $0x30] sm:$0xff]
        %v4769 = vld [vmem:[%s3 + $0x38] sm:$0xff]
        %v4770 = vld [vmem:[%s4] sm:$0x1]
        %v4772 = vperm.slane %v4770, 0
        %vm4774 = vcmask 523264
        %v4776 = vsel %vm4774, %v4736, 0
        %v4779 = vsel %vm4774, %v4737, 0
        %v4782 = vsel %vm4774, %v4738, 0
        %v4785 = vsel %vm4774, %v4739, 0
        %v4788 = vsel %vm4774, %v4740, 0
        %v4791 = vsel %vm4774, %v4741, 0
        %v4794 = vsel %vm4774, %v4742, 0
        %v4797 = vsel %vm4774, %v4743, 0
        %v4800 = vsel %vm4774, %v4744, 0
        %v4803 = vsel %vm4774, %v4745, 0
        %v4806 = vsel %vm4774, %v4746, 0
        %v4809 = vsel %vm4774, %v4747, 0
        %v4812 = vsel %vm4774, %v4748, 0
        %v4815 = vsel %vm4774, %v4749, 0
        %v4818 = vsel %vm4774, %v4750, 0
        %v4821 = vsel %vm4774, %v4751, 0
        %v4824 = vsel %vm4774, %v4752, 0
        %v4827 = vsel %vm4774, %v4753, 0
        %v4830 = vsel %vm4774, %v4754, 0
        %v4833 = vsel %vm4774, %v4755, 0
        %v4836 = vsel %vm4774, %v4756, 0
        %v4839 = vsel %vm4774, %v4757, 0
        %v4842 = vsel %vm4774, %v4758, 0
        %v4845 = vsel %vm4774, %v4759, 0
        %v4848 = vsel %vm4774, %v4760, 0
        %v4851 = vsel %vm4774, %v4761, 0
        %4853 = vmatpush.msra.mxu0 0.0
        %4854 = vmatpush.msra.mxu0 0.0
        %4855 = vmatpush.msra.mxu0 0.0
        %4856 = vmatpush.msra.mxu0 0.0
        %4857 = vmatpush.msra.mxu0 0.0
        %4858 = vmatpush.msra.mxu0 0.0
        %4859 = vmatpush.msra.mxu0 0.0
        %4860 = vmatpush.msra.mxu0 0.0
        %4861 = vmatpush.msra.mxu0 %v4769
        %4862 = vmatpush.msra.mxu0 %v4768
        %4863 = vmatpush.msra.mxu0 %v4767
        %4864 = vmatpush.msra.mxu0 %v4766
        %4865 = vmatpush.msra.mxu0 %v4765
        %4866 = vmatpush.msra.mxu0 %v4764
        %4867 = vmatpush.msra.mxu0 %v4763
        %4868 = vmatpush.msra.mxu0 %v4762
        %4869 = vmatmul.f32.gmra.mxu0 %v4776
        %v4870 = vpop.f32.mrf.mxu0
        %v4871 = vadd.f32 %v4772, %v4870
        %4872 = vmatmul.f32.gmra.mxu0 %v4779
        %v4873 = vpop.f32.mrf.mxu0
        %v4874 = vadd.f32 %v4772, %v4873
        %4875 = vmatmul.f32.gmra.mxu0 %v4782
        %v4876 = vpop.f32.mrf.mxu0
        %v4877 = vadd.f32 %v4772, %v4876
        %4878 = vmatmul.f32.gmra.mxu0 %v4785
        %v4879 = vpop.f32.mrf.mxu0
        %v4880 = vadd.f32 %v4772, %v4879
        %4881 = vmatmul.f32.gmra.mxu0 %v4788
        %v4882 = vpop.f32.mrf.mxu0
        %v4883 = vadd.f32 %v4772, %v4882
        %4884 = vmatmul.f32.gmra.mxu0 %v4791
        %v4885 = vpop.f32.mrf.mxu0
        %v4886 = vadd.f32 %v4772, %v4885
        %4887 = vmatmul.f32.gmra.mxu0 %v4794
        %v4888 = vpop.f32.mrf.mxu0
        %v4889 = vadd.f32 %v4772, %v4888
        %4890 = vmatmul.f32.gmra.mxu0 %v4797
        %v4891 = vpop.f32.mrf.mxu0
        %v4892 = vadd.f32 %v4772, %v4891
        %4893 = vmatmul.f32.gmra.mxu0 %v4800
        %v4894 = vpop.f32.mrf.mxu0
        %v4895 = vadd.f32 %v4772, %v4894
        %4896 = vmatmul.f32.gmra.mxu0 %v4803
        %v4897 = vpop.f32.mrf.mxu0
        %v4898 = vadd.f32 %v4772, %v4897
        %4899 = vmatmul.f32.gmra.mxu0 %v4806
        %v4900 = vpop.f32.mrf.mxu0
        %v4901 = vadd.f32 %v4772, %v4900
        %4902 = vmatmul.f32.gmra.mxu0 %v4809
        %v4903 = vpop.f32.mrf.mxu0
        %v4904 = vadd.f32 %v4772, %v4903
        %4905 = vmatmul.f32.gmra.mxu0 %v4812
        %v4906 = vpop.f32.mrf.mxu0
        %v4907 = vadd.f32 %v4772, %v4906
        %4908 = vmatmul.f32.gmra.mxu0 %v4815
        %v4909 = vpop.f32.mrf.mxu0
        %v4910 = vadd.f32 %v4772, %v4909
        %4911 = vmatmul.f32.gmra.mxu0 %v4818
        %v4912 = vpop.f32.mrf.mxu0
        %v4913 = vadd.f32 %v4772, %v4912
        %4914 = vmatmul.f32.gmra.mxu0 %v4821
        %v4915 = vpop.f32.mrf.mxu0
        %v4916 = vadd.f32 %v4772, %v4915
        %4917 = vmatmul.f32.gmra.mxu0 %v4824
        %v4918 = vpop.f32.mrf.mxu0
        %v4919 = vadd.f32 %v4772, %v4918
        %4920 = vmatmul.f32.gmra.mxu0 %v4827
        %v4921 = vpop.f32.mrf.mxu0
        %v4922 = vadd.f32 %v4772, %v4921
        %4923 = vmatmul.f32.gmra.mxu0 %v4830
        %v4924 = vpop.f32.mrf.mxu0
        %v4925 = vadd.f32 %v4772, %v4924
        %4926 = vmatmul.f32.gmra.mxu0 %v4833
        %v4927 = vpop.f32.mrf.mxu0
        %v4928 = vadd.f32 %v4772, %v4927
        %4929 = vmatmul.f32.gmra.mxu0 %v4836
        %v4930 = vpop.f32.mrf.mxu0
        %v4931 = vadd.f32 %v4772, %v4930
        %4932 = vmatmul.f32.gmra.mxu0 %v4839
        %v4933 = vpop.f32.mrf.mxu0
        %v4934 = vadd.f32 %v4772, %v4933
        %4935 = vmatmul.f32.gmra.mxu0 %v4842
        %v4936 = vpop.f32.mrf.mxu0
        %v4937 = vadd.f32 %v4772, %v4936
        %4938 = vmatmul.f32.gmra.mxu0 %v4845
        %v4939 = vpop.f32.mrf.mxu0
        %v4940 = vadd.f32 %v4772, %v4939
        %4941 = vmatmul.f32.gmra.mxu0 %v4848
        %v4942 = vpop.f32.mrf.mxu0
        %v4943 = vadd.f32 %v4772, %v4942
        %4944 = vmatmul.f32.gmra.mxu0 %v4851
        %v4945 = vpop.f32.mrf.mxu0
        %v4946 = vadd.f32 %v4772, %v4945
        %4947 = vdwg.mxu0
        %v4948 = vmax.f32 %v4871, 0.0
        %v4949 = vmax.f32 %v4874, 0.0
        %v4950 = vmax.f32 %v4877, 0.0
        %v4951 = vmax.f32 %v4880, 0.0
        %v4952 = vmax.f32 %v4883, 0.0
        %v4953 = vmax.f32 %v4886, 0.0
        %v4954 = vmax.f32 %v4889, 0.0
        %v4955 = vmax.f32 %v4892, 0.0
        %v4956 = vmax.f32 %v4895, 0.0
        %v4957 = vmax.f32 %v4898, 0.0
        %v4958 = vmax.f32 %v4901, 0.0
        %v4959 = vmax.f32 %v4904, 0.0
        %v4960 = vmax.f32 %v4907, 0.0
        %v4961 = vmax.f32 %v4910, 0.0
        %v4962 = vmax.f32 %v4913, 0.0
        %v4963 = vmax.f32 %v4916, 0.0
        %v4964 = vmax.f32 %v4919, 0.0
        %v4965 = vmax.f32 %v4922, 0.0
        %v4966 = vmax.f32 %v4925, 0.0
        %v4967 = vmax.f32 %v4928, 0.0
        %v4968 = vmax.f32 %v4931, 0.0
        %v4969 = vmax.f32 %v4934, 0.0
        %v4970 = vmax.f32 %v4937, 0.0
        %v4971 = vmax.f32 %v4940, 0.0
        %v4972 = vmax.f32 %v4943, 0.0
        %v4973 = vmax.f32 %v4946, 0.0
        %v4974 = vld [vmem:[%s5] sm:$0x1]
        %v4976 = vperm.slane %v4974, 0
        %v4978 = vmul.f32 %v4948, %v4976
        %v4979 = vmul.f32 %v4949, %v4976
        %v4980 = vmul.f32 %v4950, %v4976
        %v4981 = vmul.f32 %v4951, %v4976
        %v4982 = vmul.f32 %v4952, %v4976
        %v4983 = vmul.f32 %v4953, %v4976
        %v4984 = vmul.f32 %v4954, %v4976
        %v4985 = vmul.f32 %v4955, %v4976
        %v4986 = vmul.f32 %v4956, %v4976
        %v4987 = vmul.f32 %v4957, %v4976
        %v4988 = vmul.f32 %v4958, %v4976
        %v4989 = vmul.f32 %v4959, %v4976
        %v4990 = vmul.f32 %v4960, %v4976
        %v4991 = vmul.f32 %v4961, %v4976
        %v4992 = vmul.f32 %v4962, %v4976
        %v4993 = vmul.f32 %v4963, %v4976
        %v4994 = vmul.f32 %v4964, %v4976
        %v4995 = vmul.f32 %v4965, %v4976
        %v4996 = vmul.f32 %v4966, %v4976
        %v4997 = vmul.f32 %v4967, %v4976
        %v4998 = vmul.f32 %v4968, %v4976
        %v4999 = vmul.f32 %v4969, %v4976
        %v5000 = vmul.f32 %v4970, %v4976
        %v5001 = vmul.f32 %v4971, %v4976
        %v5002 = vmul.f32 %v4972, %v4976
        %v5003 = vmul.f32 %v4973, %v4976
        %v5004 = vsel %vm278, %v4978, 0.0
        %5005 = vadd.xlane.f32.xlu0 %v5004
        %v5006 = vpop.xlane.xlu0 %5005
        %v5007 = vsel %vm278, %v4979, 0.0
        %5008 = vadd.xlane.f32.xlu0 %v5007
        %v5009 = vpop.xlane.xlu0 %5008
        %v5010 = vsel %vm278, %v4980, 0.0
        %5011 = vadd.xlane.f32.xlu0 %v5010
        %v5012 = vpop.xlane.xlu0 %5011
        %v5013 = vsel %vm278, %v4981, 0.0
        %5014 = vadd.xlane.f32.xlu0 %v5013
        %v5015 = vpop.xlane.xlu0 %5014
        %v5016 = vsel %vm278, %v4982, 0.0
        %5017 = vadd.xlane.f32.xlu0 %v5016
        %v5018 = vpop.xlane.xlu0 %5017
        %v5019 = vsel %vm278, %v4983, 0.0
        %5020 = vadd.xlane.f32.xlu0 %v5019
        %v5021 = vpop.xlane.xlu0 %5020
        %v5022 = vsel %vm278, %v4984, 0.0
        %5023 = vadd.xlane.f32.xlu0 %v5022
        %v5024 = vpop.xlane.xlu0 %5023
        %v5025 = vsel %vm278, %v4985, 0.0
        %5026 = vadd.xlane.f32.xlu0 %v5025
        %v5027 = vpop.xlane.xlu0 %5026
        %v5028 = vsel %vm278, %v4986, 0.0
        %5029 = vadd.xlane.f32.xlu0 %v5028
        %v5030 = vpop.xlane.xlu0 %5029
        %v5031 = vsel %vm278, %v4987, 0.0
        %5032 = vadd.xlane.f32.xlu0 %v5031
        %v5033 = vpop.xlane.xlu0 %5032
        %v5034 = vsel %vm278, %v4988, 0.0
        %5035 = vadd.xlane.f32.xlu0 %v5034
        %v5036 = vpop.xlane.xlu0 %5035
        %v5037 = vsel %vm278, %v4989, 0.0
        %5038 = vadd.xlane.f32.xlu0 %v5037
        %v5039 = vpop.xlane.xlu0 %5038
        %v5040 = vsel %vm278, %v4990, 0.0
        %5041 = vadd.xlane.f32.xlu0 %v5040
        %v5042 = vpop.xlane.xlu0 %5041
        %v5043 = vsel %vm278, %v4991, 0.0
        %5044 = vadd.xlane.f32.xlu0 %v5043
        %v5045 = vpop.xlane.xlu0 %5044
        %v5046 = vsel %vm278, %v4992, 0.0
        %5047 = vadd.xlane.f32.xlu0 %v5046
        %v5048 = vpop.xlane.xlu0 %5047
        %v5049 = vsel %vm278, %v4993, 0.0
        %5050 = vadd.xlane.f32.xlu0 %v5049
        %v5051 = vpop.xlane.xlu0 %5050
        %v5052 = vsel %vm278, %v4994, 0.0
        %5053 = vadd.xlane.f32.xlu0 %v5052
        %v5054 = vpop.xlane.xlu0 %5053
        %v5055 = vsel %vm278, %v4995, 0.0
        %5056 = vadd.xlane.f32.xlu0 %v5055
        %v5057 = vpop.xlane.xlu0 %5056
        %v5058 = vsel %vm278, %v4996, 0.0
        %5059 = vadd.xlane.f32.xlu0 %v5058
        %v5060 = vpop.xlane.xlu0 %5059
        %v5061 = vsel %vm278, %v4997, 0.0
        %5062 = vadd.xlane.f32.xlu0 %v5061
        %v5063 = vpop.xlane.xlu0 %5062
        %v5064 = vsel %vm278, %v4998, 0.0
        %5065 = vadd.xlane.f32.xlu0 %v5064
        %v5066 = vpop.xlane.xlu0 %5065
        %v5067 = vsel %vm278, %v4999, 0.0
        %5068 = vadd.xlane.f32.xlu0 %v5067
        %v5069 = vpop.xlane.xlu0 %5068
        %v5070 = vsel %vm278, %v5000, 0.0
        %5071 = vadd.xlane.f32.xlu0 %v5070
        %v5072 = vpop.xlane.xlu0 %5071
        %v5073 = vsel %vm278, %v5001, 0.0
        %5074 = vadd.xlane.f32.xlu0 %v5073
        %v5075 = vpop.xlane.xlu0 %5074
        %v5076 = vsel %vm278, %v5002, 0.0
        %5077 = vadd.xlane.f32.xlu0 %v5076
        %v5078 = vpop.xlane.xlu0 %5077
        %v5079 = vsel %vm278, %v5003, 0.0
        %5080 = vadd.xlane.f32.xlu0 %v5079
        %v5081 = vpop.xlane.xlu0 %5080
        %s5082 = sld [smem:[#allocation6]]
        %v5083 = vstv %s5082
        %v5084 = vadd.f32 %v5006, %v5083
        %v5085 = vadd.f32 %v5009, %v5083
        %v5086 = vadd.f32 %v5012, %v5083
        %v5087 = vadd.f32 %v5015, %v5083
        %v5088 = vadd.f32 %v5018, %v5083
        %v5089 = vadd.f32 %v5021, %v5083
        %v5090 = vadd.f32 %v5024, %v5083
        %v5091 = vadd.f32 %v5027, %v5083
        %v5092 = vadd.f32 %v5030, %v5083
        %v5093 = vadd.f32 %v5033, %v5083
        %v5094 = vadd.f32 %v5036, %v5083
        %v5095 = vadd.f32 %v5039, %v5083
        %v5096 = vadd.f32 %v5042, %v5083
        %v5097 = vadd.f32 %v5045, %v5083
        %v5098 = vadd.f32 %v5048, %v5083
        %v5099 = vadd.f32 %v5051, %v5083
        %v5100 = vadd.f32 %v5054, %v5083
        %v5101 = vadd.f32 %v5057, %v5083
        %v5102 = vadd.f32 %v5060, %v5083
        %v5103 = vadd.f32 %v5063, %v5083
        %v5104 = vadd.f32 %v5066, %v5083
        %v5105 = vadd.f32 %v5069, %v5083
        %v5106 = vadd.f32 %v5072, %v5083
        %v5107 = vadd.f32 %v5075, %v5083
        %v5108 = vadd.f32 %v5078, %v5083
        %v5109 = vadd.f32 %v5081, %v5083
        %v5136 = vperm.slane %v5084, 0
        %v5137 = vperm.slane %v5084, 1
        %v5138 = vperm.slane %v5084, 2
        %v5139 = vperm.slane %v5084, 3
        %v5140 = vperm.slane %v5084, 4
        %v5141 = vperm.slane %v5084, 5
        %v5142 = vperm.slane %v5084, 6
        %v5143 = vperm.slane %v5084, 7
        %v5144 = vperm.slane %v5085, 0
        %v5145 = vperm.slane %v5085, 1
        %v5146 = vperm.slane %v5085, 2
        %v5147 = vperm.slane %v5085, 3
        %v5148 = vperm.slane %v5085, 4
        %v5149 = vperm.slane %v5085, 5
        %v5150 = vperm.slane %v5085, 6
        %v5151 = vperm.slane %v5085, 7
        %v5152 = vperm.slane %v5086, 0
        %v5153 = vperm.slane %v5086, 1
        %v5154 = vperm.slane %v5086, 2
        %v5155 = vperm.slane %v5086, 3
        %v5156 = vperm.slane %v5086, 4
        %v5157 = vperm.slane %v5086, 5
        %v5158 = vperm.slane %v5086, 6
        %v5159 = vperm.slane %v5086, 7
        %v5160 = vperm.slane %v5087, 0
        %v5161 = vperm.slane %v5087, 1
        %v5162 = vperm.slane %v5087, 2
        %v5163 = vperm.slane %v5087, 3
        %v5164 = vperm.slane %v5087, 4
        %v5165 = vperm.slane %v5087, 5
        %v5166 = vperm.slane %v5087, 6
        %v5167 = vperm.slane %v5087, 7
        %v5168 = vperm.slane %v5088, 0
        %v5169 = vperm.slane %v5088, 1
        %v5170 = vperm.slane %v5088, 2
        %v5171 = vperm.slane %v5088, 3
        %v5172 = vperm.slane %v5088, 4
        %v5173 = vperm.slane %v5088, 5
        %v5174 = vperm.slane %v5088, 6
        %v5175 = vperm.slane %v5088, 7
        %v5176 = vperm.slane %v5089, 0
        %v5177 = vperm.slane %v5089, 1
        %v5178 = vperm.slane %v5089, 2
        %v5179 = vperm.slane %v5089, 3
        %v5180 = vperm.slane %v5089, 4
        %v5181 = vperm.slane %v5089, 5
        %v5182 = vperm.slane %v5089, 6
        %v5183 = vperm.slane %v5089, 7
        %v5184 = vperm.slane %v5090, 0
        %v5185 = vperm.slane %v5090, 1
        %v5186 = vperm.slane %v5090, 2
        %v5187 = vperm.slane %v5090, 3
        %v5188 = vperm.slane %v5090, 4
        %v5189 = vperm.slane %v5090, 5
        %v5190 = vperm.slane %v5090, 6
        %v5191 = vperm.slane %v5090, 7
        %v5192 = vperm.slane %v5091, 0
        %v5193 = vperm.slane %v5091, 1
        %v5194 = vperm.slane %v5091, 2
        %v5195 = vperm.slane %v5091, 3
        %v5196 = vperm.slane %v5091, 4
        %v5197 = vperm.slane %v5091, 5
        %v5198 = vperm.slane %v5091, 6
        %v5199 = vperm.slane %v5091, 7
        %v5200 = vperm.slane %v5092, 0
        %v5201 = vperm.slane %v5092, 1
        %v5202 = vperm.slane %v5092, 2
        %v5203 = vperm.slane %v5092, 3
        %v5204 = vperm.slane %v5092, 4
        %v5205 = vperm.slane %v5092, 5
        %v5206 = vperm.slane %v5092, 6
        %v5207 = vperm.slane %v5092, 7
        %v5208 = vperm.slane %v5093, 0
        %v5209 = vperm.slane %v5093, 1
        %v5210 = vperm.slane %v5093, 2
        %v5211 = vperm.slane %v5093, 3
        %v5212 = vperm.slane %v5093, 4
        %v5213 = vperm.slane %v5093, 5
        %v5214 = vperm.slane %v5093, 6
        %v5215 = vperm.slane %v5093, 7
        %v5216 = vperm.slane %v5094, 0
        %v5217 = vperm.slane %v5094, 1
        %v5218 = vperm.slane %v5094, 2
        %v5219 = vperm.slane %v5094, 3
        %v5220 = vperm.slane %v5094, 4
        %v5221 = vperm.slane %v5094, 5
        %v5222 = vperm.slane %v5094, 6
        %v5223 = vperm.slane %v5094, 7
        %v5224 = vperm.slane %v5095, 0
        %v5225 = vperm.slane %v5095, 1
        %v5226 = vperm.slane %v5095, 2
        %v5227 = vperm.slane %v5095, 3
        %v5228 = vperm.slane %v5095, 4
        %v5229 = vperm.slane %v5095, 5
        %v5230 = vperm.slane %v5095, 6
        %v5231 = vperm.slane %v5095, 7
        %v5232 = vperm.slane %v5096, 0
        %v5233 = vperm.slane %v5096, 1
        %v5234 = vperm.slane %v5096, 2
        %v5235 = vperm.slane %v5096, 3
        %v5236 = vperm.slane %v5096, 4
        %v5237 = vperm.slane %v5096, 5
        %v5238 = vperm.slane %v5096, 6
        %v5239 = vperm.slane %v5096, 7
        %v5240 = vperm.slane %v5097, 0
        %v5241 = vperm.slane %v5097, 1
        %v5242 = vperm.slane %v5097, 2
        %v5243 = vperm.slane %v5097, 3
        %v5244 = vperm.slane %v5097, 4
        %v5245 = vperm.slane %v5097, 5
        %v5246 = vperm.slane %v5097, 6
        %v5247 = vperm.slane %v5097, 7
        %v5248 = vperm.slane %v5098, 0
        %v5249 = vperm.slane %v5098, 1
        %v5250 = vperm.slane %v5098, 2
        %v5251 = vperm.slane %v5098, 3
        %v5252 = vperm.slane %v5098, 4
        %v5253 = vperm.slane %v5098, 5
        %v5254 = vperm.slane %v5098, 6
        %v5255 = vperm.slane %v5098, 7
        %v5256 = vperm.slane %v5099, 0
        %v5257 = vperm.slane %v5099, 1
        %v5258 = vperm.slane %v5099, 2
        %v5259 = vperm.slane %v5099, 3
        %v5260 = vperm.slane %v5099, 4
        %v5261 = vperm.slane %v5099, 5
        %v5262 = vperm.slane %v5099, 6
        %v5263 = vperm.slane %v5099, 7
        %v5264 = vperm.slane %v5100, 0
        %v5265 = vperm.slane %v5100, 1
        %v5266 = vperm.slane %v5100, 2
        %v5267 = vperm.slane %v5100, 3
        %v5268 = vperm.slane %v5100, 4
        %v5269 = vperm.slane %v5100, 5
        %v5270 = vperm.slane %v5100, 6
        %v5271 = vperm.slane %v5100, 7
        %v5272 = vperm.slane %v5101, 0
        %v5273 = vperm.slane %v5101, 1
        %v5274 = vperm.slane %v5101, 2
        %v5275 = vperm.slane %v5101, 3
        %v5276 = vperm.slane %v5101, 4
        %v5277 = vperm.slane %v5101, 5
        %v5278 = vperm.slane %v5101, 6
        %v5279 = vperm.slane %v5101, 7
        %v5280 = vperm.slane %v5102, 0
        %v5281 = vperm.slane %v5102, 1
        %v5282 = vperm.slane %v5102, 2
        %v5283 = vperm.slane %v5102, 3
        %v5284 = vperm.slane %v5102, 4
        %v5285 = vperm.slane %v5102, 5
        %v5286 = vperm.slane %v5102, 6
        %v5287 = vperm.slane %v5102, 7
        %v5288 = vperm.slane %v5103, 0
        %v5289 = vperm.slane %v5103, 1
        %v5290 = vperm.slane %v5103, 2
        %v5291 = vperm.slane %v5103, 3
        %v5292 = vperm.slane %v5103, 4
        %v5293 = vperm.slane %v5103, 5
        %v5294 = vperm.slane %v5103, 6
        %v5295 = vperm.slane %v5103, 7
        %v5296 = vperm.slane %v5104, 0
        %v5297 = vperm.slane %v5104, 1
        %v5298 = vperm.slane %v5104, 2
        %v5299 = vperm.slane %v5104, 3
        %v5300 = vperm.slane %v5104, 4
        %v5301 = vperm.slane %v5104, 5
        %v5302 = vperm.slane %v5104, 6
        %v5303 = vperm.slane %v5104, 7
        %v5304 = vperm.slane %v5105, 0
        %v5305 = vperm.slane %v5105, 1
        %v5306 = vperm.slane %v5105, 2
        %v5307 = vperm.slane %v5105, 3
        %v5308 = vperm.slane %v5105, 4
        %v5309 = vperm.slane %v5105, 5
        %v5310 = vperm.slane %v5105, 6
        %v5311 = vperm.slane %v5105, 7
        %v5312 = vperm.slane %v5106, 0
        %v5313 = vperm.slane %v5106, 1
        %v5314 = vperm.slane %v5106, 2
        %v5315 = vperm.slane %v5106, 3
        %v5316 = vperm.slane %v5106, 4
        %v5317 = vperm.slane %v5106, 5
        %v5318 = vperm.slane %v5106, 6
        %v5319 = vperm.slane %v5106, 7
        %v5320 = vperm.slane %v5107, 0
        %v5321 = vperm.slane %v5107, 1
        %v5322 = vperm.slane %v5107, 2
        %v5323 = vperm.slane %v5107, 3
        %v5324 = vperm.slane %v5107, 4
        %v5325 = vperm.slane %v5107, 5
        %v5326 = vperm.slane %v5107, 6
        %v5327 = vperm.slane %v5107, 7
        %v5328 = vperm.slane %v5108, 0
        %v5329 = vperm.slane %v5108, 1
        %v5330 = vperm.slane %v5108, 2
        %v5331 = vperm.slane %v5108, 3
        %v5332 = vperm.slane %v5108, 4
        %v5333 = vperm.slane %v5108, 5
        %v5334 = vperm.slane %v5108, 6
        %v5335 = vperm.slane %v5108, 7
        %v5336 = vperm.slane %v5109, 0
        %v5337 = vperm.slane %v5109, 1
        %v5338 = vperm.slane %v5109, 2
        %v5339 = vperm.slane %v5109, 3
        %v5340 = vperm.slane %v5109, 4
        %v5341 = vperm.slane %v5109, 5
        %v5342 = vperm.slane %v5109, 6
        %v5343 = vperm.slane %v5109, 7
        %5344 = vst [vmem:[#allocation1] ss:$9 sm:$0xff] %v5136
        %s5345 = scalar_lea.vmem [#allocation1], 1
        %5346 = vst [vmem:[%s5345] ss:$9 sm:$0xff] %v5137
        %s5347 = scalar_lea.vmem [#allocation1], 2
        %5348 = vst [vmem:[%s5347] ss:$9 sm:$0xff] %v5138
        %s5349 = scalar_lea.vmem [#allocation1], 3
        %5350 = vst [vmem:[%s5349] ss:$9 sm:$0xff] %v5139
        %s5351 = scalar_lea.vmem [#allocation1], 4
        %5352 = vst [vmem:[%s5351] ss:$9 sm:$0xff] %v5140
        %s5353 = scalar_lea.vmem [#allocation1], 5
        %5354 = vst [vmem:[%s5353] ss:$9 sm:$0xff] %v5141
        %s5355 = scalar_lea.vmem [#allocation1], 6
        %5356 = vst [vmem:[%s5355] ss:$9 sm:$0xff] %v5142
        %s5357 = scalar_lea.vmem [#allocation1], 7
        %5358 = vst [vmem:[%s5357] ss:$9 sm:$0xff] %v5143
        %v5359 = vld [vmem:[#allocation1] sm:$0xff]
        %5360 = vst [vmem:[#allocation1] ss:$9 sm:$0xff] %v5144
        %5361 = vst [vmem:[%s5345] ss:$9 sm:$0xff] %v5145
        %5362 = vst [vmem:[%s5347] ss:$9 sm:$0xff] %v5146
        %5363 = vst [vmem:[%s5349] ss:$9 sm:$0xff] %v5147
        %5364 = vst [vmem:[%s5351] ss:$9 sm:$0xff] %v5148
        %5365 = vst [vmem:[%s5353] ss:$9 sm:$0xff] %v5149
        %5366 = vst [vmem:[%s5355] ss:$9 sm:$0xff] %v5150
        %5367 = vst [vmem:[%s5357] ss:$9 sm:$0xff] %v5151
        %v5368 = vld [vmem:[#allocation1] sm:$0xff]
        %5369 = vst [vmem:[#allocation1] ss:$9 sm:$0xff] %v5152
        %5370 = vst [vmem:[%s5345] ss:$9 sm:$0xff] %v5153
        %5371 = vst [vmem:[%s5347] ss:$9 sm:$0xff] %v5154
        %5372 = vst [vmem:[%s5349] ss:$9 sm:$0xff] %v5155
        %5373 = vst [vmem:[%s5351] ss:$9 sm:$0xff] %v5156
        %5374 = vst [vmem:[%s5353] ss:$9 sm:$0xff] %v5157
        %5375 = vst [vmem:[%s5355] ss:$9 sm:$0xff] %v5158
        %5376 = vst [vmem:[%s5357] ss:$9 sm:$0xff] %v5159
        %v5377 = vld [vmem:[#allocation1] sm:$0xff]
        %5378 = vst [vmem:[#allocation1] ss:$9 sm:$0xff] %v5160
        %5379 = vst [vmem:[%s5345] ss:$9 sm:$0xff] %v5161
        %5380 = vst [vmem:[%s5347] ss:$9 sm:$0xff] %v5162
        %5381 = vst [vmem:[%s5349] ss:$9 sm:$0xff] %v5163
        %5382 = vst [vmem:[%s5351] ss:$9 sm:$0xff] %v5164
        %5383 = vst [vmem:[%s5353] ss:$9 sm:$0xff] %v5165
        %5384 = vst [vmem:[%s5355] ss:$9 sm:$0xff] %v5166
        %5385 = vst [vmem:[%s5357] ss:$9 sm:$0xff] %v5167
        %v5386 = vld [vmem:[#allocation1] sm:$0xff]
        %5387 = vst [vmem:[#allocation1] ss:$9 sm:$0xff] %v5168
        %5388 = vst [vmem:[%s5345] ss:$9 sm:$0xff] %v5169
        %5389 = vst [vmem:[%s5347] ss:$9 sm:$0xff] %v5170
        %5390 = vst [vmem:[%s5349] ss:$9 sm:$0xff] %v5171
        %5391 = vst [vmem:[%s5351] ss:$9 sm:$0xff] %v5172
        %5392 = vst [vmem:[%s5353] ss:$9 sm:$0xff] %v5173
        %5393 = vst [vmem:[%s5355] ss:$9 sm:$0xff] %v5174
        %5394 = vst [vmem:[%s5357] ss:$9 sm:$0xff] %v5175
        %v5395 = vld [vmem:[#allocation1] sm:$0xff]
        %5396 = vst [vmem:[#allocation1] ss:$9 sm:$0xff] %v5176
        %5397 = vst [vmem:[%s5345] ss:$9 sm:$0xff] %v5177
        %5398 = vst [vmem:[%s5347] ss:$9 sm:$0xff] %v5178
        %5399 = vst [vmem:[%s5349] ss:$9 sm:$0xff] %v5179
        %5400 = vst [vmem:[%s5351] ss:$9 sm:$0xff] %v5180
        %5401 = vst [vmem:[%s5353] ss:$9 sm:$0xff] %v5181
        %5402 = vst [vmem:[%s5355] ss:$9 sm:$0xff] %v5182
        %5403 = vst [vmem:[%s5357] ss:$9 sm:$0xff] %v5183
        %v5404 = vld [vmem:[#allocation1] sm:$0xff]
        %5405 = vst [vmem:[#allocation1] ss:$9 sm:$0xff] %v5184
        %5406 = vst [vmem:[%s5345] ss:$9 sm:$0xff] %v5185
        %5407 = vst [vmem:[%s5347] ss:$9 sm:$0xff] %v5186
        %5408 = vst [vmem:[%s5349] ss:$9 sm:$0xff] %v5187
        %5409 = vst [vmem:[%s5351] ss:$9 sm:$0xff] %v5188
        %5410 = vst [vmem:[%s5353] ss:$9 sm:$0xff] %v5189
        %5411 = vst [vmem:[%s5355] ss:$9 sm:$0xff] %v5190
        %5412 = vst [vmem:[%s5357] ss:$9 sm:$0xff] %v5191
        %v5413 = vld [vmem:[#allocation1] sm:$0xff]
        %5414 = vst [vmem:[#allocation1] ss:$9 sm:$0xff] %v5192
        %5415 = vst [vmem:[%s5345] ss:$9 sm:$0xff] %v5193
        %5416 = vst [vmem:[%s5347] ss:$9 sm:$0xff] %v5194
        %5417 = vst [vmem:[%s5349] ss:$9 sm:$0xff] %v5195
        %5418 = vst [vmem:[%s5351] ss:$9 sm:$0xff] %v5196
        %5419 = vst [vmem:[%s5353] ss:$9 sm:$0xff] %v5197
        %5420 = vst [vmem:[%s5355] ss:$9 sm:$0xff] %v5198
        %5421 = vst [vmem:[%s5357] ss:$9 sm:$0xff] %v5199
        %v5422 = vld [vmem:[#allocation1] sm:$0xff]
        %5423 = vst [vmem:[#allocation1] ss:$9 sm:$0xff] %v5200
        %5424 = vst [vmem:[%s5345] ss:$9 sm:$0xff] %v5201
        %5425 = vst [vmem:[%s5347] ss:$9 sm:$0xff] %v5202
        %5426 = vst [vmem:[%s5349] ss:$9 sm:$0xff] %v5203
        %5427 = vst [vmem:[%s5351] ss:$9 sm:$0xff] %v5204
        %5428 = vst [vmem:[%s5353] ss:$9 sm:$0xff] %v5205
        %5429 = vst [vmem:[%s5355] ss:$9 sm:$0xff] %v5206
        %5430 = vst [vmem:[%s5357] ss:$9 sm:$0xff] %v5207
        %v5431 = vld [vmem:[#allocation1] sm:$0xff]
        %5432 = vst [vmem:[#allocation1] ss:$9 sm:$0xff] %v5208
        %5433 = vst [vmem:[%s5345] ss:$9 sm:$0xff] %v5209
        %5434 = vst [vmem:[%s5347] ss:$9 sm:$0xff] %v5210
        %5435 = vst [vmem:[%s5349] ss:$9 sm:$0xff] %v5211
        %5436 = vst [vmem:[%s5351] ss:$9 sm:$0xff] %v5212
        %5437 = vst [vmem:[%s5353] ss:$9 sm:$0xff] %v5213
        %5438 = vst [vmem:[%s5355] ss:$9 sm:$0xff] %v5214
        %5439 = vst [vmem:[%s5357] ss:$9 sm:$0xff] %v5215
        %v5440 = vld [vmem:[#allocation1] sm:$0xff]
        %5441 = vst [vmem:[#allocation1] ss:$9 sm:$0xff] %v5216
        %5442 = vst [vmem:[%s5345] ss:$9 sm:$0xff] %v5217
        %5443 = vst [vmem:[%s5347] ss:$9 sm:$0xff] %v5218
        %5444 = vst [vmem:[%s5349] ss:$9 sm:$0xff] %v5219
        %5445 = vst [vmem:[%s5351] ss:$9 sm:$0xff] %v5220
        %5446 = vst [vmem:[%s5353] ss:$9 sm:$0xff] %v5221
        %5447 = vst [vmem:[%s5355] ss:$9 sm:$0xff] %v5222
        %5448 = vst [vmem:[%s5357] ss:$9 sm:$0xff] %v5223
        %v5449 = vld [vmem:[#allocation1] sm:$0xff]
        %5450 = vst [vmem:[#allocation1] ss:$9 sm:$0xff] %v5224
        %5451 = vst [vmem:[%s5345] ss:$9 sm:$0xff] %v5225
        %5452 = vst [vmem:[%s5347] ss:$9 sm:$0xff] %v5226
        %5453 = vst [vmem:[%s5349] ss:$9 sm:$0xff] %v5227
        %5454 = vst [vmem:[%s5351] ss:$9 sm:$0xff] %v5228
        %5455 = vst [vmem:[%s5353] ss:$9 sm:$0xff] %v5229
        %5456 = vst [vmem:[%s5355] ss:$9 sm:$0xff] %v5230
        %5457 = vst [vmem:[%s5357] ss:$9 sm:$0xff] %v5231
        %v5458 = vld [vmem:[#allocation1] sm:$0xff]
        %5459 = vst [vmem:[#allocation1] ss:$9 sm:$0xff] %v5232
        %5460 = vst [vmem:[%s5345] ss:$9 sm:$0xff] %v5233
        %5461 = vst [vmem:[%s5347] ss:$9 sm:$0xff] %v5234
        %5462 = vst [vmem:[%s5349] ss:$9 sm:$0xff] %v5235
        %5463 = vst [vmem:[%s5351] ss:$9 sm:$0xff] %v5236
        %5464 = vst [vmem:[%s5353] ss:$9 sm:$0xff] %v5237
        %5465 = vst [vmem:[%s5355] ss:$9 sm:$0xff] %v5238
        %5466 = vst [vmem:[%s5357] ss:$9 sm:$0xff] %v5239
        %v5467 = vld [vmem:[#allocation1] sm:$0xff]
        %5468 = vst [vmem:[#allocation1] ss:$9 sm:$0xff] %v5240
        %5469 = vst [vmem:[%s5345] ss:$9 sm:$0xff] %v5241
        %5470 = vst [vmem:[%s5347] ss:$9 sm:$0xff] %v5242
        %5471 = vst [vmem:[%s5349] ss:$9 sm:$0xff] %v5243
        %5472 = vst [vmem:[%s5351] ss:$9 sm:$0xff] %v5244
        %5473 = vst [vmem:[%s5353] ss:$9 sm:$0xff] %v5245
        %5474 = vst [vmem:[%s5355] ss:$9 sm:$0xff] %v5246
        %5475 = vst [vmem:[%s5357] ss:$9 sm:$0xff] %v5247
        %v5476 = vld [vmem:[#allocation1] sm:$0xff]
        %5477 = vst [vmem:[#allocation1] ss:$9 sm:$0xff] %v5248
        %5478 = vst [vmem:[%s5345] ss:$9 sm:$0xff] %v5249
        %5479 = vst [vmem:[%s5347] ss:$9 sm:$0xff] %v5250
        %5480 = vst [vmem:[%s5349] ss:$9 sm:$0xff] %v5251
        %5481 = vst [vmem:[%s5351] ss:$9 sm:$0xff] %v5252
        %5482 = vst [vmem:[%s5353] ss:$9 sm:$0xff] %v5253
        %5483 = vst [vmem:[%s5355] ss:$9 sm:$0xff] %v5254
        %5484 = vst [vmem:[%s5357] ss:$9 sm:$0xff] %v5255
        %v5485 = vld [vmem:[#allocation1] sm:$0xff]
        %5486 = vst [vmem:[#allocation1] ss:$9 sm:$0xff] %v5256
        %5487 = vst [vmem:[%s5345] ss:$9 sm:$0xff] %v5257
        %5488 = vst [vmem:[%s5347] ss:$9 sm:$0xff] %v5258
        %5489 = vst [vmem:[%s5349] ss:$9 sm:$0xff] %v5259
        %5490 = vst [vmem:[%s5351] ss:$9 sm:$0xff] %v5260
        %5491 = vst [vmem:[%s5353] ss:$9 sm:$0xff] %v5261
        %5492 = vst [vmem:[%s5355] ss:$9 sm:$0xff] %v5262
        %5493 = vst [vmem:[%s5357] ss:$9 sm:$0xff] %v5263
        %v5494 = vld [vmem:[#allocation1] sm:$0xff]
        %5495 = vst [vmem:[#allocation1] ss:$9 sm:$0xff] %v5264
        %5496 = vst [vmem:[%s5345] ss:$9 sm:$0xff] %v5265
        %5497 = vst [vmem:[%s5347] ss:$9 sm:$0xff] %v5266
        %5498 = vst [vmem:[%s5349] ss:$9 sm:$0xff] %v5267
        %5499 = vst [vmem:[%s5351] ss:$9 sm:$0xff] %v5268
        %5500 = vst [vmem:[%s5353] ss:$9 sm:$0xff] %v5269
        %5501 = vst [vmem:[%s5355] ss:$9 sm:$0xff] %v5270
        %5502 = vst [vmem:[%s5357] ss:$9 sm:$0xff] %v5271
        %v5503 = vld [vmem:[#allocation1] sm:$0xff]
        %5504 = vst [vmem:[#allocation1] ss:$9 sm:$0xff] %v5272
        %5505 = vst [vmem:[%s5345] ss:$9 sm:$0xff] %v5273
        %5506 = vst [vmem:[%s5347] ss:$9 sm:$0xff] %v5274
        %5507 = vst [vmem:[%s5349] ss:$9 sm:$0xff] %v5275
        %5508 = vst [vmem:[%s5351] ss:$9 sm:$0xff] %v5276
        %5509 = vst [vmem:[%s5353] ss:$9 sm:$0xff] %v5277
        %5510 = vst [vmem:[%s5355] ss:$9 sm:$0xff] %v5278
        %5511 = vst [vmem:[%s5357] ss:$9 sm:$0xff] %v5279
        %v5512 = vld [vmem:[#allocation1] sm:$0xff]
        %5513 = vst [vmem:[#allocation1] ss:$9 sm:$0xff] %v5280
        %5514 = vst [vmem:[%s5345] ss:$9 sm:$0xff] %v5281
        %5515 = vst [vmem:[%s5347] ss:$9 sm:$0xff] %v5282
        %5516 = vst [vmem:[%s5349] ss:$9 sm:$0xff] %v5283
        %5517 = vst [vmem:[%s5351] ss:$9 sm:$0xff] %v5284
        %5518 = vst [vmem:[%s5353] ss:$9 sm:$0xff] %v5285
        %5519 = vst [vmem:[%s5355] ss:$9 sm:$0xff] %v5286
        %5520 = vst [vmem:[%s5357] ss:$9 sm:$0xff] %v5287
        %v5521 = vld [vmem:[#allocation1] sm:$0xff]
        %5522 = vst [vmem:[#allocation1] ss:$9 sm:$0xff] %v5288
        %5523 = vst [vmem:[%s5345] ss:$9 sm:$0xff] %v5289
        %5524 = vst [vmem:[%s5347] ss:$9 sm:$0xff] %v5290
        %5525 = vst [vmem:[%s5349] ss:$9 sm:$0xff] %v5291
        %5526 = vst [vmem:[%s5351] ss:$9 sm:$0xff] %v5292
        %5527 = vst [vmem:[%s5353] ss:$9 sm:$0xff] %v5293
        %5528 = vst [vmem:[%s5355] ss:$9 sm:$0xff] %v5294
        %5529 = vst [vmem:[%s5357] ss:$9 sm:$0xff] %v5295
        %v5530 = vld [vmem:[#allocation1] sm:$0xff]
        %5531 = vst [vmem:[#allocation1] ss:$9 sm:$0xff] %v5296
        %5532 = vst [vmem:[%s5345] ss:$9 sm:$0xff] %v5297
        %5533 = vst [vmem:[%s5347] ss:$9 sm:$0xff] %v5298
        %5534 = vst [vmem:[%s5349] ss:$9 sm:$0xff] %v5299
        %5535 = vst [vmem:[%s5351] ss:$9 sm:$0xff] %v5300
        %5536 = vst [vmem:[%s5353] ss:$9 sm:$0xff] %v5301
        %5537 = vst [vmem:[%s5355] ss:$9 sm:$0xff] %v5302
        %5538 = vst [vmem:[%s5357] ss:$9 sm:$0xff] %v5303
        %v5539 = vld [vmem:[#allocation1] sm:$0xff]
        %5540 = vst [vmem:[#allocation1] ss:$9 sm:$0xff] %v5304
        %5541 = vst [vmem:[%s5345] ss:$9 sm:$0xff] %v5305
        %5542 = vst [vmem:[%s5347] ss:$9 sm:$0xff] %v5306
        %5543 = vst [vmem:[%s5349] ss:$9 sm:$0xff] %v5307
        %5544 = vst [vmem:[%s5351] ss:$9 sm:$0xff] %v5308
        %5545 = vst [vmem:[%s5353] ss:$9 sm:$0xff] %v5309
        %5546 = vst [vmem:[%s5355] ss:$9 sm:$0xff] %v5310
        %5547 = vst [vmem:[%s5357] ss:$9 sm:$0xff] %v5311
        %v5548 = vld [vmem:[#allocation1] sm:$0xff]
        %5549 = vst [vmem:[#allocation1] ss:$9 sm:$0xff] %v5312
        %5550 = vst [vmem:[%s5345] ss:$9 sm:$0xff] %v5313
        %5551 = vst [vmem:[%s5347] ss:$9 sm:$0xff] %v5314
        %5552 = vst [vmem:[%s5349] ss:$9 sm:$0xff] %v5315
        %5553 = vst [vmem:[%s5351] ss:$9 sm:$0xff] %v5316
        %5554 = vst [vmem:[%s5353] ss:$9 sm:$0xff] %v5317
        %5555 = vst [vmem:[%s5355] ss:$9 sm:$0xff] %v5318
        %5556 = vst [vmem:[%s5357] ss:$9 sm:$0xff] %v5319
        %v5557 = vld [vmem:[#allocation1] sm:$0xff]
        %5558 = vst [vmem:[#allocation1] ss:$9 sm:$0xff] %v5320
        %5559 = vst [vmem:[%s5345] ss:$9 sm:$0xff] %v5321
        %5560 = vst [vmem:[%s5347] ss:$9 sm:$0xff] %v5322
        %5561 = vst [vmem:[%s5349] ss:$9 sm:$0xff] %v5323
        %5562 = vst [vmem:[%s5351] ss:$9 sm:$0xff] %v5324
        %5563 = vst [vmem:[%s5353] ss:$9 sm:$0xff] %v5325
        %5564 = vst [vmem:[%s5355] ss:$9 sm:$0xff] %v5326
        %5565 = vst [vmem:[%s5357] ss:$9 sm:$0xff] %v5327
        %v5566 = vld [vmem:[#allocation1] sm:$0xff]
        %5567 = vst [vmem:[#allocation1] ss:$9 sm:$0xff] %v5328
        %5568 = vst [vmem:[%s5345] ss:$9 sm:$0xff] %v5329
        %5569 = vst [vmem:[%s5347] ss:$9 sm:$0xff] %v5330
        %5570 = vst [vmem:[%s5349] ss:$9 sm:$0xff] %v5331
        %5571 = vst [vmem:[%s5351] ss:$9 sm:$0xff] %v5332
        %5572 = vst [vmem:[%s5353] ss:$9 sm:$0xff] %v5333
        %5573 = vst [vmem:[%s5355] ss:$9 sm:$0xff] %v5334
        %5574 = vst [vmem:[%s5357] ss:$9 sm:$0xff] %v5335
        %v5575 = vld [vmem:[#allocation1] sm:$0xff]
        %5576 = vst [vmem:[#allocation1] ss:$9 sm:$0xff] %v5336
        %5577 = vst [vmem:[%s5345] ss:$9 sm:$0xff] %v5337
        %5578 = vst [vmem:[%s5347] ss:$9 sm:$0xff] %v5338
        %5579 = vst [vmem:[%s5349] ss:$9 sm:$0xff] %v5339
        %5580 = vst [vmem:[%s5351] ss:$9 sm:$0xff] %v5340
        %5581 = vst [vmem:[%s5353] ss:$9 sm:$0xff] %v5341
        %5582 = vst [vmem:[%s5355] ss:$9 sm:$0xff] %v5342
        %5583 = vst [vmem:[%s5357] ss:$9 sm:$0xff] %v5343
        %v5584 = vld [vmem:[#allocation1] sm:$0xff]
        %5585 = vset.pattern.permute.xlu0 0
        %5586 = vperm.xlu0 %5585, %v5359
        %v5587 = vpop.permute.xlu0 %5586
        %5588 = vset.pattern.permute.xlu0 0
        %5589 = vperm.xlu0 %5588, %v5368
        %v5590 = vpop.permute.xlu0 %5589
        %5591 = vset.pattern.permute.xlu0 0
        %5592 = vperm.xlu0 %5591, %v5377
        %v5593 = vpop.permute.xlu0 %5592
        %5594 = vset.pattern.permute.xlu0 0
        %5595 = vperm.xlu0 %5594, %v5386
        %v5596 = vpop.permute.xlu0 %5595
        %5597 = vset.pattern.permute.xlu0 0
        %5598 = vperm.xlu0 %5597, %v5395
        %v5599 = vpop.permute.xlu0 %5598
        %5600 = vset.pattern.permute.xlu0 0
        %5601 = vperm.xlu0 %5600, %v5404
        %v5602 = vpop.permute.xlu0 %5601
        %5603 = vset.pattern.permute.xlu0 0
        %5604 = vperm.xlu0 %5603, %v5413
        %v5605 = vpop.permute.xlu0 %5604
        %5606 = vset.pattern.permute.xlu0 0
        %5607 = vperm.xlu0 %5606, %v5422
        %v5608 = vpop.permute.xlu0 %5607
        %5609 = vset.pattern.permute.xlu0 0
        %5610 = vperm.xlu0 %5609, %v5431
        %v5611 = vpop.permute.xlu0 %5610
        %5612 = vset.pattern.permute.xlu0 0
        %5613 = vperm.xlu0 %5612, %v5440
        %v5614 = vpop.permute.xlu0 %5613
        %5615 = vset.pattern.permute.xlu0 0
        %5616 = vperm.xlu0 %5615, %v5449
        %v5617 = vpop.permute.xlu0 %5616
        %5618 = vset.pattern.permute.xlu0 0
        %5619 = vperm.xlu0 %5618, %v5458
        %v5620 = vpop.permute.xlu0 %5619
        %5621 = vset.pattern.permute.xlu0 0
        %5622 = vperm.xlu0 %5621, %v5467
        %v5623 = vpop.permute.xlu0 %5622
        %5624 = vset.pattern.permute.xlu0 0
        %5625 = vperm.xlu0 %5624, %v5476
        %v5626 = vpop.permute.xlu0 %5625
        %5627 = vset.pattern.permute.xlu0 0
        %5628 = vperm.xlu0 %5627, %v5485
        %v5629 = vpop.permute.xlu0 %5628
        %5630 = vset.pattern.permute.xlu0 0
        %5631 = vperm.xlu0 %5630, %v5494
        %v5632 = vpop.permute.xlu0 %5631
        %5633 = vset.pattern.permute.xlu0 0
        %5634 = vperm.xlu0 %5633, %v5503
        %v5635 = vpop.permute.xlu0 %5634
        %5636 = vset.pattern.permute.xlu0 0
        %5637 = vperm.xlu0 %5636, %v5512
        %v5638 = vpop.permute.xlu0 %5637
        %5639 = vset.pattern.permute.xlu0 0
        %5640 = vperm.xlu0 %5639, %v5521
        %v5641 = vpop.permute.xlu0 %5640
        %5642 = vset.pattern.permute.xlu0 0
        %5643 = vperm.xlu0 %5642, %v5530
        %v5644 = vpop.permute.xlu0 %5643
        %5645 = vset.pattern.permute.xlu0 0
        %5646 = vperm.xlu0 %5645, %v5539
        %v5647 = vpop.permute.xlu0 %5646
        %5648 = vset.pattern.permute.xlu0 0
        %5649 = vperm.xlu0 %5648, %v5548
        %v5650 = vpop.permute.xlu0 %5649
        %5651 = vset.pattern.permute.xlu0 0
        %5652 = vperm.xlu0 %5651, %v5557
        %v5653 = vpop.permute.xlu0 %5652
        %5654 = vset.pattern.permute.xlu0 0
        %5655 = vperm.xlu0 %5654, %v5566
        %v5656 = vpop.permute.xlu0 %5655
        %5657 = vset.pattern.permute.xlu0 0
        %5658 = vperm.xlu0 %5657, %v5575
        %v5659 = vpop.permute.xlu0 %5658
        %5660 = vset.pattern.permute.xlu0 0
        %5661 = vperm.xlu0 %5660, %v5584
        %v5662 = vpop.permute.xlu0 %5661
        %v5663 = vlaneseq
        %v5664 = vand.u32 %v5663, 127
        %v5665 = vperm.slane %v5587, %v5664
        %v5666 = vadd.s32 %v5664, 4294967288
        %v5667 = vperm.slane %v5590, %v5666
        %vm5668 = vcmask 130112
        %v5669 = vsel %vm5668, %v5667, %v5665
        %v5670 = vadd.s32 %v5664, 4294967280
        %v5671 = vperm.slane %v5593, %v5670
        %vm5672 = vcmask 195712
        %v5673 = vsel %vm5672, %v5671, %v5669
        %v5674 = vadd.s32 %v5664, 4294967272
        %v5675 = vperm.slane %v5596, %v5674
        %vm5676 = vcmask 261312
        %v5677 = vsel %vm5676, %v5675, %v5673
        %v5678 = vadd.s32 %v5664, 4294967264
        %v5679 = vperm.slane %v5599, %v5678
        %vm5680 = vcmask 326912
        %v5681 = vsel %vm5680, %v5679, %v5677
        %v5682 = vadd.s32 %v5664, 4294967256
        %v5683 = vperm.slane %v5602, %v5682
        %vm5684 = vcmask 392512
        %v5685 = vsel %vm5684, %v5683, %v5681
        %v5686 = vadd.s32 %v5664, 4294967248
        %v5687 = vperm.slane %v5605, %v5686
        %vm5688 = vcmask 458112
        %v5689 = vsel %vm5688, %v5687, %v5685
        %v5690 = vadd.s32 %v5664, 4294967240
        %v5691 = vperm.slane %v5608, %v5690
        %vm5692 = vcmask 523712
        %v5693 = vsel %vm5692, %v5691, %v5689
        %v5694 = vadd.s32 %v5664, 4294967232
        %v5695 = vperm.slane %v5611, %v5694
        %vm5696 = vcmask 589312
        %v5697 = vsel %vm5696, %v5695, %v5693
        %v5698 = vadd.s32 %v5664, 4294967224
        %v5699 = vperm.slane %v5614, %v5698
        %vm5700 = vcmask 654912
        %v5701 = vsel %vm5700, %v5699, %v5697
        %v5702 = vadd.s32 %v5664, 4294967216
        %v5703 = vperm.slane %v5617, %v5702
        %vm5704 = vcmask 720512
        %v5705 = vsel %vm5704, %v5703, %v5701
        %v5706 = vadd.s32 %v5664, 4294967208
        %v5707 = vperm.slane %v5620, %v5706
        %vm5708 = vcmask 786112
        %v5709 = vsel %vm5708, %v5707, %v5705
        %v5710 = vadd.s32 %v5664, 4294967200
        %v5711 = vperm.slane %v5623, %v5710
        %vm5712 = vcmask 851712
        %v5713 = vsel %vm5712, %v5711, %v5709
        %v5714 = vadd.s32 %v5664, 4294967192
        %v5715 = vperm.slane %v5626, %v5714
        %vm5716 = vcmask 917312
        %v5717 = vsel %vm5716, %v5715, %v5713
        %v5718 = vadd.s32 %v5664, 4294967184
        %v5719 = vperm.slane %v5629, %v5718
        %vm5720 = vcmask 982912
        %v5721 = vsel %vm5720, %v5719, %v5717
        %v5722 = vadd.s32 %v5664, 4294967176
        %v5723 = vperm.slane %v5632, %v5722
        %vm5724 = vcmask 1048512
        %v5725 = vsel %vm5724, %v5723, %v5721
        %v5726 = vperm.slane %v5635, %v5664
        %v5727 = vperm.slane %v5638, %v5666
        %v5728 = vsel %vm5668, %v5727, %v5726
        %v5729 = vperm.slane %v5641, %v5670
        %v5730 = vsel %vm5672, %v5729, %v5728
        %v5731 = vperm.slane %v5644, %v5674
        %v5732 = vsel %vm5676, %v5731, %v5730
        %v5733 = vperm.slane %v5647, %v5678
        %v5734 = vsel %vm5680, %v5733, %v5732
        %v5735 = vperm.slane %v5650, %v5682
        %v5736 = vsel %vm5684, %v5735, %v5734
        %v5737 = vperm.slane %v5653, %v5686
        %v5738 = vsel %vm5688, %v5737, %v5736
        %v5739 = vperm.slane %v5656, %v5690
        %v5740 = vsel %vm5692, %v5739, %v5738
        %v5741 = vperm.slane %v5659, %v5694
        %v5742 = vsel %vm5696, %v5741, %v5740
        %v5743 = vperm.slane %v5662, %v5698
        %v5744 = vsel %vm5700, %v5743, %v5742
        %v5745 = vrot.slane %v5744, 7
        %vm5746 = vcmask 1040384
        %v5747 = vsel %vm5746, %v5725, %v5745
        %v5749 = vlaneseq
        %vm5750 = vcmp.ge.s32.totalorder %v5749, 0
        %vm5751 = vcmp.lt.s32.totalorder %v5749, 208
        %vm5752 = vmand %vm5750, %vm5751
        %5753 = vst.msk [vmem:[%s272] sm:$0x3] %vm5752, %v5747
        %s5754 = sand.u32 %s182, 1
        %s5755 = scalar_lea.sflag [#allocation8], %s5754
        %s5756 = sand.u32 %s182, 1
        %s5757 = smul.addr %s5756, 2
        %s5758 = scalar_lea.vmem [#allocation7], %s5757
        // Predicated region
        $region49: #{tpu_custom_call.1} parent=47 // pred_check
          %p5759 = pneg %p192
        $region50: #{tpu_custom_call.1} parent=47 // pred_check_branch
          %5761 = sbr.rel (%p5759) target = $region52
        $region51: #{tpu_custom_call.1} parent=47 // pred_region
          %5763 = vsyncadd %s5755, 0
          %s5764 = smul.addr %s22, 2
          %s5765 = scalar_lea.hbm %s7, %s5764
          %s5767 = sshll.u32 %s5758, 4
          %s5768 = int_to_ptr.vmem [resolvable:$true] %s5767
          %s5769 = sshll.u32 %s5765, 4
          %s5770 = int_to_ptr.hbm [resolvable:$true] %s5769
          %5772 = dma.vmem_to_hbm [thread:$0]  %s5768, 32, %s5770, %s5755
        $region52: #{tpu_custom_call.1} parent=47 // pred_fallthru
          _
      $region48: #{tpu_custom_call.1} parent=5 // pred_fallthru
        _
      %p5773 = scmp.le.s32.totalorder 2, %s17
      // Predicated region
      $region53: #{tpu_custom_call.1} parent=5 // pred_check
        %p5774 = pneg %p5773
      $region54: #{tpu_custom_call.1} parent=5 // pred_check_branch
        %5776 = sbr.rel (%p5774) target = $region56
      $region55: #{tpu_custom_call.1} parent=5 // pred_region
        %s5777 = ssub.s32 %s17, 2
        // Predicated region
        $region57: #{tpu_custom_call.1} parent=55 // pred_check
          %p5778 = pneg %p198
        $region58: #{tpu_custom_call.1} parent=55 // pred_check_branch
          %5780 = sbr.rel (%p5778) target = $region60
        $region59: #{tpu_custom_call.1} parent=55 // pred_region
          %s5781 = sand.u32 %s183, 1
          %s5782 = scalar_lea.sflag [#allocation8], %s5781
          %s5783 = sand.u32 %s183, 1
          %s5784 = smul.addr %s5783, 2
          %s5785 = scalar_lea.vmem [#allocation7], %s5784
          %5787 = dma.done %s5782, 32
        $region60: #{tpu_custom_call.1} parent=55 // pred_fallthru
          _
      $region56: #{tpu_custom_call.1} parent=5 // pred_fallthru
        _
    $region6: #{tpu_custom_call.1} parent=1 // loop_footer
      %s21 = sadd.s32 1, %s17
    $region7: #{tpu_custom_call.1} parent=1 // loop_footer_branch
      %16 = sbr.rel target = $region3
    $region8: #{tpu_custom_call.1} parent=1 // loop_exit
      _
    %5788 = vsyncpa [#allocation8], 1
    %s5789 = scalar_lea.sflag [#allocation8], 1
    %5790 = vsyncpa %s5789, 1

</llo_original>
